<compile_context>
chip_gen: v6e
topology: v6e:2x2x1
jax: 0.10.0
libtpu: 0.0.40
codegen_flags: <defaults>
</compile_context>

<pallas_src>
import jax
import jax.numpy as jnp
from jax.experimental import pallas as pl
from jax.experimental.pallas import tpu as pltpu

_KH, _KW = 18, 24               # ConvTranspose2d kernel == stride
_N_IN = 768                     # flattened input length (module requires exactly 768)
_W_OUT = _N_IN * _KW            # 18432 = 144 * 128 lanes (lane-dense)
_PERIOD = 384                   # lcm(24, 128): lane period of the tiled weight
_N_PERIODS = _W_OUT // _PERIOD  # 48


def _upsample_kernel(b_ref, x_rep_ref, w_lcm_ref, o_ref):
    # b_ref:     (1,)        f32 SMEM  bias
    # x_rep_ref: (1, 18432)  f32 VMEM  x repeated 24x along lanes: x_rep[c] = x[c // 24]
    # w_lcm_ref: (18, 384)   f32 VMEM  weight tiled to one lane period: w_lcm[kh, p] = W[kh, p % 24]
    # o_ref:     (18, 18432) f32 VMEM  o[kh, j*24 + kw] = x[j] * W[kh, kw] + b
    b = b_ref[0]
    w = w_lcm_ref[...]                       # (18, 384) -- hoisted out of the loop
    for t in range(_N_PERIODS):              # static unrolled loop, 384-lane-aligned slices
        sl = slice(t * _PERIOD, (t + 1) * _PERIOD)
        # (1, 384) * (18, 384): sublane broadcast multiply-add on the VPU,
        # stored as 3 fully dense lane-vregs per sublane group.
        o_ref[:, sl] = x_rep_ref[:, sl] * w + b


@jax.jit
def mini_upsampling_forward(x, weight, bias):
    """x: any array with exactly 768 elements (the module requires this).
    weight: (1, 1, 18, 24) ConvTranspose2d weight, bias: (1,)."""
    x_flat = x.reshape(_N_IN).astype(jnp.float32)
    w = weight.reshape(_KH, _KW).astype(jnp.float32)
    b = bias.reshape(1).astype(jnp.float32)

    # Tiny input prep in XLA (72 KB / 27 KB) so the kernel needs no in-kernel
    # relayout to produce the lane-dense output.
    x_rep = jnp.repeat(x_flat, _KW).reshape(1, _W_OUT)   # (1, 18432)
    w_lcm = jnp.tile(w, (1, _PERIOD // _KW))             # (18, 384)

    y = pl.pallas_call(
        _upsample_kernel,
        out_shape=jax.ShapeDtypeStruct((_KH, _W_OUT), jnp.float32),
        in_specs=[
            pl.BlockSpec(memory_space=pltpu.MemorySpace.SMEM),   # bias scalar
            pl.BlockSpec(memory_space=pltpu.MemorySpace.VMEM),   # x_rep (1, 18432)
            pl.BlockSpec(memory_space=pltpu.MemorySpace.VMEM),   # w_lcm (18, 384)
        ],
        out_specs=pl.BlockSpec(memory_space=pltpu.MemorySpace.VMEM),
    )(b, x_rep, w_lcm)

    # torch: .view(1, 768, 18, 24) on the contiguous (1, 1, 18, 18432) output.
    # (18, 18432) row-major flat order == kh*18432 + j*24 + kw, so this is free.
    return y.reshape(1, _N_IN, _KH, _KW)


if __name__ == "__main__":
    key = jax.random.PRNGKey(0)
    kx, kw, kb = jax.random.split(key, 3)

    # Deterministic ConvTranspose2d(1, 1, (18, 24)) params (PyTorch-style uniform init).
    fan_in = 1 * 18 * 24
    bound = 1.0 / (fan_in ** 0.5)
    weight = jax.random.uniform(kw, (1, 1, 18, 24), jnp.float32, -bound, bound)
    bias = jax.random.uniform(kb, (1,), jnp.float32, -bound, bound)

    # Input: 768 elements total (the trailing view(1,768,18,24) forces N == 1).
    x = jax.random.normal(kx, (1, 768), jnp.float32)

    out = jax.block_until_ready(mini_upsampling_forward(x, weight, bias))
    assert out.shape == (1, 768, 18, 24), out.shape

    # Pure-JAX reference of the stride==kernel transposed conv + views.
    y_ref = (x.reshape(768)[None, :, None] * weight.reshape(18, 24)[:, None, :]
             + bias[0]).reshape(1, 768, 18, 24)
    assert jnp.allclose(out, y_ref, atol=1e-6), "kernel/reference mismatch"

    print("KERNEL_OK")
</pallas_src>

<mosaic_0001>
module attributes {stable_mosaic.version = 11 : i64} {
  func.func @_upsample_kernel(%arg0: memref<1xf32, #tpu.memory_space<smem>>, %arg1: memref<1x18432xf32, #tpu.memory_space<vmem>>, %arg2: memref<18x384xf32, #tpu.memory_space<vmem>>, %arg3: memref<18x18432xf32, #tpu.memory_space<vmem>>) attributes {dimension_semantics = [], scalar_prefetch = 0 : i64, scratch_operands = 0 : i64, tpu.core_type = #tpu.core_type<tc>} {
    %c0 = arith.constant 0 : index
    %0 = memref.load %arg0[%c0] : memref<1xf32, #tpu.memory_space<smem>>
    %c0_0 = arith.constant 0 : index
    %c0_1 = arith.constant 0 : index
    %1 = vector.load %arg2[%c0_0, %c0_1] : memref<18x384xf32, #tpu.memory_space<vmem>>, vector<18x384xf32>
    %c0_2 = arith.constant 0 : index
    %c0_3 = arith.constant 0 : index
    %2 = vector.load %arg1[%c0_2, %c0_3] : memref<1x18432xf32, #tpu.memory_space<vmem>>, vector<1x384xf32>
    %3 = vector.broadcast %2 : vector<1x384xf32> to vector<18x384xf32>
    %4 = arith.mulf %3, %1 : vector<18x384xf32>
    %5 = vector.broadcast %0 : f32 to vector<18x384xf32>
    %6 = arith.addf %4, %5 : vector<18x384xf32>
    %c0_4 = arith.constant 0 : index
    %c0_5 = arith.constant 0 : index
    %7 = vector.load %arg3[%c0_4, %c0_5] : memref<18x18432xf32, #tpu.memory_space<vmem>>, vector<18x384xf32>
    tpu.vector_store %arg3[%c0_4, %c0_5], %6 {strides = array<i32>} : memref<18x18432xf32, #tpu.memory_space<vmem>>, vector<18x384xf32>,
    %c0_6 = arith.constant 0 : index
    %c384 = arith.constant 384 : index
    %8 = vector.load %arg1[%c0_6, %c384] : memref<1x18432xf32, #tpu.memory_space<vmem>>, vector<1x384xf32>
    %9 = vector.broadcast %8 : vector<1x384xf32> to vector<18x384xf32>
    %10 = arith.mulf %9, %1 : vector<18x384xf32>
    %11 = vector.broadcast %0 : f32 to vector<18x384xf32>
    %12 = arith.addf %10, %11 : vector<18x384xf32>
    %c0_7 = arith.constant 0 : index
    %c384_8 = arith.constant 384 : index
    %13 = vector.load %arg3[%c0_7, %c384_8] : memref<18x18432xf32, #tpu.memory_space<vmem>>, vector<18x384xf32>
    tpu.vector_store %arg3[%c0_7, %c384_8], %12 {strides = array<i32>} : memref<18x18432xf32, #tpu.memory_space<vmem>>, vector<18x384xf32>,
    %c0_9 = arith.constant 0 : index
    %c768 = arith.constant 768 : index
    %14 = vector.load %arg1[%c0_9, %c768] : memref<1x18432xf32, #tpu.memory_space<vmem>>, vector<1x384xf32>
    %15 = vector.broadcast %14 : vector<1x384xf32> to vector<18x384xf32>
    %16 = arith.mulf %15, %1 : vector<18x384xf32>
    %17 = vector.broadcast %0 : f32 to vector<18x384xf32>
    %18 = arith.addf %16, %17 : vector<18x384xf32>
    %c0_10 = arith.constant 0 : index
    %c768_11 = arith.constant 768 : index
    %19 = vector.load %arg3[%c0_10, %c768_11] : memref<18x18432xf32, #tpu.memory_space<vmem>>, vector<18x384xf32>
    tpu.vector_store %arg3[%c0_10, %c768_11], %18 {strides = array<i32>} : memref<18x18432xf32, #tpu.memory_space<vmem>>, vector<18x384xf32>,
    %c0_12 = arith.constant 0 : index
    %c1152 = arith.constant 1152 : index
    %20 = vector.load %arg1[%c0_12, %c1152] : memref<1x18432xf32, #tpu.memory_space<vmem>>, vector<1x384xf32>
    %21 = vector.broadcast %20 : vector<1x384xf32> to vector<18x384xf32>
    %22 = arith.mulf %21, %1 : vector<18x384xf32>
    %23 = vector.broadcast %0 : f32 to vector<18x384xf32>
    %24 = arith.addf %22, %23 : vector<18x384xf32>
    %c0_13 = arith.constant 0 : index
    %c1152_14 = arith.constant 1152 : index
    %25 = vector.load %arg3[%c0_13, %c1152_14] : memref<18x18432xf32, #tpu.memory_space<vmem>>, vector<18x384xf32>
    tpu.vector_store %arg3[%c0_13, %c1152_14], %24 {strides = array<i32>} : memref<18x18432xf32, #tpu.memory_space<vmem>>, vector<18x384xf32>,
    %c0_15 = arith.constant 0 : index
    %c1536 = arith.constant 1536 : index
    %26 = vector.load %arg1[%c0_15, %c1536] : memref<1x18432xf32, #tpu.memory_space<vmem>>, vector<1x384xf32>
    %27 = vector.broadcast %26 : vector<1x384xf32> to vector<18x384xf32>
    %28 = arith.mulf %27, %1 : vector<18x384xf32>
    %29 = vector.broadcast %0 : f32 to vector<18x384xf32>
    %30 = arith.addf %28, %29 : vector<18x384xf32>
    %c0_16 = arith.constant 0 : index
    %c1536_17 = arith.constant 1536 : index
    %31 = vector.load %arg3[%c0_16, %c1536_17] : memref<18x18432xf32, #tpu.memory_space<vmem>>, vector<18x384xf32>
    tpu.vector_store %arg3[%c0_16, %c1536_17], %30 {strides = array<i32>} : memref<18x18432xf32, #tpu.memory_space<vmem>>, vector<18x384xf32>,
    %c0_18 = arith.constant 0 : index
    %c1920 = arith.constant 1920 : index
    %32 = vector.load %arg1[%c0_18, %c1920] : memref<1x18432xf32, #tpu.memory_space<vmem>>, vector<1x384xf32>
    %33 = vector.broadcast %32 : vector<1x384xf32> to vector<18x384xf32>
    %34 = arith.mulf %33, %1 : vector<18x384xf32>
    %35 = vector.broadcast %0 : f32 to vector<18x384xf32>
    %36 = arith.addf %34, %35 : vector<18x384xf32>
    %c0_19 = arith.constant 0 : index
    %c1920_20 = arith.constant 1920 : index
    %37 = vector.load %arg3[%c0_19, %c1920_20] : memref<18x18432xf32, #tpu.memory_space<vmem>>, vector<18x384xf32>
    tpu.vector_store %arg3[%c0_19, %c1920_20], %36 {strides = array<i32>} : memref<18x18432xf32, #tpu.memory_space<vmem>>, vector<18x384xf32>,
    %c0_21 = arith.constant 0 : index
    %c2304 = arith.constant 2304 : index
    %38 = vector.load %arg1[%c0_21, %c2304] : memref<1x18432xf32, #tpu.memory_space<vmem>>, vector<1x384xf32>
    %39 = vector.broadcast %38 : vector<1x384xf32> to vector<18x384xf32>
    %40 = arith.mulf %39, %1 : vector<18x384xf32>
    %41 = vector.broadcast %0 : f32 to vector<18x384xf32>
    %42 = arith.addf %40, %41 : vector<18x384xf32>
    %c0_22 = arith.constant 0 : index
    %c2304_23 = arith.constant 2304 : index
    %43 = vector.load %arg3[%c0_22, %c2304_23] : memref<18x18432xf32, #tpu.memory_space<vmem>>, vector<18x384xf32>
    tpu.vector_store %arg3[%c0_22, %c2304_23], %42 {strides = array<i32>} : memref<18x18432xf32, #tpu.memory_space<vmem>>, vector<18x384xf32>,
    %c0_24 = arith.constant 0 : index
    %c2688 = arith.constant 2688 : index
    %44 = vector.load %arg1[%c0_24, %c2688] : memref<1x18432xf32, #tpu.memory_space<vmem>>, vector<1x384xf32>
    %45 = vector.broadcast %44 : vector<1x384xf32> to vector<18x384xf32>
    %46 = arith.mulf %45, %1 : vector<18x384xf32>
    %47 = vector.broadcast %0 : f32 to vector<18x384xf32>
    %48 = arith.addf %46, %47 : vector<18x384xf32>
    %c0_25 = arith.constant 0 : index
    %c2688_26 = arith.constant 2688 : index
    %49 = vector.load %arg3[%c0_25, %c2688_26] : memref<18x18432xf32, #tpu.memory_space<vmem>>, vector<18x384xf32>
    tpu.vector_store %arg3[%c0_25, %c2688_26], %48 {strides = array<i32>} : memref<18x18432xf32, #tpu.memory_space<vmem>>, vector<18x384xf32>,
    %c0_27 = arith.constant 0 : index
    %c3072 = arith.constant 3072 : index
    %50 = vector.load %arg1[%c0_27, %c3072] : memref<1x18432xf32, #tpu.memory_space<vmem>>, vector<1x384xf32>
    %51 = vector.broadcast %50 : vector<1x384xf32> to vector<18x384xf32>
    %52 = arith.mulf %51, %1 : vector<18x384xf32>
    %53 = vector.broadcast %0 : f32 to vector<18x384xf32>
    %54 = arith.addf %52, %53 : vector<18x384xf32>
    %c0_28 = arith.constant 0 : index
    %c3072_29 = arith.constant 3072 : index
    %55 = vector.load %arg3[%c0_28, %c3072_29] : memref<18x18432xf32, #tpu.memory_space<vmem>>, vector<18x384xf32>
    tpu.vector_store %arg3[%c0_28, %c3072_29], %54 {strides = array<i32>} : memref<18x18432xf32, #tpu.memory_space<vmem>>, vector<18x384xf32>,
    %c0_30 = arith.constant 0 : index
    %c3456 = arith.constant 3456 : index
    %56 = vector.load %arg1[%c0_30, %c3456] : memref<1x18432xf32, #tpu.memory_space<vmem>>, vector<1x384xf32>
    %57 = vector.broadcast %56 : vector<1x384xf32> to vector<18x384xf32>
    %58 = arith.mulf %57, %1 : vector<18x384xf32>
    %59 = vector.broadcast %0 : f32 to vector<18x384xf32>
    %60 = arith.addf %58, %59 : vector<18x384xf32>
    %c0_31 = arith.constant 0 : index
    %c3456_32 = arith.constant 3456 : index
    %61 = vector.load %arg3[%c0_31, %c3456_32] : memref<18x18432xf32, #tpu.memory_space<vmem>>, vector<18x384xf32>
    tpu.vector_store %arg3[%c0_31, %c3456_32], %60 {strides = array<i32>} : memref<18x18432xf32, #tpu.memory_space<vmem>>, vector<18x384xf32>,
    %c0_33 = arith.constant 0 : index
    %c3840 = arith.constant 3840 : index
    %62 = vector.load %arg1[%c0_33, %c3840] : memref<1x18432xf32, #tpu.memory_space<vmem>>, vector<1x384xf32>
    %63 = vector.broadcast %62 : vector<1x384xf32> to vector<18x384xf32>
    %64 = arith.mulf %63, %1 : vector<18x384xf32>
    %65 = vector.broadcast %0 : f32 to vector<18x384xf32>
    %66 = arith.addf %64, %65 : vector<18x384xf32>
    %c0_34 = arith.constant 0 : index
    %c3840_35 = arith.constant 3840 : index
    %67 = vector.load %arg3[%c0_34, %c3840_35] : memref<18x18432xf32, #tpu.memory_space<vmem>>, vector<18x384xf32>
    tpu.vector_store %arg3[%c0_34, %c3840_35], %66 {strides = array<i32>} : memref<18x18432xf32, #tpu.memory_space<vmem>>, vector<18x384xf32>,
    %c0_36 = arith.constant 0 : index
    %c4224 = arith.constant 4224 : index
    %68 = vector.load %arg1[%c0_36, %c4224] : memref<1x18432xf32, #tpu.memory_space<vmem>>, vector<1x384xf32>
    %69 = vector.broadcast %68 : vector<1x384xf32> to vector<18x384xf32>
    %70 = arith.mulf %69, %1 : vector<18x384xf32>
    %71 = vector.broadcast %0 : f32 to vector<18x384xf32>
    %72 = arith.addf %70, %71 : vector<18x384xf32>
    %c0_37 = arith.constant 0 : index
    %c4224_38 = arith.constant 4224 : index
    %73 = vector.load %arg3[%c0_37, %c4224_38] : memref<18x18432xf32, #tpu.memory_space<vmem>>, vector<18x384xf32>
    tpu.vector_store %arg3[%c0_37, %c4224_38], %72 {strides = array<i32>} : memref<18x18432xf32, #tpu.memory_space<vmem>>, vector<18x384xf32>,
    %c0_39 = arith.constant 0 : index
    %c4608 = arith.constant 4608 : index
    %74 = vector.load %arg1[%c0_39, %c4608] : memref<1x18432xf32, #tpu.memory_space<vmem>>, vector<1x384xf32>
    %75 = vector.broadcast %74 : vector<1x384xf32> to vector<18x384xf32>
    %76 = arith.mulf %75, %1 : vector<18x384xf32>
    %77 = vector.broadcast %0 : f32 to vector<18x384xf32>
    %78 = arith.addf %76, %77 : vector<18x384xf32>
    %c0_40 = arith.constant 0 : index
    %c4608_41 = arith.constant 4608 : index
    %79 = vector.load %arg3[%c0_40, %c4608_41] : memref<18x18432xf32, #tpu.memory_space<vmem>>, vector<18x384xf32>
    tpu.vector_store %arg3[%c0_40, %c4608_41], %78 {strides = array<i32>} : memref<18x18432xf32, #tpu.memory_space<vmem>>, vector<18x384xf32>,
    %c0_42 = arith.constant 0 : index
    %c4992 = arith.constant 4992 : index
    %80 = vector.load %arg1[%c0_42, %c4992] : memref<1x18432xf32, #tpu.memory_space<vmem>>, vector<1x384xf32>
    %81 = vector.broadcast %80 : vector<1x384xf32> to vector<18x384xf32>
    %82 = arith.mulf %81, %1 : vector<18x384xf32>
    %83 = vector.broadcast %0 : f32 to vector<18x384xf32>
    %84 = arith.addf %82, %83 : vector<18x384xf32>
    %c0_43 = arith.constant 0 : index
    %c4992_44 = arith.constant 4992 : index
    %85 = vector.load %arg3[%c0_43, %c4992_44] : memref<18x18432xf32, #tpu.memory_space<vmem>>, vector<18x384xf32>
    tpu.vector_store %arg3[%c0_43, %c4992_44], %84 {strides = array<i32>} : memref<18x18432xf32, #tpu.memory_space<vmem>>, vector<18x384xf32>,
    %c0_45 = arith.constant 0 : index
    %c5376 = arith.constant 5376 : index
    %86 = vector.load %arg1[%c0_45, %c5376] : memref<1x18432xf32, #tpu.memory_space<vmem>>, vector<1x384xf32>
    %87 = vector.broadcast %86 : vector<1x384xf32> to vector<18x384xf32>
    %88 = arith.mulf %87, %1 : vector<18x384xf32>
    %89 = vector.broadcast %0 : f32 to vector<18x384xf32>
    %90 = arith.addf %88, %89 : vector<18x384xf32>
    %c0_46 = arith.constant 0 : index
    %c5376_47 = arith.constant 5376 : index
    %91 = vector.load %arg3[%c0_46, %c5376_47] : memref<18x18432xf32, #tpu.memory_space<vmem>>, vector<18x384xf32>
    tpu.vector_store %arg3[%c0_46, %c5376_47], %90 {strides = array<i32>} : memref<18x18432xf32, #tpu.memory_space<vmem>>, vector<18x384xf32>,
    %c0_48 = arith.constant 0 : index
    %c5760 = arith.constant 5760 : index
    %92 = vector.load %arg1[%c0_48, %c5760] : memref<1x18432xf32, #tpu.memory_space<vmem>>, vector<1x384xf32>
    %93 = vector.broadcast %92 : vector<1x384xf32> to vector<18x384xf32>
    %94 = arith.mulf %93, %1 : vector<18x384xf32>
    %95 = vector.broadcast %0 : f32 to vector<18x384xf32>
    %96 = arith.addf %94, %95 : vector<18x384xf32>
    %c0_49 = arith.constant 0 : index
    %c5760_50 = arith.constant 5760 : index
    %97 = vector.load %arg3[%c0_49, %c5760_50] : memref<18x18432xf32, #tpu.memory_space<vmem>>, vector<18x384xf32>
    tpu.vector_store %arg3[%c0_49, %c5760_50], %96 {strides = array<i32>} : memref<18x18432xf32, #tpu.memory_space<vmem>>, vector<18x384xf32>,
    %c0_51 = arith.constant 0 : index
    %c6144 = arith.constant 6144 : index
    %98 = vector.load %arg1[%c0_51, %c6144] : memref<1x18432xf32, #tpu.memory_space<vmem>>, vector<1x384xf32>
    %99 = vector.broadcast %98 : vector<1x384xf32> to vector<18x384xf32>
    %100 = arith.mulf %99, %1 : vector<18x384xf32>
    %101 = vector.broadcast %0 : f32 to vector<18x384xf32>
    %102 = arith.addf %100, %101 : vector<18x384xf32>
    %c0_52 = arith.constant 0 : index
    %c6144_53 = arith.constant 6144 : index
    %103 = vector.load %arg3[%c0_52, %c6144_53] : memref<18x18432xf32, #tpu.memory_space<vmem>>, vector<18x384xf32>
    tpu.vector_store %arg3[%c0_52, %c6144_53], %102 {strides = array<i32>} : memref<18x18432xf32, #tpu.memory_space<vmem>>, vector<18x384xf32>,
    %c0_54 = arith.constant 0 : index
    %c6528 = arith.constant 6528 : index
    %104 = vector.load %arg1[%c0_54, %c6528] : memref<1x18432xf32, #tpu.memory_space<vmem>>, vector<1x384xf32>
    %105 = vector.broadcast %104 : vector<1x384xf32> to vector<18x384xf32>
    %106 = arith.mulf %105, %1 : vector<18x384xf32>
    %107 = vector.broadcast %0 : f32 to vector<18x384xf32>
    %108 = arith.addf %106, %107 : vector<18x384xf32>
    %c0_55 = arith.constant 0 : index
    %c6528_56 = arith.constant 6528 : index
    %109 = vector.load %arg3[%c0_55, %c6528_56] : memref<18x18432xf32, #tpu.memory_space<vmem>>, vector<18x384xf32>
    tpu.vector_store %arg3[%c0_55, %c6528_56], %108 {strides = array<i32>} : memref<18x18432xf32, #tpu.memory_space<vmem>>, vector<18x384xf32>,
    %c0_57 = arith.constant 0 : index
    %c6912 = arith.constant 6912 : index
    %110 = vector.load %arg1[%c0_57, %c6912] : memref<1x18432xf32, #tpu.memory_space<vmem>>, vector<1x384xf32>
    %111 = vector.broadcast %110 : vector<1x384xf32> to vector<18x384xf32>
    %112 = arith.mulf %111, %1 : vector<18x384xf32>
    %113 = vector.broadcast %0 : f32 to vector<18x384xf32>
    %114 = arith.addf %112, %113 : vector<18x384xf32>
    %c0_58 = arith.constant 0 : index
    %c6912_59 = arith.constant 6912 : index
    %115 = vector.load %arg3[%c0_58, %c6912_59] : memref<18x18432xf32, #tpu.memory_space<vmem>>, vector<18x384xf32>
    tpu.vector_store %arg3[%c0_58, %c6912_59], %114 {strides = array<i32>} : memref<18x18432xf32, #tpu.memory_space<vmem>>, vector<18x384xf32>,
    %c0_60 = arith.constant 0 : index
    %c7296 = arith.constant 7296 : index
    %116 = vector.load %arg1[%c0_60, %c7296] : memref<1x18432xf32, #tpu.memory_space<vmem>>, vector<1x384xf32>
    %117 = vector.broadcast %116 : vector<1x384xf32> to vector<18x384xf32>
    %118 = arith.mulf %117, %1 : vector<18x384xf32>
    %119 = vector.broadcast %0 : f32 to vector<18x384xf32>
    %120 = arith.addf %118, %119 : vector<18x384xf32>
    %c0_61 = arith.constant 0 : index
    %c7296_62 = arith.constant 7296 : index
    %121 = vector.load %arg3[%c0_61, %c7296_62] : memref<18x18432xf32, #tpu.memory_space<vmem>>, vector<18x384xf32>
    tpu.vector_store %arg3[%c0_61, %c7296_62], %120 {strides = array<i32>} : memref<18x18432xf32, #tpu.memory_space<vmem>>, vector<18x384xf32>,
    %c0_63 = arith.constant 0 : index
    %c7680 = arith.constant 7680 : index
    %122 = vector.load %arg1[%c0_63, %c7680] : memref<1x18432xf32, #tpu.memory_space<vmem>>, vector<1x384xf32>
    %123 = vector.broadcast %122 : vector<1x384xf32> to vector<18x384xf32>
    %124 = arith.mulf %123, %1 : vector<18x384xf32>
    %125 = vector.broadcast %0 : f32 to vector<18x384xf32>
    %126 = arith.addf %124, %125 : vector<18x384xf32>
    %c0_64 = arith.constant 0 : index
    %c7680_65 = arith.constant 7680 : index
    %127 = vector.load %arg3[%c0_64, %c7680_65] : memref<18x18432xf32, #tpu.memory_space<vmem>>, vector<18x384xf32>
    tpu.vector_store %arg3[%c0_64, %c7680_65], %126 {strides = array<i32>} : memref<18x18432xf32, #tpu.memory_space<vmem>>, vector<18x384xf32>,
    %c0_66 = arith.constant 0 : index
    %c8064 = arith.constant 8064 : index
    %128 = vector.load %arg1[%c0_66, %c8064] : memref<1x18432xf32, #tpu.memory_space<vmem>>, vector<1x384xf32>
    %129 = vector.broadcast %128 : vector<1x384xf32> to vector<18x384xf32>
    %130 = arith.mulf %129, %1 : vector<18x384xf32>
    %131 = vector.broadcast %0 : f32 to vector<18x384xf32>
    %132 = arith.addf %130, %131 : vector<18x384xf32>
    %c0_67 = arith.constant 0 : index
    %c8064_68 = arith.constant 8064 : index
    %133 = vector.load %arg3[%c0_67, %c8064_68] : memref<18x18432xf32, #tpu.memory_space<vmem>>, vector<18x384xf32>
    tpu.vector_store %arg3[%c0_67, %c8064_68], %132 {strides = array<i32>} : memref<18x18432xf32, #tpu.memory_space<vmem>>, vector<18x384xf32>,
    %c0_69 = arith.constant 0 : index
    %c8448 = arith.constant 8448 : index
    %134 = vector.load %arg1[%c0_69, %c8448] : memref<1x18432xf32, #tpu.memory_space<vmem>>, vector<1x384xf32>
    %135 = vector.broadcast %134 : vector<1x384xf32> to vector<18x384xf32>
    %136 = arith.mulf %135, %1 : vector<18x384xf32>
    %137 = vector.broadcast %0 : f32 to vector<18x384xf32>
    %138 = arith.addf %136, %137 : vector<18x384xf32>
    %c0_70 = arith.constant 0 : index
    %c8448_71 = arith.constant 8448 : index
    %139 = vector.load %arg3[%c0_70, %c8448_71] : memref<18x18432xf32, #tpu.memory_space<vmem>>, vector<18x384xf32>
    tpu.vector_store %arg3[%c0_70, %c8448_71], %138 {strides = array<i32>} : memref<18x18432xf32, #tpu.memory_space<vmem>>, vector<18x384xf32>,
    %c0_72 = arith.constant 0 : index
    %c8832 = arith.constant 8832 : index
    %140 = vector.load %arg1[%c0_72, %c8832] : memref<1x18432xf32, #tpu.memory_space<vmem>>, vector<1x384xf32>
    %141 = vector.broadcast %140 : vector<1x384xf32> to vector<18x384xf32>
    %142 = arith.mulf %141, %1 : vector<18x384xf32>
    %143 = vector.broadcast %0 : f32 to vector<18x384xf32>
    %144 = arith.addf %142, %143 : vector<18x384xf32>
    %c0_73 = arith.constant 0 : index
    %c8832_74 = arith.constant 8832 : index
    %145 = vector.load %arg3[%c0_73, %c8832_74] : memref<18x18432xf32, #tpu.memory_space<vmem>>, vector<18x384xf32>
    tpu.vector_store %arg3[%c0_73, %c8832_74], %144 {strides = array<i32>} : memref<18x18432xf32, #tpu.memory_space<vmem>>, vector<18x384xf32>,
    %c0_75 = arith.constant 0 : index
    %c9216 = arith.constant 9216 : index
    %146 = vector.load %arg1[%c0_75, %c9216] : memref<1x18432xf32, #tpu.memory_space<vmem>>, vector<1x384xf32>
    %147 = vector.broadcast %146 : vector<1x384xf32> to vector<18x384xf32>
    %148 = arith.mulf %147, %1 : vector<18x384xf32>
    %149 = vector.broadcast %0 : f32 to vector<18x384xf32>
    %150 = arith.addf %148, %149 : vector<18x384xf32>
    %c0_76 = arith.constant 0 : index
    %c9216_77 = arith.constant 9216 : index
    %151 = vector.load %arg3[%c0_76, %c9216_77] : memref<18x18432xf32, #tpu.memory_space<vmem>>, vector<18x384xf32>
    tpu.vector_store %arg3[%c0_76, %c9216_77], %150 {strides = array<i32>} : memref<18x18432xf32, #tpu.memory_space<vmem>>, vector<18x384xf32>,
    %c0_78 = arith.constant 0 : index
    %c9600 = arith.constant 9600 : index
    %152 = vector.load %arg1[%c0_78, %c9600] : memref<1x18432xf32, #tpu.memory_space<vmem>>, vector<1x384xf32>
    %153 = vector.broadcast %152 : vector<1x384xf32> to vector<18x384xf32>
    %154 = arith.mulf %153, %1 : vector<18x384xf32>
    %155 = vector.broadcast %0 : f32 to vector<18x384xf32>
    %156 = arith.addf %154, %155 : vector<18x384xf32>
    %c0_79 = arith.constant 0 : index
    %c9600_80 = arith.constant 9600 : index
    %157 = vector.load %arg3[%c0_79, %c9600_80] : memref<18x18432xf32, #tpu.memory_space<vmem>>, vector<18x384xf32>
    tpu.vector_store %arg3[%c0_79, %c9600_80], %156 {strides = array<i32>} : memref<18x18432xf32, #tpu.memory_space<vmem>>, vector<18x384xf32>,
    %c0_81 = arith.constant 0 : index
    %c9984 = arith.constant 9984 : index
    %158 = vector.load %arg1[%c0_81, %c9984] : memref<1x18432xf32, #tpu.memory_space<vmem>>, vector<1x384xf32>
    %159 = vector.broadcast %158 : vector<1x384xf32> to vector<18x384xf32>
    %160 = arith.mulf %159, %1 : vector<18x384xf32>
    %161 = vector.broadcast %0 : f32 to vector<18x384xf32>
    %162 = arith.addf %160, %161 : vector<18x384xf32>
    %c0_82 = arith.constant 0 : index
    %c9984_83 = arith.constant 9984 : index
    %163 = vector.load %arg3[%c0_82, %c9984_83] : memref<18x18432xf32, #tpu.memory_space<vmem>>, vector<18x384xf32>
    tpu.vector_store %arg3[%c0_82, %c9984_83], %162 {strides = array<i32>} : memref<18x18432xf32, #tpu.memory_space<vmem>>, vector<18x384xf32>,
    %c0_84 = arith.constant 0 : index
    %c10368 = arith.constant 10368 : index
    %164 = vector.load %arg1[%c0_84, %c10368] : memref<1x18432xf32, #tpu.memory_space<vmem>>, vector<1x384xf32>
    %165 = vector.broadcast %164 : vector<1x384xf32> to vector<18x384xf32>
    %166 = arith.mulf %165, %1 : vector<18x384xf32>
    %167 = vector.broadcast %0 : f32 to vector<18x384xf32>
    %168 = arith.addf %166, %167 : vector<18x384xf32>
    %c0_85 = arith.constant 0 : index
    %c10368_86 = arith.constant 10368 : index
    %169 = vector.load %arg3[%c0_85, %c10368_86] : memref<18x18432xf32, #tpu.memory_space<vmem>>, vector<18x384xf32>
    tpu.vector_store %arg3[%c0_85, %c10368_86], %168 {strides = array<i32>} : memref<18x18432xf32, #tpu.memory_space<vmem>>, vector<18x384xf32>,
    %c0_87 = arith.constant 0 : index
    %c10752 = arith.constant 10752 : index
    %170 = vector.load %arg1[%c0_87, %c10752] : memref<1x18432xf32, #tpu.memory_space<vmem>>, vector<1x384xf32>
    %171 = vector.broadcast %170 : vector<1x384xf32> to vector<18x384xf32>
    %172 = arith.mulf %171, %1 : vector<18x384xf32>
    %173 = vector.broadcast %0 : f32 to vector<18x384xf32>
    %174 = arith.addf %172, %173 : vector<18x384xf32>
    %c0_88 = arith.constant 0 : index
    %c10752_89 = arith.constant 10752 : index
    %175 = vector.load %arg3[%c0_88, %c10752_89] : memref<18x18432xf32, #tpu.memory_space<vmem>>, vector<18x384xf32>
    tpu.vector_store %arg3[%c0_88, %c10752_89], %174 {strides = array<i32>} : memref<18x18432xf32, #tpu.memory_space<vmem>>, vector<18x384xf32>,
    %c0_90 = arith.constant 0 : index
    %c11136 = arith.constant 11136 : index
    %176 = vector.load %arg1[%c0_90, %c11136] : memref<1x18432xf32, #tpu.memory_space<vmem>>, vector<1x384xf32>
    %177 = vector.broadcast %176 : vector<1x384xf32> to vector<18x384xf32>
    %178 = arith.mulf %177, %1 : vector<18x384xf32>
    %179 = vector.broadcast %0 : f32 to vector<18x384xf32>
    %180 = arith.addf %178, %179 : vector<18x384xf32>
    %c0_91 = arith.constant 0 : index
    %c11136_92 = arith.constant 11136 : index
    %181 = vector.load %arg3[%c0_91, %c11136_92] : memref<18x18432xf32, #tpu.memory_space<vmem>>, vector<18x384xf32>
    tpu.vector_store %arg3[%c0_91, %c11136_92], %180 {strides = array<i32>} : memref<18x18432xf32, #tpu.memory_space<vmem>>, vector<18x384xf32>,
    %c0_93 = arith.constant 0 : index
    %c11520 = arith.constant 11520 : index
    %182 = vector.load %arg1[%c0_93, %c11520] : memref<1x18432xf32, #tpu.memory_space<vmem>>, vector<1x384xf32>
    %183 = vector.broadcast %182 : vector<1x384xf32> to vector<18x384xf32>
    %184 = arith.mulf %183, %1 : vector<18x384xf32>
    %185 = vector.broadcast %0 : f32 to vector<18x384xf32>
    %186 = arith.addf %184, %185 : vector<18x384xf32>
    %c0_94 = arith.constant 0 : index
    %c11520_95 = arith.constant 11520 : index
    %187 = vector.load %arg3[%c0_94, %c11520_95] : memref<18x18432xf32, #tpu.memory_space<vmem>>, vector<18x384xf32>
    tpu.vector_store %arg3[%c0_94, %c11520_95], %186 {strides = array<i32>} : memref<18x18432xf32, #tpu.memory_space<vmem>>, vector<18x384xf32>,
    %c0_96 = arith.constant 0 : index
    %c11904 = arith.constant 11904 : index
    %188 = vector.load %arg1[%c0_96, %c11904] : memref<1x18432xf32, #tpu.memory_space<vmem>>, vector<1x384xf32>
    %189 = vector.broadcast %188 : vector<1x384xf32> to vector<18x384xf32>
    %190 = arith.mulf %189, %1 : vector<18x384xf32>
    %191 = vector.broadcast %0 : f32 to vector<18x384xf32>
    %192 = arith.addf %190, %191 : vector<18x384xf32>
    %c0_97 = arith.constant 0 : index
    %c11904_98 = arith.constant 11904 : index
    %193 = vector.load %arg3[%c0_97, %c11904_98] : memref<18x18432xf32, #tpu.memory_space<vmem>>, vector<18x384xf32>
    tpu.vector_store %arg3[%c0_97, %c11904_98], %192 {strides = array<i32>} : memref<18x18432xf32, #tpu.memory_space<vmem>>, vector<18x384xf32>,
    %c0_99 = arith.constant 0 : index
    %c12288 = arith.constant 12288 : index
    %194 = vector.load %arg1[%c0_99, %c12288] : memref<1x18432xf32, #tpu.memory_space<vmem>>, vector<1x384xf32>
    %195 = vector.broadcast %194 : vector<1x384xf32> to vector<18x384xf32>
    %196 = arith.mulf %195, %1 : vector<18x384xf32>
    %197 = vector.broadcast %0 : f32 to vector<18x384xf32>
    %198 = arith.addf %196, %197 : vector<18x384xf32>
    %c0_100 = arith.constant 0 : index
    %c12288_101 = arith.constant 12288 : index
    %199 = vector.load %arg3[%c0_100, %c12288_101] : memref<18x18432xf32, #tpu.memory_space<vmem>>, vector<18x384xf32>
    tpu.vector_store %arg3[%c0_100, %c12288_101], %198 {strides = array<i32>} : memref<18x18432xf32, #tpu.memory_space<vmem>>, vector<18x384xf32>,
    %c0_102 = arith.constant 0 : index
    %c12672 = arith.constant 12672 : index
    %200 = vector.load %arg1[%c0_102, %c12672] : memref<1x18432xf32, #tpu.memory_space<vmem>>, vector<1x384xf32>
    %201 = vector.broadcast %200 : vector<1x384xf32> to vector<18x384xf32>
    %202 = arith.mulf %201, %1 : vector<18x384xf32>
    %203 = vector.broadcast %0 : f32 to vector<18x384xf32>
    %204 = arith.addf %202, %203 : vector<18x384xf32>
    %c0_103 = arith.constant 0 : index
    %c12672_104 = arith.constant 12672 : index
    %205 = vector.load %arg3[%c0_103, %c12672_104] : memref<18x18432xf32, #tpu.memory_space<vmem>>, vector<18x384xf32>
    tpu.vector_store %arg3[%c0_103, %c12672_104], %204 {strides = array<i32>} : memref<18x18432xf32, #tpu.memory_space<vmem>>, vector<18x384xf32>,
    %c0_105 = arith.constant 0 : index
    %c13056 = arith.constant 13056 : index
    %206 = vector.load %arg1[%c0_105, %c13056] : memref<1x18432xf32, #tpu.memory_space<vmem>>, vector<1x384xf32>
    %207 = vector.broadcast %206 : vector<1x384xf32> to vector<18x384xf32>
    %208 = arith.mulf %207, %1 : vector<18x384xf32>
    %209 = vector.broadcast %0 : f32 to vector<18x384xf32>
    %210 = arith.addf %208, %209 : vector<18x384xf32>
    %c0_106 = arith.constant 0 : index
    %c13056_107 = arith.constant 13056 : index
    %211 = vector.load %arg3[%c0_106, %c13056_107] : memref<18x18432xf32, #tpu.memory_space<vmem>>, vector<18x384xf32>
    tpu.vector_store %arg3[%c0_106, %c13056_107], %210 {strides = array<i32>} : memref<18x18432xf32, #tpu.memory_space<vmem>>, vector<18x384xf32>,
    %c0_108 = arith.constant 0 : index
    %c13440 = arith.constant 13440 : index
    %212 = vector.load %arg1[%c0_108, %c13440] : memref<1x18432xf32, #tpu.memory_space<vmem>>, vector<1x384xf32>
    %213 = vector.broadcast %212 : vector<1x384xf32> to vector<18x384xf32>
    %214 = arith.mulf %213, %1 : vector<18x384xf32>
    %215 = vector.broadcast %0 : f32 to vector<18x384xf32>
    %216 = arith.addf %214, %215 : vector<18x384xf32>
    %c0_109 = arith.constant 0 : index
    %c13440_110 = arith.constant 13440 : index
    %217 = vector.load %arg3[%c0_109, %c13440_110] : memref<18x18432xf32, #tpu.memory_space<vmem>>, vector<18x384xf32>
    tpu.vector_store %arg3[%c0_109, %c13440_110], %216 {strides = array<i32>} : memref<18x18432xf32, #tpu.memory_space<vmem>>, vector<18x384xf32>,
    %c0_111 = arith.constant 0 : index
    %c13824 = arith.constant 13824 : index
    %218 = vector.load %arg1[%c0_111, %c13824] : memref<1x18432xf32, #tpu.memory_space<vmem>>, vector<1x384xf32>
    %219 = vector.broadcast %218 : vector<1x384xf32> to vector<18x384xf32>
    %220 = arith.mulf %219, %1 : vector<18x384xf32>
    %221 = vector.broadcast %0 : f32 to vector<18x384xf32>
    %222 = arith.addf %220, %221 : vector<18x384xf32>
    %c0_112 = arith.constant 0 : index
    %c13824_113 = arith.constant 13824 : index
    %223 = vector.load %arg3[%c0_112, %c13824_113] : memref<18x18432xf32, #tpu.memory_space<vmem>>, vector<18x384xf32>
    tpu.vector_store %arg3[%c0_112, %c13824_113], %222 {strides = array<i32>} : memref<18x18432xf32, #tpu.memory_space<vmem>>, vector<18x384xf32>,
    %c0_114 = arith.constant 0 : index
    %c14208 = arith.constant 14208 : index
    %224 = vector.load %arg1[%c0_114, %c14208] : memref<1x18432xf32, #tpu.memory_space<vmem>>, vector<1x384xf32>
    %225 = vector.broadcast %224 : vector<1x384xf32> to vector<18x384xf32>
    %226 = arith.mulf %225, %1 : vector<18x384xf32>
    %227 = vector.broadcast %0 : f32 to vector<18x384xf32>
    %228 = arith.addf %226, %227 : vector<18x384xf32>
    %c0_115 = arith.constant 0 : index
    %c14208_116 = arith.constant 14208 : index
    %229 = vector.load %arg3[%c0_115, %c14208_116] : memref<18x18432xf32, #tpu.memory_space<vmem>>, vector<18x384xf32>
    tpu.vector_store %arg3[%c0_115, %c14208_116], %228 {strides = array<i32>} : memref<18x18432xf32, #tpu.memory_space<vmem>>, vector<18x384xf32>,
    %c0_117 = arith.constant 0 : index
    %c14592 = arith.constant 14592 : index
    %230 = vector.load %arg1[%c0_117, %c14592] : memref<1x18432xf32, #tpu.memory_space<vmem>>, vector<1x384xf32>
    %231 = vector.broadcast %230 : vector<1x384xf32> to vector<18x384xf32>
    %232 = arith.mulf %231, %1 : vector<18x384xf32>
    %233 = vector.broadcast %0 : f32 to vector<18x384xf32>
    %234 = arith.addf %232, %233 : vector<18x384xf32>
    %c0_118 = arith.constant 0 : index
    %c14592_119 = arith.constant 14592 : index
    %235 = vector.load %arg3[%c0_118, %c14592_119] : memref<18x18432xf32, #tpu.memory_space<vmem>>, vector<18x384xf32>
    tpu.vector_store %arg3[%c0_118, %c14592_119], %234 {strides = array<i32>} : memref<18x18432xf32, #tpu.memory_space<vmem>>, vector<18x384xf32>,
    %c0_120 = arith.constant 0 : index
    %c14976 = arith.constant 14976 : index
    %236 = vector.load %arg1[%c0_120, %c14976] : memref<1x18432xf32, #tpu.memory_space<vmem>>, vector<1x384xf32>
    %237 = vector.broadcast %236 : vector<1x384xf32> to vector<18x384xf32>
    %238 = arith.mulf %237, %1 : vector<18x384xf32>
    %239 = vector.broadcast %0 : f32 to vector<18x384xf32>
    %240 = arith.addf %238, %239 : vector<18x384xf32>
    %c0_121 = arith.constant 0 : index
    %c14976_122 = arith.constant 14976 : index
    %241 = vector.load %arg3[%c0_121, %c14976_122] : memref<18x18432xf32, #tpu.memory_space<vmem>>, vector<18x384xf32>
    tpu.vector_store %arg3[%c0_121, %c14976_122], %240 {strides = array<i32>} : memref<18x18432xf32, #tpu.memory_space<vmem>>, vector<18x384xf32>,
    %c0_123 = arith.constant 0 : index
    %c15360 = arith.constant 15360 : index
    %242 = vector.load %arg1[%c0_123, %c15360] : memref<1x18432xf32, #tpu.memory_space<vmem>>, vector<1x384xf32>
    %243 = vector.broadcast %242 : vector<1x384xf32> to vector<18x384xf32>
    %244 = arith.mulf %243, %1 : vector<18x384xf32>
    %245 = vector.broadcast %0 : f32 to vector<18x384xf32>
    %246 = arith.addf %244, %245 : vector<18x384xf32>
    %c0_124 = arith.constant 0 : index
    %c15360_125 = arith.constant 15360 : index
    %247 = vector.load %arg3[%c0_124, %c15360_125] : memref<18x18432xf32, #tpu.memory_space<vmem>>, vector<18x384xf32>
    tpu.vector_store %arg3[%c0_124, %c15360_125], %246 {strides = array<i32>} : memref<18x18432xf32, #tpu.memory_space<vmem>>, vector<18x384xf32>,
    %c0_126 = arith.constant 0 : index
    %c15744 = arith.constant 15744 : index
    %248 = vector.load %arg1[%c0_126, %c15744] : memref<1x18432xf32, #tpu.memory_space<vmem>>, vector<1x384xf32>
    %249 = vector.broadcast %248 : vector<1x384xf32> to vector<18x384xf32>
    %250 = arith.mulf %249, %1 : vector<18x384xf32>
    %251 = vector.broadcast %0 : f32 to vector<18x384xf32>
    %252 = arith.addf %250, %251 : vector<18x384xf32>
    %c0_127 = arith.constant 0 : index
    %c15744_128 = arith.constant 15744 : index
    %253 = vector.load %arg3[%c0_127, %c15744_128] : memref<18x18432xf32, #tpu.memory_space<vmem>>, vector<18x384xf32>
    tpu.vector_store %arg3[%c0_127, %c15744_128], %252 {strides = array<i32>} : memref<18x18432xf32, #tpu.memory_space<vmem>>, vector<18x384xf32>,
    %c0_129 = arith.constant 0 : index
    %c16128 = arith.constant 16128 : index
    %254 = vector.load %arg1[%c0_129, %c16128] : memref<1x18432xf32, #tpu.memory_space<vmem>>, vector<1x384xf32>
    %255 = vector.broadcast %254 : vector<1x384xf32> to vector<18x384xf32>
    %256 = arith.mulf %255, %1 : vector<18x384xf32>
    %257 = vector.broadcast %0 : f32 to vector<18x384xf32>
    %258 = arith.addf %256, %257 : vector<18x384xf32>
    %c0_130 = arith.constant 0 : index
    %c16128_131 = arith.constant 16128 : index
    %259 = vector.load %arg3[%c0_130, %c16128_131] : memref<18x18432xf32, #tpu.memory_space<vmem>>, vector<18x384xf32>
    tpu.vector_store %arg3[%c0_130, %c16128_131], %258 {strides = array<i32>} : memref<18x18432xf32, #tpu.memory_space<vmem>>, vector<18x384xf32>,
    %c0_132 = arith.constant 0 : index
    %c16512 = arith.constant 16512 : index
    %260 = vector.load %arg1[%c0_132, %c16512] : memref<1x18432xf32, #tpu.memory_space<vmem>>, vector<1x384xf32>
    %261 = vector.broadcast %260 : vector<1x384xf32> to vector<18x384xf32>
    %262 = arith.mulf %261, %1 : vector<18x384xf32>
    %263 = vector.broadcast %0 : f32 to vector<18x384xf32>
    %264 = arith.addf %262, %263 : vector<18x384xf32>
    %c0_133 = arith.constant 0 : index
    %c16512_134 = arith.constant 16512 : index
    %265 = vector.load %arg3[%c0_133, %c16512_134] : memref<18x18432xf32, #tpu.memory_space<vmem>>, vector<18x384xf32>
    tpu.vector_store %arg3[%c0_133, %c16512_134], %264 {strides = array<i32>} : memref<18x18432xf32, #tpu.memory_space<vmem>>, vector<18x384xf32>,
    %c0_135 = arith.constant 0 : index
    %c16896 = arith.constant 16896 : index
    %266 = vector.load %arg1[%c0_135, %c16896] : memref<1x18432xf32, #tpu.memory_space<vmem>>, vector<1x384xf32>
    %267 = vector.broadcast %266 : vector<1x384xf32> to vector<18x384xf32>
    %268 = arith.mulf %267, %1 : vector<18x384xf32>
    %269 = vector.broadcast %0 : f32 to vector<18x384xf32>
    %270 = arith.addf %268, %269 : vector<18x384xf32>
    %c0_136 = arith.constant 0 : index
    %c16896_137 = arith.constant 16896 : index
    %271 = vector.load %arg3[%c0_136, %c16896_137] : memref<18x18432xf32, #tpu.memory_space<vmem>>, vector<18x384xf32>
    tpu.vector_store %arg3[%c0_136, %c16896_137], %270 {strides = array<i32>} : memref<18x18432xf32, #tpu.memory_space<vmem>>, vector<18x384xf32>,
    %c0_138 = arith.constant 0 : index
    %c17280 = arith.constant 17280 : index
    %272 = vector.load %arg1[%c0_138, %c17280] : memref<1x18432xf32, #tpu.memory_space<vmem>>, vector<1x384xf32>
    %273 = vector.broadcast %272 : vector<1x384xf32> to vector<18x384xf32>
    %274 = arith.mulf %273, %1 : vector<18x384xf32>
    %275 = vector.broadcast %0 : f32 to vector<18x384xf32>
    %276 = arith.addf %274, %275 : vector<18x384xf32>
    %c0_139 = arith.constant 0 : index
    %c17280_140 = arith.constant 17280 : index
    %277 = vector.load %arg3[%c0_139, %c17280_140] : memref<18x18432xf32, #tpu.memory_space<vmem>>, vector<18x384xf32>
    tpu.vector_store %arg3[%c0_139, %c17280_140], %276 {strides = array<i32>} : memref<18x18432xf32, #tpu.memory_space<vmem>>, vector<18x384xf32>,
    %c0_141 = arith.constant 0 : index
    %c17664 = arith.constant 17664 : index
    %278 = vector.load %arg1[%c0_141, %c17664] : memref<1x18432xf32, #tpu.memory_space<vmem>>, vector<1x384xf32>
    %279 = vector.broadcast %278 : vector<1x384xf32> to vector<18x384xf32>
    %280 = arith.mulf %279, %1 : vector<18x384xf32>
    %281 = vector.broadcast %0 : f32 to vector<18x384xf32>
    %282 = arith.addf %280, %281 : vector<18x384xf32>
    %c0_142 = arith.constant 0 : index
    %c17664_143 = arith.constant 17664 : index
    %283 = vector.load %arg3[%c0_142, %c17664_143] : memref<18x18432xf32, #tpu.memory_space<vmem>>, vector<18x384xf32>
    tpu.vector_store %arg3[%c0_142, %c17664_143], %282 {strides = array<i32>} : memref<18x18432xf32, #tpu.memory_space<vmem>>, vector<18x384xf32>,
    %c0_144 = arith.constant 0 : index
    %c18048 = arith.constant 18048 : index
    %284 = vector.load %arg1[%c0_144, %c18048] : memref<1x18432xf32, #tpu.memory_space<vmem>>, vector<1x384xf32>
    %285 = vector.broadcast %284 : vector<1x384xf32> to vector<18x384xf32>
    %286 = arith.mulf %285, %1 : vector<18x384xf32>
    %287 = vector.broadcast %0 : f32 to vector<18x384xf32>
    %288 = arith.addf %286, %287 : vector<18x384xf32>
    %c0_145 = arith.constant 0 : index
    %c18048_146 = arith.constant 18048 : index
    %289 = vector.load %arg3[%c0_145, %c18048_146] : memref<18x18432xf32, #tpu.memory_space<vmem>>, vector<18x384xf32>
    tpu.vector_store %arg3[%c0_145, %c18048_146], %288 {strides = array<i32>} : memref<18x18432xf32, #tpu.memory_space<vmem>>, vector<18x384xf32>,
    return
  }
}

</mosaic_0001>

<llo_original>
// kernel: tile.7
$region0: #{tile.7}
  %s0 = inlined_call_operand.vmem [shape: f32[18,16,24], index: 0, kind: input, shape index: {}]
  %s1 = inlined_call_operand.vmem [shape: f32[18,384], index: 1, kind: output, shape index: {}]
  %s2 = smov 3
  %v3 = vld [vmem:[%s0] ss:$16 sm:%s2]
  %s4 = smov 12
  %v5 = vld [vmem:[%s0] ss:$16 sm:%s4]
  %vm6 = vcmask 1043458
  %v7 = vsel %vm6, %v5, %v3
  %s8 = smov 48
  %v9 = vld [vmem:[%s0] ss:$16 sm:%s8]
  %vm10 = vcmask 1045508
  %v11 = vsel %vm10, %v9, %v7
  %s12 = smov 192
  %v13 = vld [vmem:[%s0] ss:$16 sm:%s12]
  %vm14 = vcmask 1047558
  %v15 = vsel %vm14, %v13, %v11
  %vm16 = vcmask 195584
  %17 = vst.msk [vmem:[%s1] sm:$0xff] %vm16, %v15
  %s18 = scalar_lea.vmem %s0, 128
  %s19 = smov 3
  %v20 = vld [vmem:[%s18] ss:$16 sm:%s19]
  %s21 = scalar_lea.vmem %s0, 128
  %s22 = smov 12
  %v23 = vld [vmem:[%s21] ss:$16 sm:%s22]
  %vm24 = vcmask 1043458
  %v25 = vsel %vm24, %v23, %v20
  %s26 = scalar_lea.vmem %s0, 128
  %s27 = smov 48
  %v28 = vld [vmem:[%s26] ss:$16 sm:%s27]
  %vm29 = vcmask 1045508
  %v30 = vsel %vm29, %v28, %v25
  %s31 = scalar_lea.vmem %s0, 128
  %s32 = smov 192
  %v33 = vld [vmem:[%s31] ss:$16 sm:%s32]
  %vm34 = vcmask 1047558
  %v35 = vsel %vm34, %v33, %v30
  %vm36 = vcmask 195584
  %s37 = scalar_lea.vmem %s1, 24
  %38 = vst.msk [vmem:[%s37] sm:$0xff] %vm36, %v35
  %s39 = scalar_lea.vmem %s0, 256
  %s40 = smov 3
  %v41 = vld [vmem:[%s39] ss:$16 sm:%s40]
  %vm42 = vcmask 195584
  %s43 = scalar_lea.vmem %s1, 48
  %44 = vst.msk [vmem:[%s43] sm:$0x3] %vm42, %v41
  %s45 = scalar_lea.vmem %s0, 133
  %s46 = smov 3
  %v47 = vld [vmem:[%s45] ss:$16 sm:%s46]
  %s48 = scalar_lea.vmem %s0, 133
  %s49 = smov 12
  %v50 = vld [vmem:[%s48] ss:$16 sm:%s49]
  %vm51 = vcmask 1043458
  %v52 = vsel %vm51, %v50, %v47
  %s53 = scalar_lea.vmem %s0, 133
  %s54 = smov 48
  %v55 = vld [vmem:[%s53] ss:$16 sm:%s54]
  %vm56 = vcmask 1045508
  %v57 = vsel %vm56, %v55, %v52
  %s58 = scalar_lea.vmem %s0, 133
  %s59 = smov 192
  %v60 = vld [vmem:[%s58] ss:$16 sm:%s59]
  %vm61 = vcmask 1047558
  %v62 = vsel %vm61, %v60, %v57
  %s63 = scalar_lea.vmem %s0, 5
  %s64 = smov 3
  %v65 = vld [vmem:[%s63] ss:$16 sm:%s64]
  %s66 = scalar_lea.vmem %s0, 5
  %s67 = smov 12
  %v68 = vld [vmem:[%s66] ss:$16 sm:%s67]
  %vm69 = vcmask 1043458
  %v70 = vsel %vm69, %v68, %v65
  %s71 = scalar_lea.vmem %s0, 5
  %s72 = smov 48
  %v73 = vld [vmem:[%s71] ss:$16 sm:%s72]
  %vm74 = vcmask 1045508
  %v75 = vsel %vm74, %v73, %v70
  %s76 = scalar_lea.vmem %s0, 5
  %s77 = smov 192
  %v78 = vld [vmem:[%s76] ss:$16 sm:%s77]
  %vm79 = vcmask 1047558
  %v80 = vsel %vm79, %v78, %v75
  %vm81 = vcmask 64512
  %v82 = vsel %vm81, %v80, %v62
  %83 = vrot.lane.b32.xlu0 %v82, 120
  %v84 = vpop.permute.xlu0 %83
  %vm85 = vcmask 130048
  %s86 = scalar_lea.vmem %s1, 32
  %87 = vst.msk [vmem:[%s86] sm:$0xff] %vm85, %v84
  %vm88 = vcmask 1048512
  %89 = vst.msk [vmem:[%s1] sm:$0xff] %vm88, %v84
  %s90 = scalar_lea.vmem %s0, 5
  %s91 = smov 3
  %v92 = vld [vmem:[%s90] ss:$16 sm:%s91]
  %s93 = scalar_lea.vmem %s0, 5
  %s94 = smov 12
  %v95 = vld [vmem:[%s93] ss:$16 sm:%s94]
  %vm96 = vcmask 1043458
  %v97 = vsel %vm96, %v95, %v92
  %s98 = scalar_lea.vmem %s0, 5
  %s99 = smov 48
  %v100 = vld [vmem:[%s98] ss:$16 sm:%s99]
  %vm101 = vcmask 1045508
  %v102 = vsel %vm101, %v100, %v97
  %s103 = scalar_lea.vmem %s0, 5
  %s104 = smov 192
  %v105 = vld [vmem:[%s103] ss:$16 sm:%s104]
  %vm106 = vcmask 1047558
  %v107 = vsel %vm106, %v105, %v102
  %s108 = scalar_lea.vmem %s0, 261
  %s109 = smov 3
  %v110 = vld [vmem:[%s108] ss:$16 sm:%s109]
  %s111 = scalar_lea.vmem %s0, 101
  %s112 = smov 12
  %v113 = vld [vmem:[%s111] ss:$16 sm:%s112]
  %vm114 = vcmask 1043458
  %v115 = vsel %vm114, %v113, %v110
  %s116 = scalar_lea.vmem %s0, 101
  %s117 = smov 48
  %v118 = vld [vmem:[%s116] ss:$16 sm:%s117]
  %vm119 = vcmask 1045508
  %v120 = vsel %vm119, %v118, %v115
  %s121 = scalar_lea.vmem %s0, 101
  %s122 = smov 192
  %v123 = vld [vmem:[%s121] ss:$16 sm:%s122]
  %vm124 = vcmask 1047558
  %v125 = vsel %vm124, %v123, %v120
  %vm126 = vcmask 64512
  %v127 = vsel %vm126, %v125, %v107
  %128 = vrot.lane.b32.xlu0 %v127, 120
  %v129 = vpop.permute.xlu0 %128
  %vm130 = vcmask 130048
  %s131 = scalar_lea.vmem %s1, 8
  %132 = vst.msk [vmem:[%s131] sm:$0xff] %vm130, %v129
  %vm133 = vcmask 1048512
  %s134 = scalar_lea.vmem %s1, 48
  %135 = vst.msk [vmem:[%s134] sm:$0x3] %vm133, %v129
  %s136 = scalar_lea.vmem %s1, 22
  %137 = vst.msk [vmem:[%s136] sm:$0xfc] %vm133, %v129
  %s138 = scalar_lea.vmem %s0, 261
  %s139 = smov 3
  %v140 = vld [vmem:[%s138] ss:$16 sm:%s139]
  %s141 = scalar_lea.vmem %s0, 229
  %s142 = smov 3
  %v143 = vld [vmem:[%s141] ss:$16 sm:%s142]
  %vm144 = vcmask 64512
  %v145 = vsel %vm144, %v143, %v140
  %146 = vrot.lane.b32.xlu0 %v145, 120
  %v147 = vpop.permute.xlu0 %146
  %vm148 = vcmask 130048
  %s149 = scalar_lea.vmem %s1, 56
  %150 = vst.msk [vmem:[%s149] sm:$0x3] %vm148, %v147
  %vm151 = vcmask 1048512
  %s152 = scalar_lea.vmem %s1, 30
  %153 = vst.msk [vmem:[%s152] sm:$0x3] %vm151, %v147
  %s154 = scalar_lea.vmem %s0, 266
  %s155 = smov 3
  %v156 = vld [vmem:[%s154] ss:$16 sm:%s155]
  %s157 = scalar_lea.vmem %s0, 106
  %s158 = smov 12
  %v159 = vld [vmem:[%s157] ss:$16 sm:%s158]
  %vm160 = vcmask 1043458
  %v161 = vsel %vm160, %v159, %v156
  %s162 = scalar_lea.vmem %s0, 106
  %s163 = smov 48
  %v164 = vld [vmem:[%s162] ss:$16 sm:%s163]
  %vm165 = vcmask 1045508
  %v166 = vsel %vm165, %v164, %v161
  %s167 = scalar_lea.vmem %s0, 106
  %s168 = smov 192
  %v169 = vld [vmem:[%s167] ss:$16 sm:%s168]
  %vm170 = vcmask 1047558
  %v171 = vsel %vm170, %v169, %v166
  %s172 = scalar_lea.vmem %s0, 138
  %s173 = smov 3
  %v174 = vld [vmem:[%s172] ss:$16 sm:%s173]
  %s175 = scalar_lea.vmem %s0, 138
  %s176 = smov 12
  %v177 = vld [vmem:[%s175] ss:$16 sm:%s176]
  %vm178 = vcmask 1043458
  %v179 = vsel %vm178, %v177, %v174
  %s180 = scalar_lea.vmem %s0, 138
  %s181 = smov 48
  %v182 = vld [vmem:[%s180] ss:$16 sm:%s181]
  %vm183 = vcmask 1045508
  %v184 = vsel %vm183, %v182, %v179
  %s185 = scalar_lea.vmem %s0, 138
  %s186 = smov 192
  %v187 = vld [vmem:[%s185] ss:$16 sm:%s186]
  %vm188 = vcmask 1047558
  %v189 = vsel %vm188, %v187, %v184
  %vm190 = vcmask 130048
  %v191 = vsel %vm190, %v189, %v171
  %192 = vrot.lane.b32.xlu0 %v191, 112
  %v193 = vpop.permute.xlu0 %192
  %vm194 = vcmask 64512
  %s195 = scalar_lea.vmem %s1, 64
  %196 = vst.msk [vmem:[%s195] sm:$0x3] %vm194, %v193
  %s197 = scalar_lea.vmem %s1, 38
  %198 = vst.msk [vmem:[%s197] sm:$0xfc] %vm194, %v193
  %vm199 = vcmask 1048448
  %s200 = scalar_lea.vmem %s1, 32
  %201 = vst.msk [vmem:[%s200] sm:$0xff] %vm199, %v193
  %s202 = scalar_lea.vmem %s0, 234
  %s203 = smov 3
  %v204 = vld [vmem:[%s202] ss:$16 sm:%s203]
  %s205 = scalar_lea.vmem %s0, 4294967274
  %s206 = smov 12
  %v207 = vld [vmem:[%s205] ss:$16 sm:%s206]
  %vm208 = vcmask 1043458
  %v209 = vsel %vm208, %v207, %v204
  %s210 = scalar_lea.vmem %s0, 4294967274
  %s211 = smov 48
  %v212 = vld [vmem:[%s210] ss:$16 sm:%s211]
  %vm213 = vcmask 1045508
  %v214 = vsel %vm213, %v212, %v209
  %s215 = scalar_lea.vmem %s0, 4294967274
  %s216 = smov 192
  %v217 = vld [vmem:[%s215] ss:$16 sm:%s216]
  %vm218 = vcmask 1047558
  %v219 = vsel %vm218, %v217, %v214
  %s220 = scalar_lea.vmem %s0, 10
  %s221 = smov 3
  %v222 = vld [vmem:[%s220] ss:$16 sm:%s221]
  %s223 = scalar_lea.vmem %s0, 10
  %s224 = smov 12
  %v225 = vld [vmem:[%s223] ss:$16 sm:%s224]
  %vm226 = vcmask 1043458
  %v227 = vsel %vm226, %v225, %v222
  %s228 = scalar_lea.vmem %s0, 10
  %s229 = smov 48
  %v230 = vld [vmem:[%s228] ss:$16 sm:%s229]
  %vm231 = vcmask 1045508
  %v232 = vsel %vm231, %v230, %v227
  %s233 = scalar_lea.vmem %s0, 10
  %s234 = smov 192
  %v235 = vld [vmem:[%s233] ss:$16 sm:%s234]
  %vm236 = vcmask 1047558
  %v237 = vsel %vm236, %v235, %v232
  %vm238 = vcmask 130048
  %v239 = vsel %vm238, %v237, %v219
  %240 = vrot.lane.b32.xlu0 %v239, 112
  %v241 = vpop.permute.xlu0 %240
  %vm242 = vcmask 64512
  %s243 = scalar_lea.vmem %s1, 46
  %244 = vst.msk [vmem:[%s243] sm:$0x3] %vm242, %v241
  %s245 = scalar_lea.vmem %s1, 14
  %246 = vst.msk [vmem:[%s245] sm:$0xfc] %vm242, %v241
  %vm247 = vcmask 1048448
  %s248 = scalar_lea.vmem %s1, 8
  %249 = vst.msk [vmem:[%s248] sm:$0xff] %vm247, %v241
  %s250 = scalar_lea.vmem %s0, 106
  %s251 = smov 3
  %v252 = vld [vmem:[%s250] ss:$16 sm:%s251]
  %s253 = scalar_lea.vmem %s0, 266
  %s254 = smov 3
  %v255 = vld [vmem:[%s253] ss:$16 sm:%s254]
  %vm256 = vcmask 130048
  %v257 = vsel %vm256, %v255, %v252
  %258 = vrot.lane.b32.xlu0 %v257, 112
  %v259 = vpop.permute.xlu0 %258
  %vm260 = vcmask 64512
  %s261 = scalar_lea.vmem %s1, 22
  %262 = vst.msk [vmem:[%s261] sm:$0x3] %vm260, %v259
  %vm263 = vcmask 1048448
  %s264 = scalar_lea.vmem %s1, 56
  %265 = vst.msk [vmem:[%s264] sm:$0x3] %vm263, %v259
  %s266 = scalar_lea.vmem %s0, 271
  %s267 = smov 3
  %v268 = vld [vmem:[%s266] ss:$16 sm:%s267]
  %s269 = scalar_lea.vmem %s0, 111
  %s270 = smov 12
  %v271 = vld [vmem:[%s269] ss:$16 sm:%s270]
  %vm272 = vcmask 1043458
  %v273 = vsel %vm272, %v271, %v268
  %s274 = scalar_lea.vmem %s0, 111
  %s275 = smov 48
  %v276 = vld [vmem:[%s274] ss:$16 sm:%s275]
  %vm277 = vcmask 1045508
  %v278 = vsel %vm277, %v276, %v273
  %s279 = scalar_lea.vmem %s0, 111
  %s280 = smov 192
  %v281 = vld [vmem:[%s279] ss:$16 sm:%s280]
  %vm282 = vcmask 1047558
  %v283 = vsel %vm282, %v281, %v278
  %284 = vrot.lane.b32.xlu0 %v283, 104
  %v285 = vpop.permute.xlu0 %284
  %vm286 = vcmask 1048384
  %s287 = scalar_lea.vmem %s1, 64
  %288 = vst.msk [vmem:[%s287] sm:$0x3] %vm286, %v285
  %s289 = scalar_lea.vmem %s1, 38
  %290 = vst.msk [vmem:[%s289] sm:$0xfc] %vm286, %v285
  %s291 = scalar_lea.vmem %s0, 239
  %s292 = smov 3
  %v293 = vld [vmem:[%s291] ss:$16 sm:%s292]
  %s294 = scalar_lea.vmem %s0, 4294967279
  %s295 = smov 12
  %v296 = vld [vmem:[%s294] ss:$16 sm:%s295]
  %vm297 = vcmask 1043458
  %v298 = vsel %vm297, %v296, %v293
  %s299 = scalar_lea.vmem %s0, 4294967279
  %s300 = smov 48
  %v301 = vld [vmem:[%s299] ss:$16 sm:%s300]
  %vm302 = vcmask 1045508
  %v303 = vsel %vm302, %v301, %v298
  %s304 = scalar_lea.vmem %s0, 4294967279
  %s305 = smov 192
  %v306 = vld [vmem:[%s304] ss:$16 sm:%s305]
  %vm307 = vcmask 1047558
  %v308 = vsel %vm307, %v306, %v303
  %309 = vrot.lane.b32.xlu0 %v308, 104
  %v310 = vpop.permute.xlu0 %309
  %vm311 = vcmask 1048384
  %s312 = scalar_lea.vmem %s1, 46
  %313 = vst.msk [vmem:[%s312] sm:$0x3] %vm311, %v310
  %s314 = scalar_lea.vmem %s1, 14
  %315 = vst.msk [vmem:[%s314] sm:$0xfc] %vm311, %v310
  %s316 = scalar_lea.vmem %s0, 111
  %s317 = smov 3
  %v318 = vld [vmem:[%s316] ss:$16 sm:%s317]
  %319 = vrot.lane.b32.xlu0 %v318, 104
  %v320 = vpop.permute.xlu0 %319
  %vm321 = vcmask 1048384
  %s322 = scalar_lea.vmem %s1, 22
  %323 = vst.msk [vmem:[%s322] sm:$0x3] %vm321, %v320
  %s324 = scalar_lea.vmem %s0, 4
  %s325 = smov 3
  %v326 = vld [vmem:[%s324] ss:$16 sm:%s325]
  %s327 = scalar_lea.vmem %s0, 4
  %s328 = smov 12
  %v329 = vld [vmem:[%s327] ss:$16 sm:%s328]
  %vm330 = vcmask 1043458
  %v331 = vsel %vm330, %v329, %v326
  %s332 = scalar_lea.vmem %s0, 4
  %s333 = smov 48
  %v334 = vld [vmem:[%s332] ss:$16 sm:%s333]
  %vm335 = vcmask 1045508
  %v336 = vsel %vm335, %v334, %v331
  %s337 = scalar_lea.vmem %s0, 4
  %s338 = smov 192
  %v339 = vld [vmem:[%s337] ss:$16 sm:%s338]
  %vm340 = vcmask 1047558
  %v341 = vsel %vm340, %v339, %v336
  %342 = vrot.lane.b32.xlu0 %v341, 96
  %v343 = vpop.permute.xlu0 %342
  %vm344 = vcmask 982784
  %345 = vst.msk [vmem:[%s1] sm:$0xff] %vm344, %v343
  %s346 = scalar_lea.vmem %s0, 260
  %s347 = smov 3
  %v348 = vld [vmem:[%s346] ss:$16 sm:%s347]
  %s349 = scalar_lea.vmem %s0, 100
  %s350 = smov 12
  %v351 = vld [vmem:[%s349] ss:$16 sm:%s350]
  %vm352 = vcmask 1043458
  %v353 = vsel %vm352, %v351, %v348
  %s354 = scalar_lea.vmem %s0, 100
  %s355 = smov 48
  %v356 = vld [vmem:[%s354] ss:$16 sm:%s355]
  %vm357 = vcmask 1045508
  %v358 = vsel %vm357, %v356, %v353
  %s359 = scalar_lea.vmem %s0, 100
  %s360 = smov 192
  %v361 = vld [vmem:[%s359] ss:$16 sm:%s360]
  %vm362 = vcmask 1047558
  %v363 = vsel %vm362, %v361, %v358
  %364 = vrot.lane.b32.xlu0 %v363, 96
  %v365 = vpop.permute.xlu0 %364
  %vm366 = vcmask 982784
  %s367 = scalar_lea.vmem %s1, 48
  %368 = vst.msk [vmem:[%s367] sm:$0x3] %vm366, %v365
  %s369 = scalar_lea.vmem %s1, 22
  %370 = vst.msk [vmem:[%s369] sm:$0xfc] %vm366, %v365
  %s371 = scalar_lea.vmem %s0, 228
  %s372 = smov 3
  %v373 = vld [vmem:[%s371] ss:$16 sm:%s372]
  %374 = vrot.lane.b32.xlu0 %v373, 96
  %v375 = vpop.permute.xlu0 %374
  %vm376 = vcmask 982784
  %s377 = scalar_lea.vmem %s1, 30
  %378 = vst.msk [vmem:[%s377] sm:$0x3] %vm376, %v375
  %s379 = scalar_lea.vmem %s0, 137
  %s380 = smov 3
  %v381 = vld [vmem:[%s379] ss:$16 sm:%s380]
  %s382 = scalar_lea.vmem %s0, 137
  %s383 = smov 12
  %v384 = vld [vmem:[%s382] ss:$16 sm:%s383]
  %vm385 = vcmask 1043458
  %v386 = vsel %vm385, %v384, %v381
  %s387 = scalar_lea.vmem %s0, 137
  %s388 = smov 48
  %v389 = vld [vmem:[%s387] ss:$16 sm:%s388]
  %vm390 = vcmask 1045508
  %v391 = vsel %vm390, %v389, %v386
  %s392 = scalar_lea.vmem %s0, 137
  %s393 = smov 192
  %v394 = vld [vmem:[%s392] ss:$16 sm:%s393]
  %vm395 = vcmask 1047558
  %v396 = vsel %vm395, %v394, %v391
  %397 = vrot.lane.b32.xlu0 %v396, 88
  %v398 = vpop.permute.xlu0 %397
  %vm399 = vcmask 917184
  %s400 = scalar_lea.vmem %s1, 32
  %401 = vst.msk [vmem:[%s400] sm:$0xff] %vm399, %v398
  %s402 = scalar_lea.vmem %s0, 9
  %s403 = smov 3
  %v404 = vld [vmem:[%s402] ss:$16 sm:%s403]
  %s405 = scalar_lea.vmem %s0, 9
  %s406 = smov 12
  %v407 = vld [vmem:[%s405] ss:$16 sm:%s406]
  %vm408 = vcmask 1043458
  %v409 = vsel %vm408, %v407, %v404
  %s410 = scalar_lea.vmem %s0, 9
  %s411 = smov 48
  %v412 = vld [vmem:[%s410] ss:$16 sm:%s411]
  %vm413 = vcmask 1045508
  %v414 = vsel %vm413, %v412, %v409
  %s415 = scalar_lea.vmem %s0, 9
  %s416 = smov 192
  %v417 = vld [vmem:[%s415] ss:$16 sm:%s416]
  %vm418 = vcmask 1047558
  %v419 = vsel %vm418, %v417, %v414
  %420 = vrot.lane.b32.xlu0 %v419, 88
  %v421 = vpop.permute.xlu0 %420
  %vm422 = vcmask 917184
  %s423 = scalar_lea.vmem %s1, 8
  %424 = vst.msk [vmem:[%s423] sm:$0xff] %vm422, %v421
  %s425 = scalar_lea.vmem %s0, 265
  %s426 = smov 3
  %v427 = vld [vmem:[%s425] ss:$16 sm:%s426]
  %428 = vrot.lane.b32.xlu0 %v427, 88
  %v429 = vpop.permute.xlu0 %428
  %vm430 = vcmask 917184
  %s431 = scalar_lea.vmem %s1, 56
  %432 = vst.msk [vmem:[%s431] sm:$0x3] %vm430, %v429
  %s433 = scalar_lea.vmem %s0, 270
  %s434 = smov 3
  %v435 = vld [vmem:[%s433] ss:$16 sm:%s434]
  %s436 = scalar_lea.vmem %s0, 110
  %s437 = smov 12
  %v438 = vld [vmem:[%s436] ss:$16 sm:%s437]
  %vm439 = vcmask 1043458
  %v440 = vsel %vm439, %v438, %v435
  %s441 = scalar_lea.vmem %s0, 110
  %s442 = smov 48
  %v443 = vld [vmem:[%s441] ss:$16 sm:%s442]
  %vm444 = vcmask 1045508
  %v445 = vsel %vm444, %v443, %v440
  %s446 = scalar_lea.vmem %s0, 110
  %s447 = smov 192
  %v448 = vld [vmem:[%s446] ss:$16 sm:%s447]
  %vm449 = vcmask 1047558
  %v450 = vsel %vm449, %v448, %v445
  %451 = vrot.lane.b32.xlu0 %v450, 80
  %v452 = vpop.permute.xlu0 %451
  %vm453 = vcmask 851584
  %s454 = scalar_lea.vmem %s1, 64
  %455 = vst.msk [vmem:[%s454] sm:$0x3] %vm453, %v452
  %s456 = scalar_lea.vmem %s1, 38
  %457 = vst.msk [vmem:[%s456] sm:$0xfc] %vm453, %v452
  %s458 = scalar_lea.vmem %s0, 238
  %s459 = smov 3
  %v460 = vld [vmem:[%s458] ss:$16 sm:%s459]
  %s461 = scalar_lea.vmem %s0, 4294967278
  %s462 = smov 12
  %v463 = vld [vmem:[%s461] ss:$16 sm:%s462]
  %vm464 = vcmask 1043458
  %v465 = vsel %vm464, %v463, %v460
  %s466 = scalar_lea.vmem %s0, 4294967278
  %s467 = smov 48
  %v468 = vld [vmem:[%s466] ss:$16 sm:%s467]
  %vm469 = vcmask 1045508
  %v470 = vsel %vm469, %v468, %v465
  %s471 = scalar_lea.vmem %s0, 4294967278
  %s472 = smov 192
  %v473 = vld [vmem:[%s471] ss:$16 sm:%s472]
  %vm474 = vcmask 1047558
  %v475 = vsel %vm474, %v473, %v470
  %476 = vrot.lane.b32.xlu0 %v475, 80
  %v477 = vpop.permute.xlu0 %476
  %vm478 = vcmask 851584
  %s479 = scalar_lea.vmem %s1, 46
  %480 = vst.msk [vmem:[%s479] sm:$0x3] %vm478, %v477
  %s481 = scalar_lea.vmem %s1, 14
  %482 = vst.msk [vmem:[%s481] sm:$0xfc] %vm478, %v477
  %s483 = scalar_lea.vmem %s0, 110
  %s484 = smov 3
  %v485 = vld [vmem:[%s483] ss:$16 sm:%s484]
  %486 = vrot.lane.b32.xlu0 %v485, 80
  %v487 = vpop.permute.xlu0 %486
  %vm488 = vcmask 851584
  %s489 = scalar_lea.vmem %s1, 22
  %490 = vst.msk [vmem:[%s489] sm:$0x3] %vm488, %v487
  %s491 = scalar_lea.vmem %s0, 3
  %s492 = smov 3
  %v493 = vld [vmem:[%s491] ss:$16 sm:%s492]
  %s494 = scalar_lea.vmem %s0, 3
  %s495 = smov 12
  %v496 = vld [vmem:[%s494] ss:$16 sm:%s495]
  %vm497 = vcmask 1043458
  %v498 = vsel %vm497, %v496, %v493
  %s499 = scalar_lea.vmem %s0, 3
  %s500 = smov 48
  %v501 = vld [vmem:[%s499] ss:$16 sm:%s500]
  %vm502 = vcmask 1045508
  %v503 = vsel %vm502, %v501, %v498
  %s504 = scalar_lea.vmem %s0, 3
  %s505 = smov 192
  %v506 = vld [vmem:[%s504] ss:$16 sm:%s505]
  %vm507 = vcmask 1047558
  %v508 = vsel %vm507, %v506, %v503
  %509 = vrot.lane.b32.xlu0 %v508, 72
  %v510 = vpop.permute.xlu0 %509
  %vm511 = vcmask 785984
  %512 = vst.msk [vmem:[%s1] sm:$0xff] %vm511, %v510
  %s513 = scalar_lea.vmem %s0, 259
  %s514 = smov 3
  %v515 = vld [vmem:[%s513] ss:$16 sm:%s514]
  %s516 = scalar_lea.vmem %s0, 99
  %s517 = smov 12
  %v518 = vld [vmem:[%s516] ss:$16 sm:%s517]
  %vm519 = vcmask 1043458
  %v520 = vsel %vm519, %v518, %v515
  %s521 = scalar_lea.vmem %s0, 99
  %s522 = smov 48
  %v523 = vld [vmem:[%s521] ss:$16 sm:%s522]
  %vm524 = vcmask 1045508
  %v525 = vsel %vm524, %v523, %v520
  %s526 = scalar_lea.vmem %s0, 99
  %s527 = smov 192
  %v528 = vld [vmem:[%s526] ss:$16 sm:%s527]
  %vm529 = vcmask 1047558
  %v530 = vsel %vm529, %v528, %v525
  %531 = vrot.lane.b32.xlu0 %v530, 72
  %v532 = vpop.permute.xlu0 %531
  %vm533 = vcmask 785984
  %s534 = scalar_lea.vmem %s1, 48
  %535 = vst.msk [vmem:[%s534] sm:$0x3] %vm533, %v532
  %s536 = scalar_lea.vmem %s1, 22
  %537 = vst.msk [vmem:[%s536] sm:$0xfc] %vm533, %v532
  %s538 = scalar_lea.vmem %s0, 227
  %s539 = smov 3
  %v540 = vld [vmem:[%s538] ss:$16 sm:%s539]
  %541 = vrot.lane.b32.xlu0 %v540, 72
  %v542 = vpop.permute.xlu0 %541
  %vm543 = vcmask 785984
  %s544 = scalar_lea.vmem %s1, 30
  %545 = vst.msk [vmem:[%s544] sm:$0x3] %vm543, %v542
  %s546 = scalar_lea.vmem %s0, 136
  %s547 = smov 3
  %v548 = vld [vmem:[%s546] ss:$16 sm:%s547]
  %s549 = scalar_lea.vmem %s0, 136
  %s550 = smov 12
  %v551 = vld [vmem:[%s549] ss:$16 sm:%s550]
  %vm552 = vcmask 1043458
  %v553 = vsel %vm552, %v551, %v548
  %s554 = scalar_lea.vmem %s0, 136
  %s555 = smov 48
  %v556 = vld [vmem:[%s554] ss:$16 sm:%s555]
  %vm557 = vcmask 1045508
  %v558 = vsel %vm557, %v556, %v553
  %s559 = scalar_lea.vmem %s0, 136
  %s560 = smov 192
  %v561 = vld [vmem:[%s559] ss:$16 sm:%s560]
  %vm562 = vcmask 1047558
  %v563 = vsel %vm562, %v561, %v558
  %564 = vrot.lane.b32.xlu0 %v563, 64
  %v565 = vpop.permute.xlu0 %564
  %vm566 = vcmask 720384
  %s567 = scalar_lea.vmem %s1, 32
  %568 = vst.msk [vmem:[%s567] sm:$0xff] %vm566, %v565
  %s569 = scalar_lea.vmem %s0, 8
  %s570 = smov 3
  %v571 = vld [vmem:[%s569] ss:$16 sm:%s570]
  %s572 = scalar_lea.vmem %s0, 8
  %s573 = smov 12
  %v574 = vld [vmem:[%s572] ss:$16 sm:%s573]
  %vm575 = vcmask 1043458
  %v576 = vsel %vm575, %v574, %v571
  %s577 = scalar_lea.vmem %s0, 8
  %s578 = smov 48
  %v579 = vld [vmem:[%s577] ss:$16 sm:%s578]
  %vm580 = vcmask 1045508
  %v581 = vsel %vm580, %v579, %v576
  %s582 = scalar_lea.vmem %s0, 8
  %s583 = smov 192
  %v584 = vld [vmem:[%s582] ss:$16 sm:%s583]
  %vm585 = vcmask 1047558
  %v586 = vsel %vm585, %v584, %v581
  %587 = vrot.lane.b32.xlu0 %v586, 64
  %v588 = vpop.permute.xlu0 %587
  %vm589 = vcmask 720384
  %s590 = scalar_lea.vmem %s1, 8
  %591 = vst.msk [vmem:[%s590] sm:$0xff] %vm589, %v588
  %s592 = scalar_lea.vmem %s0, 264
  %s593 = smov 3
  %v594 = vld [vmem:[%s592] ss:$16 sm:%s593]
  %595 = vrot.lane.b32.xlu0 %v594, 64
  %v596 = vpop.permute.xlu0 %595
  %vm597 = vcmask 720384
  %s598 = scalar_lea.vmem %s1, 56
  %599 = vst.msk [vmem:[%s598] sm:$0x3] %vm597, %v596
  %s600 = scalar_lea.vmem %s0, 269
  %s601 = smov 3
  %v602 = vld [vmem:[%s600] ss:$16 sm:%s601]
  %s603 = scalar_lea.vmem %s0, 109
  %s604 = smov 12
  %v605 = vld [vmem:[%s603] ss:$16 sm:%s604]
  %vm606 = vcmask 1043458
  %v607 = vsel %vm606, %v605, %v602
  %s608 = scalar_lea.vmem %s0, 109
  %s609 = smov 48
  %v610 = vld [vmem:[%s608] ss:$16 sm:%s609]
  %vm611 = vcmask 1045508
  %v612 = vsel %vm611, %v610, %v607
  %s613 = scalar_lea.vmem %s0, 109
  %s614 = smov 192
  %v615 = vld [vmem:[%s613] ss:$16 sm:%s614]
  %vm616 = vcmask 1047558
  %v617 = vsel %vm616, %v615, %v612
  %618 = vrot.lane.b32.xlu0 %v617, 56
  %v619 = vpop.permute.xlu0 %618
  %vm620 = vcmask 654784
  %s621 = scalar_lea.vmem %s1, 64
  %622 = vst.msk [vmem:[%s621] sm:$0x3] %vm620, %v619
  %s623 = scalar_lea.vmem %s1, 38
  %624 = vst.msk [vmem:[%s623] sm:$0xfc] %vm620, %v619
  %s625 = scalar_lea.vmem %s0, 237
  %s626 = smov 3
  %v627 = vld [vmem:[%s625] ss:$16 sm:%s626]
  %s628 = scalar_lea.vmem %s0, 4294967277
  %s629 = smov 12
  %v630 = vld [vmem:[%s628] ss:$16 sm:%s629]
  %vm631 = vcmask 1043458
  %v632 = vsel %vm631, %v630, %v627
  %s633 = scalar_lea.vmem %s0, 4294967277
  %s634 = smov 48
  %v635 = vld [vmem:[%s633] ss:$16 sm:%s634]
  %vm636 = vcmask 1045508
  %v637 = vsel %vm636, %v635, %v632
  %s638 = scalar_lea.vmem %s0, 4294967277
  %s639 = smov 192
  %v640 = vld [vmem:[%s638] ss:$16 sm:%s639]
  %vm641 = vcmask 1047558
  %v642 = vsel %vm641, %v640, %v637
  %643 = vrot.lane.b32.xlu0 %v642, 56
  %v644 = vpop.permute.xlu0 %643
  %vm645 = vcmask 654784
  %s646 = scalar_lea.vmem %s1, 46
  %647 = vst.msk [vmem:[%s646] sm:$0x3] %vm645, %v644
  %s648 = scalar_lea.vmem %s1, 14
  %649 = vst.msk [vmem:[%s648] sm:$0xfc] %vm645, %v644
  %s650 = scalar_lea.vmem %s0, 109
  %s651 = smov 3
  %v652 = vld [vmem:[%s650] ss:$16 sm:%s651]
  %653 = vrot.lane.b32.xlu0 %v652, 56
  %v654 = vpop.permute.xlu0 %653
  %vm655 = vcmask 654784
  %s656 = scalar_lea.vmem %s1, 22
  %657 = vst.msk [vmem:[%s656] sm:$0x3] %vm655, %v654
  %s658 = scalar_lea.vmem %s0, 2
  %s659 = smov 3
  %v660 = vld [vmem:[%s658] ss:$16 sm:%s659]
  %s661 = scalar_lea.vmem %s0, 2
  %s662 = smov 12
  %v663 = vld [vmem:[%s661] ss:$16 sm:%s662]
  %vm664 = vcmask 1043458
  %v665 = vsel %vm664, %v663, %v660
  %s666 = scalar_lea.vmem %s0, 2
  %s667 = smov 48
  %v668 = vld [vmem:[%s666] ss:$16 sm:%s667]
  %vm669 = vcmask 1045508
  %v670 = vsel %vm669, %v668, %v665
  %s671 = scalar_lea.vmem %s0, 2
  %s672 = smov 192
  %v673 = vld [vmem:[%s671] ss:$16 sm:%s672]
  %vm674 = vcmask 1047558
  %v675 = vsel %vm674, %v673, %v670
  %676 = vrot.lane.b32.xlu0 %v675, 48
  %v677 = vpop.permute.xlu0 %676
  %vm678 = vcmask 589184
  %679 = vst.msk [vmem:[%s1] sm:$0xff] %vm678, %v677
  %s680 = scalar_lea.vmem %s0, 258
  %s681 = smov 3
  %v682 = vld [vmem:[%s680] ss:$16 sm:%s681]
  %s683 = scalar_lea.vmem %s0, 98
  %s684 = smov 12
  %v685 = vld [vmem:[%s683] ss:$16 sm:%s684]
  %vm686 = vcmask 1043458
  %v687 = vsel %vm686, %v685, %v682
  %s688 = scalar_lea.vmem %s0, 98
  %s689 = smov 48
  %v690 = vld [vmem:[%s688] ss:$16 sm:%s689]
  %vm691 = vcmask 1045508
  %v692 = vsel %vm691, %v690, %v687
  %s693 = scalar_lea.vmem %s0, 98
  %s694 = smov 192
  %v695 = vld [vmem:[%s693] ss:$16 sm:%s694]
  %vm696 = vcmask 1047558
  %v697 = vsel %vm696, %v695, %v692
  %698 = vrot.lane.b32.xlu0 %v697, 48
  %v699 = vpop.permute.xlu0 %698
  %vm700 = vcmask 589184
  %s701 = scalar_lea.vmem %s1, 48
  %702 = vst.msk [vmem:[%s701] sm:$0x3] %vm700, %v699
  %s703 = scalar_lea.vmem %s1, 22
  %704 = vst.msk [vmem:[%s703] sm:$0xfc] %vm700, %v699
  %s705 = scalar_lea.vmem %s0, 226
  %s706 = smov 3
  %v707 = vld [vmem:[%s705] ss:$16 sm:%s706]
  %708 = vrot.lane.b32.xlu0 %v707, 48
  %v709 = vpop.permute.xlu0 %708
  %vm710 = vcmask 589184
  %s711 = scalar_lea.vmem %s1, 30
  %712 = vst.msk [vmem:[%s711] sm:$0x3] %vm710, %v709
  %s713 = scalar_lea.vmem %s0, 135
  %s714 = smov 3
  %v715 = vld [vmem:[%s713] ss:$16 sm:%s714]
  %s716 = scalar_lea.vmem %s0, 135
  %s717 = smov 12
  %v718 = vld [vmem:[%s716] ss:$16 sm:%s717]
  %vm719 = vcmask 1043458
  %v720 = vsel %vm719, %v718, %v715
  %s721 = scalar_lea.vmem %s0, 135
  %s722 = smov 48
  %v723 = vld [vmem:[%s721] ss:$16 sm:%s722]
  %vm724 = vcmask 1045508
  %v725 = vsel %vm724, %v723, %v720
  %s726 = scalar_lea.vmem %s0, 135
  %s727 = smov 192
  %v728 = vld [vmem:[%s726] ss:$16 sm:%s727]
  %vm729 = vcmask 1047558
  %v730 = vsel %vm729, %v728, %v725
  %731 = vrot.lane.b32.xlu0 %v730, 40
  %v732 = vpop.permute.xlu0 %731
  %vm733 = vcmask 523584
  %s734 = scalar_lea.vmem %s1, 32
  %735 = vst.msk [vmem:[%s734] sm:$0xff] %vm733, %v732
  %s736 = scalar_lea.vmem %s0, 7
  %s737 = smov 3
  %v738 = vld [vmem:[%s736] ss:$16 sm:%s737]
  %s739 = scalar_lea.vmem %s0, 7
  %s740 = smov 12
  %v741 = vld [vmem:[%s739] ss:$16 sm:%s740]
  %vm742 = vcmask 1043458
  %v743 = vsel %vm742, %v741, %v738
  %s744 = scalar_lea.vmem %s0, 7
  %s745 = smov 48
  %v746 = vld [vmem:[%s744] ss:$16 sm:%s745]
  %vm747 = vcmask 1045508
  %v748 = vsel %vm747, %v746, %v743
  %s749 = scalar_lea.vmem %s0, 7
  %s750 = smov 192
  %v751 = vld [vmem:[%s749] ss:$16 sm:%s750]
  %vm752 = vcmask 1047558
  %v753 = vsel %vm752, %v751, %v748
  %754 = vrot.lane.b32.xlu0 %v753, 40
  %v755 = vpop.permute.xlu0 %754
  %vm756 = vcmask 523584
  %s757 = scalar_lea.vmem %s1, 8
  %758 = vst.msk [vmem:[%s757] sm:$0xff] %vm756, %v755
  %s759 = scalar_lea.vmem %s0, 263
  %s760 = smov 3
  %v761 = vld [vmem:[%s759] ss:$16 sm:%s760]
  %762 = vrot.lane.b32.xlu0 %v761, 40
  %v763 = vpop.permute.xlu0 %762
  %vm764 = vcmask 523584
  %s765 = scalar_lea.vmem %s1, 56
  %766 = vst.msk [vmem:[%s765] sm:$0x3] %vm764, %v763
  %s767 = scalar_lea.vmem %s0, 268
  %s768 = smov 3
  %v769 = vld [vmem:[%s767] ss:$16 sm:%s768]
  %s770 = scalar_lea.vmem %s0, 108
  %s771 = smov 12
  %v772 = vld [vmem:[%s770] ss:$16 sm:%s771]
  %vm773 = vcmask 1043458
  %v774 = vsel %vm773, %v772, %v769
  %s775 = scalar_lea.vmem %s0, 108
  %s776 = smov 48
  %v777 = vld [vmem:[%s775] ss:$16 sm:%s776]
  %vm778 = vcmask 1045508
  %v779 = vsel %vm778, %v777, %v774
  %s780 = scalar_lea.vmem %s0, 108
  %s781 = smov 192
  %v782 = vld [vmem:[%s780] ss:$16 sm:%s781]
  %vm783 = vcmask 1047558
  %v784 = vsel %vm783, %v782, %v779
  %785 = vrot.lane.b32.xlu0 %v784, 32
  %v786 = vpop.permute.xlu0 %785
  %vm787 = vcmask 457984
  %s788 = scalar_lea.vmem %s1, 64
  %789 = vst.msk [vmem:[%s788] sm:$0x3] %vm787, %v786
  %s790 = scalar_lea.vmem %s1, 38
  %791 = vst.msk [vmem:[%s790] sm:$0xfc] %vm787, %v786
  %s792 = scalar_lea.vmem %s0, 236
  %s793 = smov 3
  %v794 = vld [vmem:[%s792] ss:$16 sm:%s793]
  %s795 = scalar_lea.vmem %s0, 4294967276
  %s796 = smov 12
  %v797 = vld [vmem:[%s795] ss:$16 sm:%s796]
  %vm798 = vcmask 1043458
  %v799 = vsel %vm798, %v797, %v794
  %s800 = scalar_lea.vmem %s0, 4294967276
  %s801 = smov 48
  %v802 = vld [vmem:[%s800] ss:$16 sm:%s801]
  %vm803 = vcmask 1045508
  %v804 = vsel %vm803, %v802, %v799
  %s805 = scalar_lea.vmem %s0, 4294967276
  %s806 = smov 192
  %v807 = vld [vmem:[%s805] ss:$16 sm:%s806]
  %vm808 = vcmask 1047558
  %v809 = vsel %vm808, %v807, %v804
  %810 = vrot.lane.b32.xlu0 %v809, 32
  %v811 = vpop.permute.xlu0 %810
  %vm812 = vcmask 457984
  %s813 = scalar_lea.vmem %s1, 46
  %814 = vst.msk [vmem:[%s813] sm:$0x3] %vm812, %v811
  %s815 = scalar_lea.vmem %s1, 14
  %816 = vst.msk [vmem:[%s815] sm:$0xfc] %vm812, %v811
  %s817 = scalar_lea.vmem %s0, 108
  %s818 = smov 3
  %v819 = vld [vmem:[%s817] ss:$16 sm:%s818]
  %820 = vrot.lane.b32.xlu0 %v819, 32
  %v821 = vpop.permute.xlu0 %820
  %vm822 = vcmask 457984
  %s823 = scalar_lea.vmem %s1, 22
  %824 = vst.msk [vmem:[%s823] sm:$0x3] %vm822, %v821
  %s825 = scalar_lea.vmem %s0, 1
  %s826 = smov 3
  %v827 = vld [vmem:[%s825] ss:$16 sm:%s826]
  %s828 = scalar_lea.vmem %s0, 1
  %s829 = smov 12
  %v830 = vld [vmem:[%s828] ss:$16 sm:%s829]
  %vm831 = vcmask 1043458
  %v832 = vsel %vm831, %v830, %v827
  %s833 = scalar_lea.vmem %s0, 1
  %s834 = smov 48
  %v835 = vld [vmem:[%s833] ss:$16 sm:%s834]
  %vm836 = vcmask 1045508
  %v837 = vsel %vm836, %v835, %v832
  %s838 = scalar_lea.vmem %s0, 1
  %s839 = smov 192
  %v840 = vld [vmem:[%s838] ss:$16 sm:%s839]
  %vm841 = vcmask 1047558
  %v842 = vsel %vm841, %v840, %v837
  %843 = vrot.lane.b32.xlu0 %v842, 24
  %v844 = vpop.permute.xlu0 %843
  %vm845 = vcmask 392384
  %846 = vst.msk [vmem:[%s1] sm:$0xff] %vm845, %v844
  %s847 = scalar_lea.vmem %s0, 257
  %s848 = smov 3
  %v849 = vld [vmem:[%s847] ss:$16 sm:%s848]
  %s850 = scalar_lea.vmem %s0, 97
  %s851 = smov 12
  %v852 = vld [vmem:[%s850] ss:$16 sm:%s851]
  %vm853 = vcmask 1043458
  %v854 = vsel %vm853, %v852, %v849
  %s855 = scalar_lea.vmem %s0, 97
  %s856 = smov 48
  %v857 = vld [vmem:[%s855] ss:$16 sm:%s856]
  %vm858 = vcmask 1045508
  %v859 = vsel %vm858, %v857, %v854
  %s860 = scalar_lea.vmem %s0, 97
  %s861 = smov 192
  %v862 = vld [vmem:[%s860] ss:$16 sm:%s861]
  %vm863 = vcmask 1047558
  %v864 = vsel %vm863, %v862, %v859
  %865 = vrot.lane.b32.xlu0 %v864, 24
  %v866 = vpop.permute.xlu0 %865
  %vm867 = vcmask 392384
  %s868 = scalar_lea.vmem %s1, 48
  %869 = vst.msk [vmem:[%s868] sm:$0x3] %vm867, %v866
  %s870 = scalar_lea.vmem %s1, 22
  %871 = vst.msk [vmem:[%s870] sm:$0xfc] %vm867, %v866
  %s872 = scalar_lea.vmem %s0, 225
  %s873 = smov 3
  %v874 = vld [vmem:[%s872] ss:$16 sm:%s873]
  %875 = vrot.lane.b32.xlu0 %v874, 24
  %v876 = vpop.permute.xlu0 %875
  %vm877 = vcmask 392384
  %s878 = scalar_lea.vmem %s1, 30
  %879 = vst.msk [vmem:[%s878] sm:$0x3] %vm877, %v876
  %s880 = scalar_lea.vmem %s0, 134
  %s881 = smov 3
  %v882 = vld [vmem:[%s880] ss:$16 sm:%s881]
  %s883 = scalar_lea.vmem %s0, 134
  %s884 = smov 12
  %v885 = vld [vmem:[%s883] ss:$16 sm:%s884]
  %vm886 = vcmask 1043458
  %v887 = vsel %vm886, %v885, %v882
  %s888 = scalar_lea.vmem %s0, 134
  %s889 = smov 48
  %v890 = vld [vmem:[%s888] ss:$16 sm:%s889]
  %vm891 = vcmask 1045508
  %v892 = vsel %vm891, %v890, %v887
  %s893 = scalar_lea.vmem %s0, 134
  %s894 = smov 192
  %v895 = vld [vmem:[%s893] ss:$16 sm:%s894]
  %vm896 = vcmask 1047558
  %v897 = vsel %vm896, %v895, %v892
  %898 = vrot.lane.b32.xlu0 %v897, 16
  %v899 = vpop.permute.xlu0 %898
  %vm900 = vcmask 326784
  %s901 = scalar_lea.vmem %s1, 32
  %902 = vst.msk [vmem:[%s901] sm:$0xff] %vm900, %v899
  %s903 = scalar_lea.vmem %s0, 6
  %s904 = smov 3
  %v905 = vld [vmem:[%s903] ss:$16 sm:%s904]
  %s906 = scalar_lea.vmem %s0, 6
  %s907 = smov 12
  %v908 = vld [vmem:[%s906] ss:$16 sm:%s907]
  %vm909 = vcmask 1043458
  %v910 = vsel %vm909, %v908, %v905
  %s911 = scalar_lea.vmem %s0, 6
  %s912 = smov 48
  %v913 = vld [vmem:[%s911] ss:$16 sm:%s912]
  %vm914 = vcmask 1045508
  %v915 = vsel %vm914, %v913, %v910
  %s916 = scalar_lea.vmem %s0, 6
  %s917 = smov 192
  %v918 = vld [vmem:[%s916] ss:$16 sm:%s917]
  %vm919 = vcmask 1047558
  %v920 = vsel %vm919, %v918, %v915
  %921 = vrot.lane.b32.xlu0 %v920, 16
  %v922 = vpop.permute.xlu0 %921
  %vm923 = vcmask 326784
  %s924 = scalar_lea.vmem %s1, 8
  %925 = vst.msk [vmem:[%s924] sm:$0xff] %vm923, %v922
  %s926 = scalar_lea.vmem %s0, 262
  %s927 = smov 3
  %v928 = vld [vmem:[%s926] ss:$16 sm:%s927]
  %929 = vrot.lane.b32.xlu0 %v928, 16
  %v930 = vpop.permute.xlu0 %929
  %vm931 = vcmask 326784
  %s932 = scalar_lea.vmem %s1, 56
  %933 = vst.msk [vmem:[%s932] sm:$0x3] %vm931, %v930
  %s934 = scalar_lea.vmem %s0, 267
  %s935 = smov 3
  %v936 = vld [vmem:[%s934] ss:$16 sm:%s935]
  %s937 = scalar_lea.vmem %s0, 107
  %s938 = smov 12
  %v939 = vld [vmem:[%s937] ss:$16 sm:%s938]
  %vm940 = vcmask 1043458
  %v941 = vsel %vm940, %v939, %v936
  %s942 = scalar_lea.vmem %s0, 107
  %s943 = smov 48
  %v944 = vld [vmem:[%s942] ss:$16 sm:%s943]
  %vm945 = vcmask 1045508
  %v946 = vsel %vm945, %v944, %v941
  %s947 = scalar_lea.vmem %s0, 107
  %s948 = smov 192
  %v949 = vld [vmem:[%s947] ss:$16 sm:%s948]
  %vm950 = vcmask 1047558
  %v951 = vsel %vm950, %v949, %v946
  %952 = vrot.lane.b32.xlu0 %v951, 8
  %v953 = vpop.permute.xlu0 %952
  %vm954 = vcmask 261184
  %s955 = scalar_lea.vmem %s1, 64
  %956 = vst.msk [vmem:[%s955] sm:$0x3] %vm954, %v953
  %s957 = scalar_lea.vmem %s1, 38
  %958 = vst.msk [vmem:[%s957] sm:$0xfc] %vm954, %v953
  %s959 = scalar_lea.vmem %s0, 235
  %s960 = smov 3
  %v961 = vld [vmem:[%s959] ss:$16 sm:%s960]
  %s962 = scalar_lea.vmem %s0, 4294967275
  %s963 = smov 12
  %v964 = vld [vmem:[%s962] ss:$16 sm:%s963]
  %vm965 = vcmask 1043458
  %v966 = vsel %vm965, %v964, %v961
  %s967 = scalar_lea.vmem %s0, 4294967275
  %s968 = smov 48
  %v969 = vld [vmem:[%s967] ss:$16 sm:%s968]
  %vm970 = vcmask 1045508
  %v971 = vsel %vm970, %v969, %v966
  %s972 = scalar_lea.vmem %s0, 4294967275
  %s973 = smov 192
  %v974 = vld [vmem:[%s972] ss:$16 sm:%s973]
  %vm975 = vcmask 1047558
  %v976 = vsel %vm975, %v974, %v971
  %977 = vrot.lane.b32.xlu0 %v976, 8
  %v978 = vpop.permute.xlu0 %977
  %vm979 = vcmask 261184
  %s980 = scalar_lea.vmem %s1, 46
  %981 = vst.msk [vmem:[%s980] sm:$0x3] %vm979, %v978
  %s982 = scalar_lea.vmem %s1, 14
  %983 = vst.msk [vmem:[%s982] sm:$0xfc] %vm979, %v978
  %s984 = scalar_lea.vmem %s0, 107
  %s985 = smov 3
  %v986 = vld [vmem:[%s984] ss:$16 sm:%s985]
  %987 = vrot.lane.b32.xlu0 %v986, 8
  %v988 = vpop.permute.xlu0 %987
  %vm989 = vcmask 261184
  %s990 = scalar_lea.vmem %s1, 22
  %991 = vst.msk [vmem:[%s990] sm:$0x3] %vm989, %v988

// kernel: mini_upsampling_forward.1
$region0: #{mini_upsampling_forward.1}
  #allocation0 [shape = 'u32[]', space=smem, size = 0x4, offset = 0x4, fixed_abs, tag = 'smem constant byte address 0x4 - core index']
  #allocation1 [shape = 'u32[144,128]{1,0:T(1,128)}', space=vmem, size = 0x12000, scoped, tag = 'internal scratch']
  #allocation2 [shape = 'f32[1]{0:T(128)S(6)}', space=smem, size = 0x200, scoped, tag = 'scoped memory for mini_upsampling_forward.1']
  %s0 = inlined_call_operand.<no memory space> [shape: f32[1], index: 0, kind: input, shape index: {}]
  %s1 = inlined_call_operand.vmem [shape: f32[1,18432], index: 1, kind: input, shape index: {}]
  %s2 = inlined_call_operand.vmem [shape: f32[18,384], index: 2, kind: input, shape index: {}]
  %s3 = inlined_call_operand.vmem [shape: f32[18,18432], index: 3, kind: output, shape index: {}]
  %s4 = sld [smem:[#allocation0]]
  $region22: #{mini_upsampling_forward.1} parent=0
    _
  %s6 = ssub.s32 1, %s4
  %s7 = scalar_select 0, %s6, %s4
  %8 = sst [smem:[#allocation2]] %s0
  // Predicated region
  $region2: #{mini_upsampling_forward.1} parent=0 // pred_check
    _
  $region3: #{mini_upsampling_forward.1} parent=0 // pred_check_branch
    %10 = sbr.rel (0) target = $region5
  $region4: #{mini_upsampling_forward.1} parent=0 // pred_region
    _
  $region5: #{mini_upsampling_forward.1} parent=0 // pred_fallthru
    _
  // Predicated region
  $region6: #{mini_upsampling_forward.1} parent=0 // pred_check
    _
  $region7: #{mini_upsampling_forward.1} parent=0 // pred_check_branch
    %12 = sbr.rel (0) target = $region9
  $region8: #{mini_upsampling_forward.1} parent=0 // pred_region
    _
  $region9: #{mini_upsampling_forward.1} parent=0 // pred_fallthru
    _
  // Predicated region
  $region10: #{mini_upsampling_forward.1} parent=0 // pred_check
    _
  $region11: #{mini_upsampling_forward.1} parent=0 // pred_check_branch
    %14 = sbr.rel (0) target = $region13
  $region12: #{mini_upsampling_forward.1} parent=0 // pred_region
    _
  $region13: #{mini_upsampling_forward.1} parent=0 // pred_fallthru
    _
  %s15 = sld [smem:[#allocation2]]
  %v16 = vld [vmem:[%s2] sm:$0xff]
  %v17 = vld [vmem:[%s2 + $0x8] sm:$0xff]
  %v18 = vld [vmem:[%s2 + $0x10] sm:$0xff]
  %v19 = vld [vmem:[%s2 + $0x18] sm:$0xff]
  %v20 = vld [vmem:[%s2 + $0x20] sm:$0xff]
  %v21 = vld [vmem:[%s2 + $0x28] sm:$0xff]
  %v22 = vld [vmem:[%s2 + $0x30] sm:$0x3]
  %v23 = vld [vmem:[%s2 + $0x38] sm:$0x3]
  %v24 = vld [vmem:[%s2 + $0x40] sm:$0x3]
  %v25 = vld [vmem:[%s1] sm:$0x7]
  %v27 = vlaneseq
  %v28 = vshrl.u32 %v27, 7
  %v29 = vsub.s32 0, %v28
  %v30 = vrot.slane %v25, %v29
  %v31 = vlaneseq
  %v32 = vshrl.u32 %v31, 7
  %v33 = vsub.s32 1, %v32
  %v34 = vrot.slane %v25, %v33
  %v35 = vlaneseq
  %v36 = vshrl.u32 %v35, 7
  %v37 = vsub.s32 2, %v36
  %v38 = vrot.slane %v25, %v37
  %v42 = vmul.f32 %v30, %v16
  %v43 = vmul.f32 %v34, %v17
  %v44 = vmul.f32 %v38, %v18
  %v45 = vmul.f32 %v30, %v19
  %v46 = vmul.f32 %v34, %v20
  %v47 = vmul.f32 %v38, %v21
  %v48 = vmul.f32 %v30, %v22
  %v49 = vmul.f32 %v34, %v23
  %v50 = vmul.f32 %v38, %v24
  %v51 = vstv %s15
  %v52 = vadd.f32 %v42, %v51
  %v53 = vadd.f32 %v43, %v51
  %v54 = vadd.f32 %v44, %v51
  %v55 = vadd.f32 %v45, %v51
  %v56 = vadd.f32 %v46, %v51
  %v57 = vadd.f32 %v47, %v51
  %v58 = vadd.f32 %v48, %v51
  %v59 = vadd.f32 %v49, %v51
  %v60 = vadd.f32 %v50, %v51
  %61 = vst [vmem:[%s3] sm:$0xff] %v52
  %62 = vst [vmem:[%s3 + $0x8] sm:$0xff] %v53
  %63 = vst [vmem:[%s3 + $0x10] sm:$0xff] %v54
  %64 = vst [vmem:[%s3 + $0x480] sm:$0xff] %v55
  %65 = vst [vmem:[%s3 + $0x488] sm:$0xff] %v56
  %66 = vst [vmem:[%s3 + $0x490] sm:$0xff] %v57
  %67 = vst [vmem:[%s3 + $0x900] sm:$0x3] %v58
  %68 = vst [vmem:[%s3 + $0x908] sm:$0x3] %v59
  %69 = vst [vmem:[%s3 + $0x910] sm:$0x3] %v60
  %v70 = vld [vmem:[%s1 + $0x3] sm:$0x7]
  %v72 = vlaneseq
  %v73 = vshrl.u32 %v72, 7
  %v74 = vsub.s32 0, %v73
  %v75 = vrot.slane %v70, %v74
  %v76 = vlaneseq
  %v77 = vshrl.u32 %v76, 7
  %v78 = vsub.s32 1, %v77
  %v79 = vrot.slane %v70, %v78
  %v80 = vlaneseq
  %v81 = vshrl.u32 %v80, 7
  %v82 = vsub.s32 2, %v81
  %v83 = vrot.slane %v70, %v82
  %v87 = vmul.f32 %v75, %v16
  %v88 = vmul.f32 %v79, %v17
  %v89 = vmul.f32 %v83, %v18
  %v90 = vmul.f32 %v75, %v19
  %v91 = vmul.f32 %v79, %v20
  %v92 = vmul.f32 %v83, %v21
  %v93 = vmul.f32 %v75, %v22
  %v94 = vmul.f32 %v79, %v23
  %v95 = vmul.f32 %v83, %v24
  %v96 = vadd.f32 %v87, %v51
  %v97 = vadd.f32 %v88, %v51
  %v98 = vadd.f32 %v89, %v51
  %v99 = vadd.f32 %v90, %v51
  %v100 = vadd.f32 %v91, %v51
  %v101 = vadd.f32 %v92, %v51
  %v102 = vadd.f32 %v93, %v51
  %v103 = vadd.f32 %v94, %v51
  %v104 = vadd.f32 %v95, %v51
  %105 = vst [vmem:[%s3 + $0x18] sm:$0xff] %v96
  %106 = vst [vmem:[%s3 + $0x20] sm:$0xff] %v97
  %107 = vst [vmem:[%s3 + $0x28] sm:$0xff] %v98
  %108 = vst [vmem:[%s3 + $0x498] sm:$0xff] %v99
  %109 = vst [vmem:[%s3 + $0x4a0] sm:$0xff] %v100
  %110 = vst [vmem:[%s3 + $0x4a8] sm:$0xff] %v101
  %111 = vst [vmem:[%s3 + $0x918] sm:$0x3] %v102
  %112 = vst [vmem:[%s3 + $0x920] sm:$0x3] %v103
  %113 = vst [vmem:[%s3 + $0x928] sm:$0x3] %v104
  %v114 = vld [vmem:[%s1 + $0x6] sm:$0x7]
  %v116 = vlaneseq
  %v117 = vshrl.u32 %v116, 7
  %v118 = vsub.s32 0, %v117
  %v119 = vrot.slane %v114, %v118
  %v120 = vlaneseq
  %v121 = vshrl.u32 %v120, 7
  %v122 = vsub.s32 1, %v121
  %v123 = vrot.slane %v114, %v122
  %v124 = vlaneseq
  %v125 = vshrl.u32 %v124, 7
  %v126 = vsub.s32 2, %v125
  %v127 = vrot.slane %v114, %v126
  %v131 = vmul.f32 %v119, %v16
  %v132 = vmul.f32 %v123, %v17
  %v133 = vmul.f32 %v127, %v18
  %v134 = vmul.f32 %v119, %v19
  %v135 = vmul.f32 %v123, %v20
  %v136 = vmul.f32 %v127, %v21
  %v137 = vmul.f32 %v119, %v22
  %v138 = vmul.f32 %v123, %v23
  %v139 = vmul.f32 %v127, %v24
  %v140 = vadd.f32 %v131, %v51
  %v141 = vadd.f32 %v132, %v51
  %v142 = vadd.f32 %v133, %v51
  %v143 = vadd.f32 %v134, %v51
  %v144 = vadd.f32 %v135, %v51
  %v145 = vadd.f32 %v136, %v51
  %v146 = vadd.f32 %v137, %v51
  %v147 = vadd.f32 %v138, %v51
  %v148 = vadd.f32 %v139, %v51
  %149 = vst [vmem:[%s3 + $0x30] sm:$0xff] %v140
  %150 = vst [vmem:[%s3 + $0x38] sm:$0xff] %v141
  %151 = vst [vmem:[%s3 + $0x40] sm:$0xff] %v142
  %152 = vst [vmem:[%s3 + $0x4b0] sm:$0xff] %v143
  %153 = vst [vmem:[%s3 + $0x4b8] sm:$0xff] %v144
  %154 = vst [vmem:[%s3 + $0x4c0] sm:$0xff] %v145
  %155 = vst [vmem:[%s3 + $0x930] sm:$0x3] %v146
  %156 = vst [vmem:[%s3 + $0x938] sm:$0x3] %v147
  %157 = vst [vmem:[%s3 + $0x940] sm:$0x3] %v148
  %v158 = vld [vmem:[%s1 + $0x9] sm:$0x7]
  %v160 = vlaneseq
  %v161 = vshrl.u32 %v160, 7
  %v162 = vsub.s32 0, %v161
  %v163 = vrot.slane %v158, %v162
  %v164 = vlaneseq
  %v165 = vshrl.u32 %v164, 7
  %v166 = vsub.s32 1, %v165
  %v167 = vrot.slane %v158, %v166
  %v168 = vlaneseq
  %v169 = vshrl.u32 %v168, 7
  %v170 = vsub.s32 2, %v169
  %v171 = vrot.slane %v158, %v170
  %v175 = vmul.f32 %v163, %v16
  %v176 = vmul.f32 %v167, %v17
  %v177 = vmul.f32 %v171, %v18
  %v178 = vmul.f32 %v163, %v19
  %v179 = vmul.f32 %v167, %v20
  %v180 = vmul.f32 %v171, %v21
  %v181 = vmul.f32 %v163, %v22
  %v182 = vmul.f32 %v167, %v23
  %v183 = vmul.f32 %v171, %v24
  %v184 = vadd.f32 %v175, %v51
  %v185 = vadd.f32 %v176, %v51
  %v186 = vadd.f32 %v177, %v51
  %v187 = vadd.f32 %v178, %v51
  %v188 = vadd.f32 %v179, %v51
  %v189 = vadd.f32 %v180, %v51
  %v190 = vadd.f32 %v181, %v51
  %v191 = vadd.f32 %v182, %v51
  %v192 = vadd.f32 %v183, %v51
  %193 = vst [vmem:[%s3 + $0x48] sm:$0xff] %v184
  %194 = vst [vmem:[%s3 + $0x50] sm:$0xff] %v185
  %195 = vst [vmem:[%s3 + $0x58] sm:$0xff] %v186
  %196 = vst [vmem:[%s3 + $0x4c8] sm:$0xff] %v187
  %197 = vst [vmem:[%s3 + $0x4d0] sm:$0xff] %v188
  %198 = vst [vmem:[%s3 + $0x4d8] sm:$0xff] %v189
  %199 = vst [vmem:[%s3 + $0x948] sm:$0x3] %v190
  %200 = vst [vmem:[%s3 + $0x950] sm:$0x3] %v191
  %201 = vst [vmem:[%s3 + $0x958] sm:$0x3] %v192
  %v202 = vld [vmem:[%s1 + $0xc] sm:$0x7]
  %v204 = vlaneseq
  %v205 = vshrl.u32 %v204, 7
  %v206 = vsub.s32 0, %v205
  %v207 = vrot.slane %v202, %v206
  %v208 = vlaneseq
  %v209 = vshrl.u32 %v208, 7
  %v210 = vsub.s32 1, %v209
  %v211 = vrot.slane %v202, %v210
  %v212 = vlaneseq
  %v213 = vshrl.u32 %v212, 7
  %v214 = vsub.s32 2, %v213
  %v215 = vrot.slane %v202, %v214
  %v219 = vmul.f32 %v207, %v16
  %v220 = vmul.f32 %v211, %v17
  %v221 = vmul.f32 %v215, %v18
  %v222 = vmul.f32 %v207, %v19
  %v223 = vmul.f32 %v211, %v20
  %v224 = vmul.f32 %v215, %v21
  %v225 = vmul.f32 %v207, %v22
  %v226 = vmul.f32 %v211, %v23
  %v227 = vmul.f32 %v215, %v24
  %v228 = vadd.f32 %v219, %v51
  %v229 = vadd.f32 %v220, %v51
  %v230 = vadd.f32 %v221, %v51
  %v231 = vadd.f32 %v222, %v51
  %v232 = vadd.f32 %v223, %v51
  %v233 = vadd.f32 %v224, %v51
  %v234 = vadd.f32 %v225, %v51
  %v235 = vadd.f32 %v226, %v51
  %v236 = vadd.f32 %v227, %v51
  %237 = vst [vmem:[%s3 + $0x60] sm:$0xff] %v228
  %238 = vst [vmem:[%s3 + $0x68] sm:$0xff] %v229
  %239 = vst [vmem:[%s3 + $0x70] sm:$0xff] %v230
  %240 = vst [vmem:[%s3 + $0x4e0] sm:$0xff] %v231
  %241 = vst [vmem:[%s3 + $0x4e8] sm:$0xff] %v232
  %242 = vst [vmem:[%s3 + $0x4f0] sm:$0xff] %v233
  %243 = vst [vmem:[%s3 + $0x960] sm:$0x3] %v234
  %244 = vst [vmem:[%s3 + $0x968] sm:$0x3] %v235
  %245 = vst [vmem:[%s3 + $0x970] sm:$0x3] %v236
  %v246 = vld [vmem:[%s1 + $0xf] sm:$0x7]
  %v248 = vlaneseq
  %v249 = vshrl.u32 %v248, 7
  %v250 = vsub.s32 0, %v249
  %v251 = vrot.slane %v246, %v250
  %v252 = vlaneseq
  %v253 = vshrl.u32 %v252, 7
  %v254 = vsub.s32 1, %v253
  %v255 = vrot.slane %v246, %v254
  %v256 = vlaneseq
  %v257 = vshrl.u32 %v256, 7
  %v258 = vsub.s32 2, %v257
  %v259 = vrot.slane %v246, %v258
  %v263 = vmul.f32 %v251, %v16
  %v264 = vmul.f32 %v255, %v17
  %v265 = vmul.f32 %v259, %v18
  %v266 = vmul.f32 %v251, %v19
  %v267 = vmul.f32 %v255, %v20
  %v268 = vmul.f32 %v259, %v21
  %v269 = vmul.f32 %v251, %v22
  %v270 = vmul.f32 %v255, %v23
  %v271 = vmul.f32 %v259, %v24
  %v272 = vadd.f32 %v263, %v51
  %v273 = vadd.f32 %v264, %v51
  %v274 = vadd.f32 %v265, %v51
  %v275 = vadd.f32 %v266, %v51
  %v276 = vadd.f32 %v267, %v51
  %v277 = vadd.f32 %v268, %v51
  %v278 = vadd.f32 %v269, %v51
  %v279 = vadd.f32 %v270, %v51
  %v280 = vadd.f32 %v271, %v51
  %281 = vst [vmem:[%s3 + $0x78] sm:$0xff] %v272
  %282 = vst [vmem:[%s3 + $0x80] sm:$0xff] %v273
  %283 = vst [vmem:[%s3 + $0x88] sm:$0xff] %v274
  %284 = vst [vmem:[%s3 + $0x4f8] sm:$0xff] %v275
  %285 = vst [vmem:[%s3 + $0x500] sm:$0xff] %v276
  %286 = vst [vmem:[%s3 + $0x508] sm:$0xff] %v277
  %287 = vst [vmem:[%s3 + $0x978] sm:$0x3] %v278
  %288 = vst [vmem:[%s3 + $0x980] sm:$0x3] %v279
  %289 = vst [vmem:[%s3 + $0x988] sm:$0x3] %v280
  %v290 = vld [vmem:[%s1 + $0x12] sm:$0x7]
  %v292 = vlaneseq
  %v293 = vshrl.u32 %v292, 7
  %v294 = vsub.s32 0, %v293
  %v295 = vrot.slane %v290, %v294
  %v296 = vlaneseq
  %v297 = vshrl.u32 %v296, 7
  %v298 = vsub.s32 1, %v297
  %v299 = vrot.slane %v290, %v298
  %v300 = vlaneseq
  %v301 = vshrl.u32 %v300, 7
  %v302 = vsub.s32 2, %v301
  %v303 = vrot.slane %v290, %v302
  %v307 = vmul.f32 %v295, %v16
  %v308 = vmul.f32 %v299, %v17
  %v309 = vmul.f32 %v303, %v18
  %v310 = vmul.f32 %v295, %v19
  %v311 = vmul.f32 %v299, %v20
  %v312 = vmul.f32 %v303, %v21
  %v313 = vmul.f32 %v295, %v22
  %v314 = vmul.f32 %v299, %v23
  %v315 = vmul.f32 %v303, %v24
  %v316 = vadd.f32 %v307, %v51
  %v317 = vadd.f32 %v308, %v51
  %v318 = vadd.f32 %v309, %v51
  %v319 = vadd.f32 %v310, %v51
  %v320 = vadd.f32 %v311, %v51
  %v321 = vadd.f32 %v312, %v51
  %v322 = vadd.f32 %v313, %v51
  %v323 = vadd.f32 %v314, %v51
  %v324 = vadd.f32 %v315, %v51
  %325 = vst [vmem:[%s3 + $0x90] sm:$0xff] %v316
  %326 = vst [vmem:[%s3 + $0x98] sm:$0xff] %v317
  %327 = vst [vmem:[%s3 + $0xa0] sm:$0xff] %v318
  %328 = vst [vmem:[%s3 + $0x510] sm:$0xff] %v319
  %329 = vst [vmem:[%s3 + $0x518] sm:$0xff] %v320
  %330 = vst [vmem:[%s3 + $0x520] sm:$0xff] %v321
  %331 = vst [vmem:[%s3 + $0x990] sm:$0x3] %v322
  %332 = vst [vmem:[%s3 + $0x998] sm:$0x3] %v323
  %333 = vst [vmem:[%s3 + $0x9a0] sm:$0x3] %v324
  %v334 = vld [vmem:[%s1 + $0x15] sm:$0x7]
  %v336 = vlaneseq
  %v337 = vshrl.u32 %v336, 7
  %v338 = vsub.s32 0, %v337
  %v339 = vrot.slane %v334, %v338
  %v340 = vlaneseq
  %v341 = vshrl.u32 %v340, 7
  %v342 = vsub.s32 1, %v341
  %v343 = vrot.slane %v334, %v342
  %v344 = vlaneseq
  %v345 = vshrl.u32 %v344, 7
  %v346 = vsub.s32 2, %v345
  %v347 = vrot.slane %v334, %v346
  %v351 = vmul.f32 %v339, %v16
  %v352 = vmul.f32 %v343, %v17
  %v353 = vmul.f32 %v347, %v18
  %v354 = vmul.f32 %v339, %v19
  %v355 = vmul.f32 %v343, %v20
  %v356 = vmul.f32 %v347, %v21
  %v357 = vmul.f32 %v339, %v22
  %v358 = vmul.f32 %v343, %v23
  %v359 = vmul.f32 %v347, %v24
  %v360 = vadd.f32 %v351, %v51
  %v361 = vadd.f32 %v352, %v51
  %v362 = vadd.f32 %v353, %v51
  %v363 = vadd.f32 %v354, %v51
  %v364 = vadd.f32 %v355, %v51
  %v365 = vadd.f32 %v356, %v51
  %v366 = vadd.f32 %v357, %v51
  %v367 = vadd.f32 %v358, %v51
  %v368 = vadd.f32 %v359, %v51
  %369 = vst [vmem:[%s3 + $0xa8] sm:$0xff] %v360
  %370 = vst [vmem:[%s3 + $0xb0] sm:$0xff] %v361
  %371 = vst [vmem:[%s3 + $0xb8] sm:$0xff] %v362
  %372 = vst [vmem:[%s3 + $0x528] sm:$0xff] %v363
  %373 = vst [vmem:[%s3 + $0x530] sm:$0xff] %v364
  %374 = vst [vmem:[%s3 + $0x538] sm:$0xff] %v365
  %375 = vst [vmem:[%s3 + $0x9a8] sm:$0x3] %v366
  %376 = vst [vmem:[%s3 + $0x9b0] sm:$0x3] %v367
  %377 = vst [vmem:[%s3 + $0x9b8] sm:$0x3] %v368
  %v378 = vld [vmem:[%s1 + $0x18] sm:$0x7]
  %v380 = vlaneseq
  %v381 = vshrl.u32 %v380, 7
  %v382 = vsub.s32 0, %v381
  %v383 = vrot.slane %v378, %v382
  %v384 = vlaneseq
  %v385 = vshrl.u32 %v384, 7
  %v386 = vsub.s32 1, %v385
  %v387 = vrot.slane %v378, %v386
  %v388 = vlaneseq
  %v389 = vshrl.u32 %v388, 7
  %v390 = vsub.s32 2, %v389
  %v391 = vrot.slane %v378, %v390
  %v395 = vmul.f32 %v383, %v16
  %v396 = vmul.f32 %v387, %v17
  %v397 = vmul.f32 %v391, %v18
  %v398 = vmul.f32 %v383, %v19
  %v399 = vmul.f32 %v387, %v20
  %v400 = vmul.f32 %v391, %v21
  %v401 = vmul.f32 %v383, %v22
  %v402 = vmul.f32 %v387, %v23
  %v403 = vmul.f32 %v391, %v24
  %v404 = vadd.f32 %v395, %v51
  %v405 = vadd.f32 %v396, %v51
  %v406 = vadd.f32 %v397, %v51
  %v407 = vadd.f32 %v398, %v51
  %v408 = vadd.f32 %v399, %v51
  %v409 = vadd.f32 %v400, %v51
  %v410 = vadd.f32 %v401, %v51
  %v411 = vadd.f32 %v402, %v51
  %v412 = vadd.f32 %v403, %v51
  %413 = vst [vmem:[%s3 + $0xc0] sm:$0xff] %v404
  %414 = vst [vmem:[%s3 + $0xc8] sm:$0xff] %v405
  %415 = vst [vmem:[%s3 + $0xd0] sm:$0xff] %v406
  %416 = vst [vmem:[%s3 + $0x540] sm:$0xff] %v407
  %417 = vst [vmem:[%s3 + $0x548] sm:$0xff] %v408
  %418 = vst [vmem:[%s3 + $0x550] sm:$0xff] %v409
  %419 = vst [vmem:[%s3 + $0x9c0] sm:$0x3] %v410
  %420 = vst [vmem:[%s3 + $0x9c8] sm:$0x3] %v411
  %421 = vst [vmem:[%s3 + $0x9d0] sm:$0x3] %v412
  %v422 = vld [vmem:[%s1 + $0x1b] sm:$0x7]
  %v424 = vlaneseq
  %v425 = vshrl.u32 %v424, 7
  %v426 = vsub.s32 0, %v425
  %v427 = vrot.slane %v422, %v426
  %v428 = vlaneseq
  %v429 = vshrl.u32 %v428, 7
  %v430 = vsub.s32 1, %v429
  %v431 = vrot.slane %v422, %v430
  %v432 = vlaneseq
  %v433 = vshrl.u32 %v432, 7
  %v434 = vsub.s32 2, %v433
  %v435 = vrot.slane %v422, %v434
  %v439 = vmul.f32 %v427, %v16
  %v440 = vmul.f32 %v431, %v17
  %v441 = vmul.f32 %v435, %v18
  %v442 = vmul.f32 %v427, %v19
  %v443 = vmul.f32 %v431, %v20
  %v444 = vmul.f32 %v435, %v21
  %v445 = vmul.f32 %v427, %v22
  %v446 = vmul.f32 %v431, %v23
  %v447 = vmul.f32 %v435, %v24
  %v448 = vadd.f32 %v439, %v51
  %v449 = vadd.f32 %v440, %v51
  %v450 = vadd.f32 %v441, %v51
  %v451 = vadd.f32 %v442, %v51
  %v452 = vadd.f32 %v443, %v51
  %v453 = vadd.f32 %v444, %v51
  %v454 = vadd.f32 %v445, %v51
  %v455 = vadd.f32 %v446, %v51
  %v456 = vadd.f32 %v447, %v51
  %457 = vst [vmem:[%s3 + $0xd8] sm:$0xff] %v448
  %458 = vst [vmem:[%s3 + $0xe0] sm:$0xff] %v449
  %459 = vst [vmem:[%s3 + $0xe8] sm:$0xff] %v450
  %460 = vst [vmem:[%s3 + $0x558] sm:$0xff] %v451
  %461 = vst [vmem:[%s3 + $0x560] sm:$0xff] %v452
  %462 = vst [vmem:[%s3 + $0x568] sm:$0xff] %v453
  %463 = vst [vmem:[%s3 + $0x9d8] sm:$0x3] %v454
  %464 = vst [vmem:[%s3 + $0x9e0] sm:$0x3] %v455
  %465 = vst [vmem:[%s3 + $0x9e8] sm:$0x3] %v456
  %v466 = vld [vmem:[%s1 + $0x1e] sm:$0x7]
  %v468 = vlaneseq
  %v469 = vshrl.u32 %v468, 7
  %v470 = vsub.s32 0, %v469
  %v471 = vrot.slane %v466, %v470
  %v472 = vlaneseq
  %v473 = vshrl.u32 %v472, 7
  %v474 = vsub.s32 1, %v473
  %v475 = vrot.slane %v466, %v474
  %v476 = vlaneseq
  %v477 = vshrl.u32 %v476, 7
  %v478 = vsub.s32 2, %v477
  %v479 = vrot.slane %v466, %v478
  %v483 = vmul.f32 %v471, %v16
  %v484 = vmul.f32 %v475, %v17
  %v485 = vmul.f32 %v479, %v18
  %v486 = vmul.f32 %v471, %v19
  %v487 = vmul.f32 %v475, %v20
  %v488 = vmul.f32 %v479, %v21
  %v489 = vmul.f32 %v471, %v22
  %v490 = vmul.f32 %v475, %v23
  %v491 = vmul.f32 %v479, %v24
  %v492 = vadd.f32 %v483, %v51
  %v493 = vadd.f32 %v484, %v51
  %v494 = vadd.f32 %v485, %v51
  %v495 = vadd.f32 %v486, %v51
  %v496 = vadd.f32 %v487, %v51
  %v497 = vadd.f32 %v488, %v51
  %v498 = vadd.f32 %v489, %v51
  %v499 = vadd.f32 %v490, %v51
  %v500 = vadd.f32 %v491, %v51
  %501 = vst [vmem:[%s3 + $0xf0] sm:$0xff] %v492
  %502 = vst [vmem:[%s3 + $0xf8] sm:$0xff] %v493
  %503 = vst [vmem:[%s3 + $0x100] sm:$0xff] %v494
  %504 = vst [vmem:[%s3 + $0x570] sm:$0xff] %v495
  %505 = vst [vmem:[%s3 + $0x578] sm:$0xff] %v496
  %506 = vst [vmem:[%s3 + $0x580] sm:$0xff] %v497
  %507 = vst [vmem:[%s3 + $0x9f0] sm:$0x3] %v498
  %508 = vst [vmem:[%s3 + $0x9f8] sm:$0x3] %v499
  %509 = vst [vmem:[%s3 + $0xa00] sm:$0x3] %v500
  %v510 = vld [vmem:[%s1 + $0x21] sm:$0x7]
  %v512 = vlaneseq
  %v513 = vshrl.u32 %v512, 7
  %v514 = vsub.s32 0, %v513
  %v515 = vrot.slane %v510, %v514
  %v516 = vlaneseq
  %v517 = vshrl.u32 %v516, 7
  %v518 = vsub.s32 1, %v517
  %v519 = vrot.slane %v510, %v518
  %v520 = vlaneseq
  %v521 = vshrl.u32 %v520, 7
  %v522 = vsub.s32 2, %v521
  %v523 = vrot.slane %v510, %v522
  %v527 = vmul.f32 %v515, %v16
  %v528 = vmul.f32 %v519, %v17
  %v529 = vmul.f32 %v523, %v18
  %v530 = vmul.f32 %v515, %v19
  %v531 = vmul.f32 %v519, %v20
  %v532 = vmul.f32 %v523, %v21
  %v533 = vmul.f32 %v515, %v22
  %v534 = vmul.f32 %v519, %v23
  %v535 = vmul.f32 %v523, %v24
  %v536 = vadd.f32 %v527, %v51
  %v537 = vadd.f32 %v528, %v51
  %v538 = vadd.f32 %v529, %v51
  %v539 = vadd.f32 %v530, %v51
  %v540 = vadd.f32 %v531, %v51
  %v541 = vadd.f32 %v532, %v51
  %v542 = vadd.f32 %v533, %v51
  %v543 = vadd.f32 %v534, %v51
  %v544 = vadd.f32 %v535, %v51
  %545 = vst [vmem:[%s3 + $0x108] sm:$0xff] %v536
  %546 = vst [vmem:[%s3 + $0x110] sm:$0xff] %v537
  %547 = vst [vmem:[%s3 + $0x118] sm:$0xff] %v538
  %548 = vst [vmem:[%s3 + $0x588] sm:$0xff] %v539
  %549 = vst [vmem:[%s3 + $0x590] sm:$0xff] %v540
  %550 = vst [vmem:[%s3 + $0x598] sm:$0xff] %v541
  %551 = vst [vmem:[%s3 + $0xa08] sm:$0x3] %v542
  %552 = vst [vmem:[%s3 + $0xa10] sm:$0x3] %v543
  %553 = vst [vmem:[%s3 + $0xa18] sm:$0x3] %v544
  %v554 = vld [vmem:[%s1 + $0x24] sm:$0x7]
  %v556 = vlaneseq
  %v557 = vshrl.u32 %v556, 7
  %v558 = vsub.s32 0, %v557
  %v559 = vrot.slane %v554, %v558
  %v560 = vlaneseq
  %v561 = vshrl.u32 %v560, 7
  %v562 = vsub.s32 1, %v561
  %v563 = vrot.slane %v554, %v562
  %v564 = vlaneseq
  %v565 = vshrl.u32 %v564, 7
  %v566 = vsub.s32 2, %v565
  %v567 = vrot.slane %v554, %v566
  %v571 = vmul.f32 %v559, %v16
  %v572 = vmul.f32 %v563, %v17
  %v573 = vmul.f32 %v567, %v18
  %v574 = vmul.f32 %v559, %v19
  %v575 = vmul.f32 %v563, %v20
  %v576 = vmul.f32 %v567, %v21
  %v577 = vmul.f32 %v559, %v22
  %v578 = vmul.f32 %v563, %v23
  %v579 = vmul.f32 %v567, %v24
  %v580 = vadd.f32 %v571, %v51
  %v581 = vadd.f32 %v572, %v51
  %v582 = vadd.f32 %v573, %v51
  %v583 = vadd.f32 %v574, %v51
  %v584 = vadd.f32 %v575, %v51
  %v585 = vadd.f32 %v576, %v51
  %v586 = vadd.f32 %v577, %v51
  %v587 = vadd.f32 %v578, %v51
  %v588 = vadd.f32 %v579, %v51
  %589 = vst [vmem:[%s3 + $0x120] sm:$0xff] %v580
  %590 = vst [vmem:[%s3 + $0x128] sm:$0xff] %v581
  %591 = vst [vmem:[%s3 + $0x130] sm:$0xff] %v582
  %592 = vst [vmem:[%s3 + $0x5a0] sm:$0xff] %v583
  %593 = vst [vmem:[%s3 + $0x5a8] sm:$0xff] %v584
  %594 = vst [vmem:[%s3 + $0x5b0] sm:$0xff] %v585
  %595 = vst [vmem:[%s3 + $0xa20] sm:$0x3] %v586
  %596 = vst [vmem:[%s3 + $0xa28] sm:$0x3] %v587
  %597 = vst [vmem:[%s3 + $0xa30] sm:$0x3] %v588
  %v598 = vld [vmem:[%s1 + $0x27] sm:$0x7]
  %v600 = vlaneseq
  %v601 = vshrl.u32 %v600, 7
  %v602 = vsub.s32 0, %v601
  %v603 = vrot.slane %v598, %v602
  %v604 = vlaneseq
  %v605 = vshrl.u32 %v604, 7
  %v606 = vsub.s32 1, %v605
  %v607 = vrot.slane %v598, %v606
  %v608 = vlaneseq
  %v609 = vshrl.u32 %v608, 7
  %v610 = vsub.s32 2, %v609
  %v611 = vrot.slane %v598, %v610
  %v615 = vmul.f32 %v603, %v16
  %v616 = vmul.f32 %v607, %v17
  %v617 = vmul.f32 %v611, %v18
  %v618 = vmul.f32 %v603, %v19
  %v619 = vmul.f32 %v607, %v20
  %v620 = vmul.f32 %v611, %v21
  %v621 = vmul.f32 %v603, %v22
  %v622 = vmul.f32 %v607, %v23
  %v623 = vmul.f32 %v611, %v24
  %v624 = vadd.f32 %v615, %v51
  %v625 = vadd.f32 %v616, %v51
  %v626 = vadd.f32 %v617, %v51
  %v627 = vadd.f32 %v618, %v51
  %v628 = vadd.f32 %v619, %v51
  %v629 = vadd.f32 %v620, %v51
  %v630 = vadd.f32 %v621, %v51
  %v631 = vadd.f32 %v622, %v51
  %v632 = vadd.f32 %v623, %v51
  %633 = vst [vmem:[%s3 + $0x138] sm:$0xff] %v624
  %634 = vst [vmem:[%s3 + $0x140] sm:$0xff] %v625
  %635 = vst [vmem:[%s3 + $0x148] sm:$0xff] %v626
  %636 = vst [vmem:[%s3 + $0x5b8] sm:$0xff] %v627
  %637 = vst [vmem:[%s3 + $0x5c0] sm:$0xff] %v628
  %638 = vst [vmem:[%s3 + $0x5c8] sm:$0xff] %v629
  %639 = vst [vmem:[%s3 + $0xa38] sm:$0x3] %v630
  %640 = vst [vmem:[%s3 + $0xa40] sm:$0x3] %v631
  %641 = vst [vmem:[%s3 + $0xa48] sm:$0x3] %v632
  %v642 = vld [vmem:[%s1 + $0x2a] sm:$0x7]
  %v644 = vlaneseq
  %v645 = vshrl.u32 %v644, 7
  %v646 = vsub.s32 0, %v645
  %v647 = vrot.slane %v642, %v646
  %v648 = vlaneseq
  %v649 = vshrl.u32 %v648, 7
  %v650 = vsub.s32 1, %v649
  %v651 = vrot.slane %v642, %v650
  %v652 = vlaneseq
  %v653 = vshrl.u32 %v652, 7
  %v654 = vsub.s32 2, %v653
  %v655 = vrot.slane %v642, %v654
  %v659 = vmul.f32 %v647, %v16
  %v660 = vmul.f32 %v651, %v17
  %v661 = vmul.f32 %v655, %v18
  %v662 = vmul.f32 %v647, %v19
  %v663 = vmul.f32 %v651, %v20
  %v664 = vmul.f32 %v655, %v21
  %v665 = vmul.f32 %v647, %v22
  %v666 = vmul.f32 %v651, %v23
  %v667 = vmul.f32 %v655, %v24
  %v668 = vadd.f32 %v659, %v51
  %v669 = vadd.f32 %v660, %v51
  %v670 = vadd.f32 %v661, %v51
  %v671 = vadd.f32 %v662, %v51
  %v672 = vadd.f32 %v663, %v51
  %v673 = vadd.f32 %v664, %v51
  %v674 = vadd.f32 %v665, %v51
  %v675 = vadd.f32 %v666, %v51
  %v676 = vadd.f32 %v667, %v51
  %677 = vst [vmem:[%s3 + $0x150] sm:$0xff] %v668
  %678 = vst [vmem:[%s3 + $0x158] sm:$0xff] %v669
  %679 = vst [vmem:[%s3 + $0x160] sm:$0xff] %v670
  %680 = vst [vmem:[%s3 + $0x5d0] sm:$0xff] %v671
  %681 = vst [vmem:[%s3 + $0x5d8] sm:$0xff] %v672
  %682 = vst [vmem:[%s3 + $0x5e0] sm:$0xff] %v673
  %683 = vst [vmem:[%s3 + $0xa50] sm:$0x3] %v674
  %684 = vst [vmem:[%s3 + $0xa58] sm:$0x3] %v675
  %685 = vst [vmem:[%s3 + $0xa60] sm:$0x3] %v676
  %v686 = vld [vmem:[%s1 + $0x2d] sm:$0x7]
  %v688 = vlaneseq
  %v689 = vshrl.u32 %v688, 7
  %v690 = vsub.s32 0, %v689
  %v691 = vrot.slane %v686, %v690
  %v692 = vlaneseq
  %v693 = vshrl.u32 %v692, 7
  %v694 = vsub.s32 1, %v693
  %v695 = vrot.slane %v686, %v694
  %v696 = vlaneseq
  %v697 = vshrl.u32 %v696, 7
  %v698 = vsub.s32 2, %v697
  %v699 = vrot.slane %v686, %v698
  %v703 = vmul.f32 %v691, %v16
  %v704 = vmul.f32 %v695, %v17
  %v705 = vmul.f32 %v699, %v18
  %v706 = vmul.f32 %v691, %v19
  %v707 = vmul.f32 %v695, %v20
  %v708 = vmul.f32 %v699, %v21
  %v709 = vmul.f32 %v691, %v22
  %v710 = vmul.f32 %v695, %v23
  %v711 = vmul.f32 %v699, %v24
  %v712 = vadd.f32 %v703, %v51
  %v713 = vadd.f32 %v704, %v51
  %v714 = vadd.f32 %v705, %v51
  %v715 = vadd.f32 %v706, %v51
  %v716 = vadd.f32 %v707, %v51
  %v717 = vadd.f32 %v708, %v51
  %v718 = vadd.f32 %v709, %v51
  %v719 = vadd.f32 %v710, %v51
  %v720 = vadd.f32 %v711, %v51
  %721 = vst [vmem:[%s3 + $0x168] sm:$0xff] %v712
  %722 = vst [vmem:[%s3 + $0x170] sm:$0xff] %v713
  %723 = vst [vmem:[%s3 + $0x178] sm:$0xff] %v714
  %724 = vst [vmem:[%s3 + $0x5e8] sm:$0xff] %v715
  %725 = vst [vmem:[%s3 + $0x5f0] sm:$0xff] %v716
  %726 = vst [vmem:[%s3 + $0x5f8] sm:$0xff] %v717
  %727 = vst [vmem:[%s3 + $0xa68] sm:$0x3] %v718
  %728 = vst [vmem:[%s3 + $0xa70] sm:$0x3] %v719
  %729 = vst [vmem:[%s3 + $0xa78] sm:$0x3] %v720
  %v730 = vld [vmem:[%s1 + $0x30] sm:$0x7]
  %v732 = vlaneseq
  %v733 = vshrl.u32 %v732, 7
  %v734 = vsub.s32 0, %v733
  %v735 = vrot.slane %v730, %v734
  %v736 = vlaneseq
  %v737 = vshrl.u32 %v736, 7
  %v738 = vsub.s32 1, %v737
  %v739 = vrot.slane %v730, %v738
  %v740 = vlaneseq
  %v741 = vshrl.u32 %v740, 7
  %v742 = vsub.s32 2, %v741
  %v743 = vrot.slane %v730, %v742
  %v747 = vmul.f32 %v735, %v16
  %v748 = vmul.f32 %v739, %v17
  %v749 = vmul.f32 %v743, %v18
  %v750 = vmul.f32 %v735, %v19
  %v751 = vmul.f32 %v739, %v20
  %v752 = vmul.f32 %v743, %v21
  %v753 = vmul.f32 %v735, %v22
  %v754 = vmul.f32 %v739, %v23
  %v755 = vmul.f32 %v743, %v24
  %v756 = vadd.f32 %v747, %v51
  %v757 = vadd.f32 %v748, %v51
  %v758 = vadd.f32 %v749, %v51
  %v759 = vadd.f32 %v750, %v51
  %v760 = vadd.f32 %v751, %v51
  %v761 = vadd.f32 %v752, %v51
  %v762 = vadd.f32 %v753, %v51
  %v763 = vadd.f32 %v754, %v51
  %v764 = vadd.f32 %v755, %v51
  %765 = vst [vmem:[%s3 + $0x180] sm:$0xff] %v756
  %766 = vst [vmem:[%s3 + $0x188] sm:$0xff] %v757
  %767 = vst [vmem:[%s3 + $0x190] sm:$0xff] %v758
  %768 = vst [vmem:[%s3 + $0x600] sm:$0xff] %v759
  %769 = vst [vmem:[%s3 + $0x608] sm:$0xff] %v760
  %770 = vst [vmem:[%s3 + $0x610] sm:$0xff] %v761
  %771 = vst [vmem:[%s3 + $0xa80] sm:$0x3] %v762
  %772 = vst [vmem:[%s3 + $0xa88] sm:$0x3] %v763
  %773 = vst [vmem:[%s3 + $0xa90] sm:$0x3] %v764
  %v774 = vld [vmem:[%s1 + $0x33] sm:$0x7]
  %v776 = vlaneseq
  %v777 = vshrl.u32 %v776, 7
  %v778 = vsub.s32 0, %v777
  %v779 = vrot.slane %v774, %v778
  %v780 = vlaneseq
  %v781 = vshrl.u32 %v780, 7
  %v782 = vsub.s32 1, %v781
  %v783 = vrot.slane %v774, %v782
  %v784 = vlaneseq
  %v785 = vshrl.u32 %v784, 7
  %v786 = vsub.s32 2, %v785
  %v787 = vrot.slane %v774, %v786
  %v791 = vmul.f32 %v779, %v16
  %v792 = vmul.f32 %v783, %v17
  %v793 = vmul.f32 %v787, %v18
  %v794 = vmul.f32 %v779, %v19
  %v795 = vmul.f32 %v783, %v20
  %v796 = vmul.f32 %v787, %v21
  %v797 = vmul.f32 %v779, %v22
  %v798 = vmul.f32 %v783, %v23
  %v799 = vmul.f32 %v787, %v24
  %v800 = vadd.f32 %v791, %v51
  %v801 = vadd.f32 %v792, %v51
  %v802 = vadd.f32 %v793, %v51
  %v803 = vadd.f32 %v794, %v51
  %v804 = vadd.f32 %v795, %v51
  %v805 = vadd.f32 %v796, %v51
  %v806 = vadd.f32 %v797, %v51
  %v807 = vadd.f32 %v798, %v51
  %v808 = vadd.f32 %v799, %v51
  %809 = vst [vmem:[%s3 + $0x198] sm:$0xff] %v800
  %810 = vst [vmem:[%s3 + $0x1a0] sm:$0xff] %v801
  %811 = vst [vmem:[%s3 + $0x1a8] sm:$0xff] %v802
  %812 = vst [vmem:[%s3 + $0x618] sm:$0xff] %v803
  %813 = vst [vmem:[%s3 + $0x620] sm:$0xff] %v804
  %814 = vst [vmem:[%s3 + $0x628] sm:$0xff] %v805
  %815 = vst [vmem:[%s3 + $0xa98] sm:$0x3] %v806
  %816 = vst [vmem:[%s3 + $0xaa0] sm:$0x3] %v807
  %817 = vst [vmem:[%s3 + $0xaa8] sm:$0x3] %v808
  %v818 = vld [vmem:[%s1 + $0x36] sm:$0x7]
  %v820 = vlaneseq
  %v821 = vshrl.u32 %v820, 7
  %v822 = vsub.s32 0, %v821
  %v823 = vrot.slane %v818, %v822
  %v824 = vlaneseq
  %v825 = vshrl.u32 %v824, 7
  %v826 = vsub.s32 1, %v825
  %v827 = vrot.slane %v818, %v826
  %v828 = vlaneseq
  %v829 = vshrl.u32 %v828, 7
  %v830 = vsub.s32 2, %v829
  %v831 = vrot.slane %v818, %v830
  %v835 = vmul.f32 %v823, %v16
  %v836 = vmul.f32 %v827, %v17
  %v837 = vmul.f32 %v831, %v18
  %v838 = vmul.f32 %v823, %v19
  %v839 = vmul.f32 %v827, %v20
  %v840 = vmul.f32 %v831, %v21
  %v841 = vmul.f32 %v823, %v22
  %v842 = vmul.f32 %v827, %v23
  %v843 = vmul.f32 %v831, %v24
  %v844 = vadd.f32 %v835, %v51
  %v845 = vadd.f32 %v836, %v51
  %v846 = vadd.f32 %v837, %v51
  %v847 = vadd.f32 %v838, %v51
  %v848 = vadd.f32 %v839, %v51
  %v849 = vadd.f32 %v840, %v51
  %v850 = vadd.f32 %v841, %v51
  %v851 = vadd.f32 %v842, %v51
  %v852 = vadd.f32 %v843, %v51
  %853 = vst [vmem:[%s3 + $0x1b0] sm:$0xff] %v844
  %854 = vst [vmem:[%s3 + $0x1b8] sm:$0xff] %v845
  %855 = vst [vmem:[%s3 + $0x1c0] sm:$0xff] %v846
  %856 = vst [vmem:[%s3 + $0x630] sm:$0xff] %v847
  %857 = vst [vmem:[%s3 + $0x638] sm:$0xff] %v848
  %858 = vst [vmem:[%s3 + $0x640] sm:$0xff] %v849
  %859 = vst [vmem:[%s3 + $0xab0] sm:$0x3] %v850
  %860 = vst [vmem:[%s3 + $0xab8] sm:$0x3] %v851
  %861 = vst [vmem:[%s3 + $0xac0] sm:$0x3] %v852
  %v862 = vld [vmem:[%s1 + $0x39] sm:$0x7]
  %v864 = vlaneseq
  %v865 = vshrl.u32 %v864, 7
  %v866 = vsub.s32 0, %v865
  %v867 = vrot.slane %v862, %v866
  %v868 = vlaneseq
  %v869 = vshrl.u32 %v868, 7
  %v870 = vsub.s32 1, %v869
  %v871 = vrot.slane %v862, %v870
  %v872 = vlaneseq
  %v873 = vshrl.u32 %v872, 7
  %v874 = vsub.s32 2, %v873
  %v875 = vrot.slane %v862, %v874
  %v879 = vmul.f32 %v867, %v16
  %v880 = vmul.f32 %v871, %v17
  %v881 = vmul.f32 %v875, %v18
  %v882 = vmul.f32 %v867, %v19
  %v883 = vmul.f32 %v871, %v20
  %v884 = vmul.f32 %v875, %v21
  %v885 = vmul.f32 %v867, %v22
  %v886 = vmul.f32 %v871, %v23
  %v887 = vmul.f32 %v875, %v24
  %v888 = vadd.f32 %v879, %v51
  %v889 = vadd.f32 %v880, %v51
  %v890 = vadd.f32 %v881, %v51
  %v891 = vadd.f32 %v882, %v51
  %v892 = vadd.f32 %v883, %v51
  %v893 = vadd.f32 %v884, %v51
  %v894 = vadd.f32 %v885, %v51
  %v895 = vadd.f32 %v886, %v51
  %v896 = vadd.f32 %v887, %v51
  %897 = vst [vmem:[%s3 + $0x1c8] sm:$0xff] %v888
  %898 = vst [vmem:[%s3 + $0x1d0] sm:$0xff] %v889
  %899 = vst [vmem:[%s3 + $0x1d8] sm:$0xff] %v890
  %900 = vst [vmem:[%s3 + $0x648] sm:$0xff] %v891
  %901 = vst [vmem:[%s3 + $0x650] sm:$0xff] %v892
  %902 = vst [vmem:[%s3 + $0x658] sm:$0xff] %v893
  %903 = vst [vmem:[%s3 + $0xac8] sm:$0x3] %v894
  %904 = vst [vmem:[%s3 + $0xad0] sm:$0x3] %v895
  %905 = vst [vmem:[%s3 + $0xad8] sm:$0x3] %v896
  %v906 = vld [vmem:[%s1 + $0x3c] sm:$0x7]
  %v908 = vlaneseq
  %v909 = vshrl.u32 %v908, 7
  %v910 = vsub.s32 0, %v909
  %v911 = vrot.slane %v906, %v910
  %v912 = vlaneseq
  %v913 = vshrl.u32 %v912, 7
  %v914 = vsub.s32 1, %v913
  %v915 = vrot.slane %v906, %v914
  %v916 = vlaneseq
  %v917 = vshrl.u32 %v916, 7
  %v918 = vsub.s32 2, %v917
  %v919 = vrot.slane %v906, %v918
  %v923 = vmul.f32 %v911, %v16
  %v924 = vmul.f32 %v915, %v17
  %v925 = vmul.f32 %v919, %v18
  %v926 = vmul.f32 %v911, %v19
  %v927 = vmul.f32 %v915, %v20
  %v928 = vmul.f32 %v919, %v21
  %v929 = vmul.f32 %v911, %v22
  %v930 = vmul.f32 %v915, %v23
  %v931 = vmul.f32 %v919, %v24
  %v932 = vadd.f32 %v923, %v51
  %v933 = vadd.f32 %v924, %v51
  %v934 = vadd.f32 %v925, %v51
  %v935 = vadd.f32 %v926, %v51
  %v936 = vadd.f32 %v927, %v51
  %v937 = vadd.f32 %v928, %v51
  %v938 = vadd.f32 %v929, %v51
  %v939 = vadd.f32 %v930, %v51
  %v940 = vadd.f32 %v931, %v51
  %941 = vst [vmem:[%s3 + $0x1e0] sm:$0xff] %v932
  %942 = vst [vmem:[%s3 + $0x1e8] sm:$0xff] %v933
  %943 = vst [vmem:[%s3 + $0x1f0] sm:$0xff] %v934
  %944 = vst [vmem:[%s3 + $0x660] sm:$0xff] %v935
  %945 = vst [vmem:[%s3 + $0x668] sm:$0xff] %v936
  %946 = vst [vmem:[%s3 + $0x670] sm:$0xff] %v937
  %947 = vst [vmem:[%s3 + $0xae0] sm:$0x3] %v938
  %948 = vst [vmem:[%s3 + $0xae8] sm:$0x3] %v939
  %949 = vst [vmem:[%s3 + $0xaf0] sm:$0x3] %v940
  %v950 = vld [vmem:[%s1 + $0x3f] sm:$0x7]
  %v952 = vlaneseq
  %v953 = vshrl.u32 %v952, 7
  %v954 = vsub.s32 0, %v953
  %v955 = vrot.slane %v950, %v954
  %v956 = vlaneseq
  %v957 = vshrl.u32 %v956, 7
  %v958 = vsub.s32 1, %v957
  %v959 = vrot.slane %v950, %v958
  %v960 = vlaneseq
  %v961 = vshrl.u32 %v960, 7
  %v962 = vsub.s32 2, %v961
  %v963 = vrot.slane %v950, %v962
  %v967 = vmul.f32 %v955, %v16
  %v968 = vmul.f32 %v959, %v17
  %v969 = vmul.f32 %v963, %v18
  %v970 = vmul.f32 %v955, %v19
  %v971 = vmul.f32 %v959, %v20
  %v972 = vmul.f32 %v963, %v21
  %v973 = vmul.f32 %v955, %v22
  %v974 = vmul.f32 %v959, %v23
  %v975 = vmul.f32 %v963, %v24
  %v976 = vadd.f32 %v967, %v51
  %v977 = vadd.f32 %v968, %v51
  %v978 = vadd.f32 %v969, %v51
  %v979 = vadd.f32 %v970, %v51
  %v980 = vadd.f32 %v971, %v51
  %v981 = vadd.f32 %v972, %v51
  %v982 = vadd.f32 %v973, %v51
  %v983 = vadd.f32 %v974, %v51
  %v984 = vadd.f32 %v975, %v51
  %985 = vst [vmem:[%s3 + $0x1f8] sm:$0xff] %v976
  %986 = vst [vmem:[%s3 + $0x200] sm:$0xff] %v977
  %987 = vst [vmem:[%s3 + $0x208] sm:$0xff] %v978
  %988 = vst [vmem:[%s3 + $0x678] sm:$0xff] %v979
  %989 = vst [vmem:[%s3 + $0x680] sm:$0xff] %v980
  %990 = vst [vmem:[%s3 + $0x688] sm:$0xff] %v981
  %991 = vst [vmem:[%s3 + $0xaf8] sm:$0x3] %v982
  %992 = vst [vmem:[%s3 + $0xb00] sm:$0x3] %v983
  %993 = vst [vmem:[%s3 + $0xb08] sm:$0x3] %v984
  %v994 = vld [vmem:[%s1 + $0x42] sm:$0x7]
  %v996 = vlaneseq
  %v997 = vshrl.u32 %v996, 7
  %v998 = vsub.s32 0, %v997
  %v999 = vrot.slane %v994, %v998
  %v1000 = vlaneseq
  %v1001 = vshrl.u32 %v1000, 7
  %v1002 = vsub.s32 1, %v1001
  %v1003 = vrot.slane %v994, %v1002
  %v1004 = vlaneseq
  %v1005 = vshrl.u32 %v1004, 7
  %v1006 = vsub.s32 2, %v1005
  %v1007 = vrot.slane %v994, %v1006
  %v1011 = vmul.f32 %v999, %v16
  %v1012 = vmul.f32 %v1003, %v17
  %v1013 = vmul.f32 %v1007, %v18
  %v1014 = vmul.f32 %v999, %v19
  %v1015 = vmul.f32 %v1003, %v20
  %v1016 = vmul.f32 %v1007, %v21
  %v1017 = vmul.f32 %v999, %v22
  %v1018 = vmul.f32 %v1003, %v23
  %v1019 = vmul.f32 %v1007, %v24
  %v1020 = vadd.f32 %v1011, %v51
  %v1021 = vadd.f32 %v1012, %v51
  %v1022 = vadd.f32 %v1013, %v51
  %v1023 = vadd.f32 %v1014, %v51
  %v1024 = vadd.f32 %v1015, %v51
  %v1025 = vadd.f32 %v1016, %v51
  %v1026 = vadd.f32 %v1017, %v51
  %v1027 = vadd.f32 %v1018, %v51
  %v1028 = vadd.f32 %v1019, %v51
  %1029 = vst [vmem:[%s3 + $0x210] sm:$0xff] %v1020
  %1030 = vst [vmem:[%s3 + $0x218] sm:$0xff] %v1021
  %1031 = vst [vmem:[%s3 + $0x220] sm:$0xff] %v1022
  %1032 = vst [vmem:[%s3 + $0x690] sm:$0xff] %v1023
  %1033 = vst [vmem:[%s3 + $0x698] sm:$0xff] %v1024
  %1034 = vst [vmem:[%s3 + $0x6a0] sm:$0xff] %v1025
  %1035 = vst [vmem:[%s3 + $0xb10] sm:$0x3] %v1026
  %1036 = vst [vmem:[%s3 + $0xb18] sm:$0x3] %v1027
  %1037 = vst [vmem:[%s3 + $0xb20] sm:$0x3] %v1028
  %v1038 = vld [vmem:[%s1 + $0x45] sm:$0x7]
  %v1040 = vlaneseq
  %v1041 = vshrl.u32 %v1040, 7
  %v1042 = vsub.s32 0, %v1041
  %v1043 = vrot.slane %v1038, %v1042
  %v1044 = vlaneseq
  %v1045 = vshrl.u32 %v1044, 7
  %v1046 = vsub.s32 1, %v1045
  %v1047 = vrot.slane %v1038, %v1046
  %v1048 = vlaneseq
  %v1049 = vshrl.u32 %v1048, 7
  %v1050 = vsub.s32 2, %v1049
  %v1051 = vrot.slane %v1038, %v1050
  %v1055 = vmul.f32 %v1043, %v16
  %v1056 = vmul.f32 %v1047, %v17
  %v1057 = vmul.f32 %v1051, %v18
  %v1058 = vmul.f32 %v1043, %v19
  %v1059 = vmul.f32 %v1047, %v20
  %v1060 = vmul.f32 %v1051, %v21
  %v1061 = vmul.f32 %v1043, %v22
  %v1062 = vmul.f32 %v1047, %v23
  %v1063 = vmul.f32 %v1051, %v24
  %v1064 = vadd.f32 %v1055, %v51
  %v1065 = vadd.f32 %v1056, %v51
  %v1066 = vadd.f32 %v1057, %v51
  %v1067 = vadd.f32 %v1058, %v51
  %v1068 = vadd.f32 %v1059, %v51
  %v1069 = vadd.f32 %v1060, %v51
  %v1070 = vadd.f32 %v1061, %v51
  %v1071 = vadd.f32 %v1062, %v51
  %v1072 = vadd.f32 %v1063, %v51
  %1073 = vst [vmem:[%s3 + $0x228] sm:$0xff] %v1064
  %1074 = vst [vmem:[%s3 + $0x230] sm:$0xff] %v1065
  %1075 = vst [vmem:[%s3 + $0x238] sm:$0xff] %v1066
  %1076 = vst [vmem:[%s3 + $0x6a8] sm:$0xff] %v1067
  %1077 = vst [vmem:[%s3 + $0x6b0] sm:$0xff] %v1068
  %1078 = vst [vmem:[%s3 + $0x6b8] sm:$0xff] %v1069
  %1079 = vst [vmem:[%s3 + $0xb28] sm:$0x3] %v1070
  %1080 = vst [vmem:[%s3 + $0xb30] sm:$0x3] %v1071
  %1081 = vst [vmem:[%s3 + $0xb38] sm:$0x3] %v1072
  %v1082 = vld [vmem:[%s1 + $0x48] sm:$0x7]
  %v1084 = vlaneseq
  %v1085 = vshrl.u32 %v1084, 7
  %v1086 = vsub.s32 0, %v1085
  %v1087 = vrot.slane %v1082, %v1086
  %v1088 = vlaneseq
  %v1089 = vshrl.u32 %v1088, 7
  %v1090 = vsub.s32 1, %v1089
  %v1091 = vrot.slane %v1082, %v1090
  %v1092 = vlaneseq
  %v1093 = vshrl.u32 %v1092, 7
  %v1094 = vsub.s32 2, %v1093
  %v1095 = vrot.slane %v1082, %v1094
  %v1099 = vmul.f32 %v1087, %v16
  %v1100 = vmul.f32 %v1091, %v17
  %v1101 = vmul.f32 %v1095, %v18
  %v1102 = vmul.f32 %v1087, %v19
  %v1103 = vmul.f32 %v1091, %v20
  %v1104 = vmul.f32 %v1095, %v21
  %v1105 = vmul.f32 %v1087, %v22
  %v1106 = vmul.f32 %v1091, %v23
  %v1107 = vmul.f32 %v1095, %v24
  %v1108 = vadd.f32 %v1099, %v51
  %v1109 = vadd.f32 %v1100, %v51
  %v1110 = vadd.f32 %v1101, %v51
  %v1111 = vadd.f32 %v1102, %v51
  %v1112 = vadd.f32 %v1103, %v51
  %v1113 = vadd.f32 %v1104, %v51
  %v1114 = vadd.f32 %v1105, %v51
  %v1115 = vadd.f32 %v1106, %v51
  %v1116 = vadd.f32 %v1107, %v51
  %1117 = vst [vmem:[%s3 + $0x240] sm:$0xff] %v1108
  %1118 = vst [vmem:[%s3 + $0x248] sm:$0xff] %v1109
  %1119 = vst [vmem:[%s3 + $0x250] sm:$0xff] %v1110
  %1120 = vst [vmem:[%s3 + $0x6c0] sm:$0xff] %v1111
  %1121 = vst [vmem:[%s3 + $0x6c8] sm:$0xff] %v1112
  %1122 = vst [vmem:[%s3 + $0x6d0] sm:$0xff] %v1113
  %1123 = vst [vmem:[%s3 + $0xb40] sm:$0x3] %v1114
  %1124 = vst [vmem:[%s3 + $0xb48] sm:$0x3] %v1115
  %1125 = vst [vmem:[%s3 + $0xb50] sm:$0x3] %v1116
  %v1126 = vld [vmem:[%s1 + $0x4b] sm:$0x7]
  %v1128 = vlaneseq
  %v1129 = vshrl.u32 %v1128, 7
  %v1130 = vsub.s32 0, %v1129
  %v1131 = vrot.slane %v1126, %v1130
  %v1132 = vlaneseq
  %v1133 = vshrl.u32 %v1132, 7
  %v1134 = vsub.s32 1, %v1133
  %v1135 = vrot.slane %v1126, %v1134
  %v1136 = vlaneseq
  %v1137 = vshrl.u32 %v1136, 7
  %v1138 = vsub.s32 2, %v1137
  %v1139 = vrot.slane %v1126, %v1138
  %v1143 = vmul.f32 %v1131, %v16
  %v1144 = vmul.f32 %v1135, %v17
  %v1145 = vmul.f32 %v1139, %v18
  %v1146 = vmul.f32 %v1131, %v19
  %v1147 = vmul.f32 %v1135, %v20
  %v1148 = vmul.f32 %v1139, %v21
  %v1149 = vmul.f32 %v1131, %v22
  %v1150 = vmul.f32 %v1135, %v23
  %v1151 = vmul.f32 %v1139, %v24
  %v1152 = vadd.f32 %v1143, %v51
  %v1153 = vadd.f32 %v1144, %v51
  %v1154 = vadd.f32 %v1145, %v51
  %v1155 = vadd.f32 %v1146, %v51
  %v1156 = vadd.f32 %v1147, %v51
  %v1157 = vadd.f32 %v1148, %v51
  %v1158 = vadd.f32 %v1149, %v51
  %v1159 = vadd.f32 %v1150, %v51
  %v1160 = vadd.f32 %v1151, %v51
  %1161 = vst [vmem:[%s3 + $0x258] sm:$0xff] %v1152
  %1162 = vst [vmem:[%s3 + $0x260] sm:$0xff] %v1153
  %1163 = vst [vmem:[%s3 + $0x268] sm:$0xff] %v1154
  %1164 = vst [vmem:[%s3 + $0x6d8] sm:$0xff] %v1155
  %1165 = vst [vmem:[%s3 + $0x6e0] sm:$0xff] %v1156
  %1166 = vst [vmem:[%s3 + $0x6e8] sm:$0xff] %v1157
  %1167 = vst [vmem:[%s3 + $0xb58] sm:$0x3] %v1158
  %1168 = vst [vmem:[%s3 + $0xb60] sm:$0x3] %v1159
  %1169 = vst [vmem:[%s3 + $0xb68] sm:$0x3] %v1160
  %v1170 = vld [vmem:[%s1 + $0x4e] sm:$0x7]
  %v1172 = vlaneseq
  %v1173 = vshrl.u32 %v1172, 7
  %v1174 = vsub.s32 0, %v1173
  %v1175 = vrot.slane %v1170, %v1174
  %v1176 = vlaneseq
  %v1177 = vshrl.u32 %v1176, 7
  %v1178 = vsub.s32 1, %v1177
  %v1179 = vrot.slane %v1170, %v1178
  %v1180 = vlaneseq
  %v1181 = vshrl.u32 %v1180, 7
  %v1182 = vsub.s32 2, %v1181
  %v1183 = vrot.slane %v1170, %v1182
  %v1187 = vmul.f32 %v1175, %v16
  %v1188 = vmul.f32 %v1179, %v17
  %v1189 = vmul.f32 %v1183, %v18
  %v1190 = vmul.f32 %v1175, %v19
  %v1191 = vmul.f32 %v1179, %v20
  %v1192 = vmul.f32 %v1183, %v21
  %v1193 = vmul.f32 %v1175, %v22
  %v1194 = vmul.f32 %v1179, %v23
  %v1195 = vmul.f32 %v1183, %v24
  %v1196 = vadd.f32 %v1187, %v51
  %v1197 = vadd.f32 %v1188, %v51
  %v1198 = vadd.f32 %v1189, %v51
  %v1199 = vadd.f32 %v1190, %v51
  %v1200 = vadd.f32 %v1191, %v51
  %v1201 = vadd.f32 %v1192, %v51
  %v1202 = vadd.f32 %v1193, %v51
  %v1203 = vadd.f32 %v1194, %v51
  %v1204 = vadd.f32 %v1195, %v51
  %1205 = vst [vmem:[%s3 + $0x270] sm:$0xff] %v1196
  %1206 = vst [vmem:[%s3 + $0x278] sm:$0xff] %v1197
  %1207 = vst [vmem:[%s3 + $0x280] sm:$0xff] %v1198
  %1208 = vst [vmem:[%s3 + $0x6f0] sm:$0xff] %v1199
  %1209 = vst [vmem:[%s3 + $0x6f8] sm:$0xff] %v1200
  %1210 = vst [vmem:[%s3 + $0x700] sm:$0xff] %v1201
  %1211 = vst [vmem:[%s3 + $0xb70] sm:$0x3] %v1202
  %1212 = vst [vmem:[%s3 + $0xb78] sm:$0x3] %v1203
  %1213 = vst [vmem:[%s3 + $0xb80] sm:$0x3] %v1204
  %v1214 = vld [vmem:[%s1 + $0x51] sm:$0x7]
  %v1216 = vlaneseq
  %v1217 = vshrl.u32 %v1216, 7
  %v1218 = vsub.s32 0, %v1217
  %v1219 = vrot.slane %v1214, %v1218
  %v1220 = vlaneseq
  %v1221 = vshrl.u32 %v1220, 7
  %v1222 = vsub.s32 1, %v1221
  %v1223 = vrot.slane %v1214, %v1222
  %v1224 = vlaneseq
  %v1225 = vshrl.u32 %v1224, 7
  %v1226 = vsub.s32 2, %v1225
  %v1227 = vrot.slane %v1214, %v1226
  %v1231 = vmul.f32 %v1219, %v16
  %v1232 = vmul.f32 %v1223, %v17
  %v1233 = vmul.f32 %v1227, %v18
  %v1234 = vmul.f32 %v1219, %v19
  %v1235 = vmul.f32 %v1223, %v20
  %v1236 = vmul.f32 %v1227, %v21
  %v1237 = vmul.f32 %v1219, %v22
  %v1238 = vmul.f32 %v1223, %v23
  %v1239 = vmul.f32 %v1227, %v24
  %v1240 = vadd.f32 %v1231, %v51
  %v1241 = vadd.f32 %v1232, %v51
  %v1242 = vadd.f32 %v1233, %v51
  %v1243 = vadd.f32 %v1234, %v51
  %v1244 = vadd.f32 %v1235, %v51
  %v1245 = vadd.f32 %v1236, %v51
  %v1246 = vadd.f32 %v1237, %v51
  %v1247 = vadd.f32 %v1238, %v51
  %v1248 = vadd.f32 %v1239, %v51
  %1249 = vst [vmem:[%s3 + $0x288] sm:$0xff] %v1240
  %1250 = vst [vmem:[%s3 + $0x290] sm:$0xff] %v1241
  %1251 = vst [vmem:[%s3 + $0x298] sm:$0xff] %v1242
  %1252 = vst [vmem:[%s3 + $0x708] sm:$0xff] %v1243
  %1253 = vst [vmem:[%s3 + $0x710] sm:$0xff] %v1244
  %1254 = vst [vmem:[%s3 + $0x718] sm:$0xff] %v1245
  %1255 = vst [vmem:[%s3 + $0xb88] sm:$0x3] %v1246
  %1256 = vst [vmem:[%s3 + $0xb90] sm:$0x3] %v1247
  %1257 = vst [vmem:[%s3 + $0xb98] sm:$0x3] %v1248
  %v1258 = vld [vmem:[%s1 + $0x54] sm:$0x7]
  %v1260 = vlaneseq
  %v1261 = vshrl.u32 %v1260, 7
  %v1262 = vsub.s32 0, %v1261
  %v1263 = vrot.slane %v1258, %v1262
  %v1264 = vlaneseq
  %v1265 = vshrl.u32 %v1264, 7
  %v1266 = vsub.s32 1, %v1265
  %v1267 = vrot.slane %v1258, %v1266
  %v1268 = vlaneseq
  %v1269 = vshrl.u32 %v1268, 7
  %v1270 = vsub.s32 2, %v1269
  %v1271 = vrot.slane %v1258, %v1270
  %v1275 = vmul.f32 %v1263, %v16
  %v1276 = vmul.f32 %v1267, %v17
  %v1277 = vmul.f32 %v1271, %v18
  %v1278 = vmul.f32 %v1263, %v19
  %v1279 = vmul.f32 %v1267, %v20
  %v1280 = vmul.f32 %v1271, %v21
  %v1281 = vmul.f32 %v1263, %v22
  %v1282 = vmul.f32 %v1267, %v23
  %v1283 = vmul.f32 %v1271, %v24
  %v1284 = vadd.f32 %v1275, %v51
  %v1285 = vadd.f32 %v1276, %v51
  %v1286 = vadd.f32 %v1277, %v51
  %v1287 = vadd.f32 %v1278, %v51
  %v1288 = vadd.f32 %v1279, %v51
  %v1289 = vadd.f32 %v1280, %v51
  %v1290 = vadd.f32 %v1281, %v51
  %v1291 = vadd.f32 %v1282, %v51
  %v1292 = vadd.f32 %v1283, %v51
  %1293 = vst [vmem:[%s3 + $0x2a0] sm:$0xff] %v1284
  %1294 = vst [vmem:[%s3 + $0x2a8] sm:$0xff] %v1285
  %1295 = vst [vmem:[%s3 + $0x2b0] sm:$0xff] %v1286
  %1296 = vst [vmem:[%s3 + $0x720] sm:$0xff] %v1287
  %1297 = vst [vmem:[%s3 + $0x728] sm:$0xff] %v1288
  %1298 = vst [vmem:[%s3 + $0x730] sm:$0xff] %v1289
  %1299 = vst [vmem:[%s3 + $0xba0] sm:$0x3] %v1290
  %1300 = vst [vmem:[%s3 + $0xba8] sm:$0x3] %v1291
  %1301 = vst [vmem:[%s3 + $0xbb0] sm:$0x3] %v1292
  %v1302 = vld [vmem:[%s1 + $0x57] sm:$0x7]
  %v1304 = vlaneseq
  %v1305 = vshrl.u32 %v1304, 7
  %v1306 = vsub.s32 0, %v1305
  %v1307 = vrot.slane %v1302, %v1306
  %v1308 = vlaneseq
  %v1309 = vshrl.u32 %v1308, 7
  %v1310 = vsub.s32 1, %v1309
  %v1311 = vrot.slane %v1302, %v1310
  %v1312 = vlaneseq
  %v1313 = vshrl.u32 %v1312, 7
  %v1314 = vsub.s32 2, %v1313
  %v1315 = vrot.slane %v1302, %v1314
  %v1319 = vmul.f32 %v1307, %v16
  %v1320 = vmul.f32 %v1311, %v17
  %v1321 = vmul.f32 %v1315, %v18
  %v1322 = vmul.f32 %v1307, %v19
  %v1323 = vmul.f32 %v1311, %v20
  %v1324 = vmul.f32 %v1315, %v21
  %v1325 = vmul.f32 %v1307, %v22
  %v1326 = vmul.f32 %v1311, %v23
  %v1327 = vmul.f32 %v1315, %v24
  %v1328 = vadd.f32 %v1319, %v51
  %v1329 = vadd.f32 %v1320, %v51
  %v1330 = vadd.f32 %v1321, %v51
  %v1331 = vadd.f32 %v1322, %v51
  %v1332 = vadd.f32 %v1323, %v51
  %v1333 = vadd.f32 %v1324, %v51
  %v1334 = vadd.f32 %v1325, %v51
  %v1335 = vadd.f32 %v1326, %v51
  %v1336 = vadd.f32 %v1327, %v51
  %1337 = vst [vmem:[%s3 + $0x2b8] sm:$0xff] %v1328
  %1338 = vst [vmem:[%s3 + $0x2c0] sm:$0xff] %v1329
  %1339 = vst [vmem:[%s3 + $0x2c8] sm:$0xff] %v1330
  %1340 = vst [vmem:[%s3 + $0x738] sm:$0xff] %v1331
  %1341 = vst [vmem:[%s3 + $0x740] sm:$0xff] %v1332
  %1342 = vst [vmem:[%s3 + $0x748] sm:$0xff] %v1333
  %1343 = vst [vmem:[%s3 + $0xbb8] sm:$0x3] %v1334
  %1344 = vst [vmem:[%s3 + $0xbc0] sm:$0x3] %v1335
  %1345 = vst [vmem:[%s3 + $0xbc8] sm:$0x3] %v1336
  %v1346 = vld [vmem:[%s1 + $0x5a] sm:$0x7]
  %v1348 = vlaneseq
  %v1349 = vshrl.u32 %v1348, 7
  %v1350 = vsub.s32 0, %v1349
  %v1351 = vrot.slane %v1346, %v1350
  %v1352 = vlaneseq
  %v1353 = vshrl.u32 %v1352, 7
  %v1354 = vsub.s32 1, %v1353
  %v1355 = vrot.slane %v1346, %v1354
  %v1356 = vlaneseq
  %v1357 = vshrl.u32 %v1356, 7
  %v1358 = vsub.s32 2, %v1357
  %v1359 = vrot.slane %v1346, %v1358
  %v1363 = vmul.f32 %v1351, %v16
  %v1364 = vmul.f32 %v1355, %v17
  %v1365 = vmul.f32 %v1359, %v18
  %v1366 = vmul.f32 %v1351, %v19
  %v1367 = vmul.f32 %v1355, %v20
  %v1368 = vmul.f32 %v1359, %v21
  %v1369 = vmul.f32 %v1351, %v22
  %v1370 = vmul.f32 %v1355, %v23
  %v1371 = vmul.f32 %v1359, %v24
  %v1372 = vadd.f32 %v1363, %v51
  %v1373 = vadd.f32 %v1364, %v51
  %v1374 = vadd.f32 %v1365, %v51
  %v1375 = vadd.f32 %v1366, %v51
  %v1376 = vadd.f32 %v1367, %v51
  %v1377 = vadd.f32 %v1368, %v51
  %v1378 = vadd.f32 %v1369, %v51
  %v1379 = vadd.f32 %v1370, %v51
  %v1380 = vadd.f32 %v1371, %v51
  %1381 = vst [vmem:[%s3 + $0x2d0] sm:$0xff] %v1372
  %1382 = vst [vmem:[%s3 + $0x2d8] sm:$0xff] %v1373
  %1383 = vst [vmem:[%s3 + $0x2e0] sm:$0xff] %v1374
  %1384 = vst [vmem:[%s3 + $0x750] sm:$0xff] %v1375
  %1385 = vst [vmem:[%s3 + $0x758] sm:$0xff] %v1376
  %1386 = vst [vmem:[%s3 + $0x760] sm:$0xff] %v1377
  %1387 = vst [vmem:[%s3 + $0xbd0] sm:$0x3] %v1378
  %1388 = vst [vmem:[%s3 + $0xbd8] sm:$0x3] %v1379
  %1389 = vst [vmem:[%s3 + $0xbe0] sm:$0x3] %v1380
  %v1390 = vld [vmem:[%s1 + $0x5d] sm:$0x7]
  %v1392 = vlaneseq
  %v1393 = vshrl.u32 %v1392, 7
  %v1394 = vsub.s32 0, %v1393
  %v1395 = vrot.slane %v1390, %v1394
  %v1396 = vlaneseq
  %v1397 = vshrl.u32 %v1396, 7
  %v1398 = vsub.s32 1, %v1397
  %v1399 = vrot.slane %v1390, %v1398
  %v1400 = vlaneseq
  %v1401 = vshrl.u32 %v1400, 7
  %v1402 = vsub.s32 2, %v1401
  %v1403 = vrot.slane %v1390, %v1402
  %v1407 = vmul.f32 %v1395, %v16
  %v1408 = vmul.f32 %v1399, %v17
  %v1409 = vmul.f32 %v1403, %v18
  %v1410 = vmul.f32 %v1395, %v19
  %v1411 = vmul.f32 %v1399, %v20
  %v1412 = vmul.f32 %v1403, %v21
  %v1413 = vmul.f32 %v1395, %v22
  %v1414 = vmul.f32 %v1399, %v23
  %v1415 = vmul.f32 %v1403, %v24
  %v1416 = vadd.f32 %v1407, %v51
  %v1417 = vadd.f32 %v1408, %v51
  %v1418 = vadd.f32 %v1409, %v51
  %v1419 = vadd.f32 %v1410, %v51
  %v1420 = vadd.f32 %v1411, %v51
  %v1421 = vadd.f32 %v1412, %v51
  %v1422 = vadd.f32 %v1413, %v51
  %v1423 = vadd.f32 %v1414, %v51
  %v1424 = vadd.f32 %v1415, %v51
  %1425 = vst [vmem:[%s3 + $0x2e8] sm:$0xff] %v1416
  %1426 = vst [vmem:[%s3 + $0x2f0] sm:$0xff] %v1417
  %1427 = vst [vmem:[%s3 + $0x2f8] sm:$0xff] %v1418
  %1428 = vst [vmem:[%s3 + $0x768] sm:$0xff] %v1419
  %1429 = vst [vmem:[%s3 + $0x770] sm:$0xff] %v1420
  %1430 = vst [vmem:[%s3 + $0x778] sm:$0xff] %v1421
  %1431 = vst [vmem:[%s3 + $0xbe8] sm:$0x3] %v1422
  %1432 = vst [vmem:[%s3 + $0xbf0] sm:$0x3] %v1423
  %1433 = vst [vmem:[%s3 + $0xbf8] sm:$0x3] %v1424
  %v1434 = vld [vmem:[%s1 + $0x60] sm:$0x7]
  %v1436 = vlaneseq
  %v1437 = vshrl.u32 %v1436, 7
  %v1438 = vsub.s32 0, %v1437
  %v1439 = vrot.slane %v1434, %v1438
  %v1440 = vlaneseq
  %v1441 = vshrl.u32 %v1440, 7
  %v1442 = vsub.s32 1, %v1441
  %v1443 = vrot.slane %v1434, %v1442
  %v1444 = vlaneseq
  %v1445 = vshrl.u32 %v1444, 7
  %v1446 = vsub.s32 2, %v1445
  %v1447 = vrot.slane %v1434, %v1446
  %v1451 = vmul.f32 %v1439, %v16
  %v1452 = vmul.f32 %v1443, %v17
  %v1453 = vmul.f32 %v1447, %v18
  %v1454 = vmul.f32 %v1439, %v19
  %v1455 = vmul.f32 %v1443, %v20
  %v1456 = vmul.f32 %v1447, %v21
  %v1457 = vmul.f32 %v1439, %v22
  %v1458 = vmul.f32 %v1443, %v23
  %v1459 = vmul.f32 %v1447, %v24
  %v1460 = vadd.f32 %v1451, %v51
  %v1461 = vadd.f32 %v1452, %v51
  %v1462 = vadd.f32 %v1453, %v51
  %v1463 = vadd.f32 %v1454, %v51
  %v1464 = vadd.f32 %v1455, %v51
  %v1465 = vadd.f32 %v1456, %v51
  %v1466 = vadd.f32 %v1457, %v51
  %v1467 = vadd.f32 %v1458, %v51
  %v1468 = vadd.f32 %v1459, %v51
  %1469 = vst [vmem:[%s3 + $0x300] sm:$0xff] %v1460
  %1470 = vst [vmem:[%s3 + $0x308] sm:$0xff] %v1461
  %1471 = vst [vmem:[%s3 + $0x310] sm:$0xff] %v1462
  %1472 = vst [vmem:[%s3 + $0x780] sm:$0xff] %v1463
  %1473 = vst [vmem:[%s3 + $0x788] sm:$0xff] %v1464
  %1474 = vst [vmem:[%s3 + $0x790] sm:$0xff] %v1465
  %1475 = vst [vmem:[%s3 + $0xc00] sm:$0x3] %v1466
  %1476 = vst [vmem:[%s3 + $0xc08] sm:$0x3] %v1467
  %1477 = vst [vmem:[%s3 + $0xc10] sm:$0x3] %v1468
  %v1478 = vld [vmem:[%s1 + $0x63] sm:$0x7]
  %v1480 = vlaneseq
  %v1481 = vshrl.u32 %v1480, 7
  %v1482 = vsub.s32 0, %v1481
  %v1483 = vrot.slane %v1478, %v1482
  %v1484 = vlaneseq
  %v1485 = vshrl.u32 %v1484, 7
  %v1486 = vsub.s32 1, %v1485
  %v1487 = vrot.slane %v1478, %v1486
  %v1488 = vlaneseq
  %v1489 = vshrl.u32 %v1488, 7
  %v1490 = vsub.s32 2, %v1489
  %v1491 = vrot.slane %v1478, %v1490
  %v1495 = vmul.f32 %v1483, %v16
  %v1496 = vmul.f32 %v1487, %v17
  %v1497 = vmul.f32 %v1491, %v18
  %v1498 = vmul.f32 %v1483, %v19
  %v1499 = vmul.f32 %v1487, %v20
  %v1500 = vmul.f32 %v1491, %v21
  %v1501 = vmul.f32 %v1483, %v22
  %v1502 = vmul.f32 %v1487, %v23
  %v1503 = vmul.f32 %v1491, %v24
  %v1504 = vadd.f32 %v1495, %v51
  %v1505 = vadd.f32 %v1496, %v51
  %v1506 = vadd.f32 %v1497, %v51
  %v1507 = vadd.f32 %v1498, %v51
  %v1508 = vadd.f32 %v1499, %v51
  %v1509 = vadd.f32 %v1500, %v51
  %v1510 = vadd.f32 %v1501, %v51
  %v1511 = vadd.f32 %v1502, %v51
  %v1512 = vadd.f32 %v1503, %v51
  %1513 = vst [vmem:[%s3 + $0x318] sm:$0xff] %v1504
  %1514 = vst [vmem:[%s3 + $0x320] sm:$0xff] %v1505
  %1515 = vst [vmem:[%s3 + $0x328] sm:$0xff] %v1506
  %1516 = vst [vmem:[%s3 + $0x798] sm:$0xff] %v1507
  %1517 = vst [vmem:[%s3 + $0x7a0] sm:$0xff] %v1508
  %1518 = vst [vmem:[%s3 + $0x7a8] sm:$0xff] %v1509
  %1519 = vst [vmem:[%s3 + $0xc18] sm:$0x3] %v1510
  %1520 = vst [vmem:[%s3 + $0xc20] sm:$0x3] %v1511
  %1521 = vst [vmem:[%s3 + $0xc28] sm:$0x3] %v1512
  %v1522 = vld [vmem:[%s1 + $0x66] sm:$0x7]
  %v1524 = vlaneseq
  %v1525 = vshrl.u32 %v1524, 7
  %v1526 = vsub.s32 0, %v1525
  %v1527 = vrot.slane %v1522, %v1526
  %v1528 = vlaneseq
  %v1529 = vshrl.u32 %v1528, 7
  %v1530 = vsub.s32 1, %v1529
  %v1531 = vrot.slane %v1522, %v1530
  %v1532 = vlaneseq
  %v1533 = vshrl.u32 %v1532, 7
  %v1534 = vsub.s32 2, %v1533
  %v1535 = vrot.slane %v1522, %v1534
  %v1539 = vmul.f32 %v1527, %v16
  %v1540 = vmul.f32 %v1531, %v17
  %v1541 = vmul.f32 %v1535, %v18
  %v1542 = vmul.f32 %v1527, %v19
  %v1543 = vmul.f32 %v1531, %v20
  %v1544 = vmul.f32 %v1535, %v21
  %v1545 = vmul.f32 %v1527, %v22
  %v1546 = vmul.f32 %v1531, %v23
  %v1547 = vmul.f32 %v1535, %v24
  %v1548 = vadd.f32 %v1539, %v51
  %v1549 = vadd.f32 %v1540, %v51
  %v1550 = vadd.f32 %v1541, %v51
  %v1551 = vadd.f32 %v1542, %v51
  %v1552 = vadd.f32 %v1543, %v51
  %v1553 = vadd.f32 %v1544, %v51
  %v1554 = vadd.f32 %v1545, %v51
  %v1555 = vadd.f32 %v1546, %v51
  %v1556 = vadd.f32 %v1547, %v51
  %1557 = vst [vmem:[%s3 + $0x330] sm:$0xff] %v1548
  %1558 = vst [vmem:[%s3 + $0x338] sm:$0xff] %v1549
  %1559 = vst [vmem:[%s3 + $0x340] sm:$0xff] %v1550
  %1560 = vst [vmem:[%s3 + $0x7b0] sm:$0xff] %v1551
  %1561 = vst [vmem:[%s3 + $0x7b8] sm:$0xff] %v1552
  %1562 = vst [vmem:[%s3 + $0x7c0] sm:$0xff] %v1553
  %1563 = vst [vmem:[%s3 + $0xc30] sm:$0x3] %v1554
  %1564 = vst [vmem:[%s3 + $0xc38] sm:$0x3] %v1555
  %1565 = vst [vmem:[%s3 + $0xc40] sm:$0x3] %v1556
  %v1566 = vld [vmem:[%s1 + $0x69] sm:$0x7]
  %v1568 = vlaneseq
  %v1569 = vshrl.u32 %v1568, 7
  %v1570 = vsub.s32 0, %v1569
  %v1571 = vrot.slane %v1566, %v1570
  %v1572 = vlaneseq
  %v1573 = vshrl.u32 %v1572, 7
  %v1574 = vsub.s32 1, %v1573
  %v1575 = vrot.slane %v1566, %v1574
  %v1576 = vlaneseq
  %v1577 = vshrl.u32 %v1576, 7
  %v1578 = vsub.s32 2, %v1577
  %v1579 = vrot.slane %v1566, %v1578
  %v1583 = vmul.f32 %v1571, %v16
  %v1584 = vmul.f32 %v1575, %v17
  %v1585 = vmul.f32 %v1579, %v18
  %v1586 = vmul.f32 %v1571, %v19
  %v1587 = vmul.f32 %v1575, %v20
  %v1588 = vmul.f32 %v1579, %v21
  %v1589 = vmul.f32 %v1571, %v22
  %v1590 = vmul.f32 %v1575, %v23
  %v1591 = vmul.f32 %v1579, %v24
  %v1592 = vadd.f32 %v1583, %v51
  %v1593 = vadd.f32 %v1584, %v51
  %v1594 = vadd.f32 %v1585, %v51
  %v1595 = vadd.f32 %v1586, %v51
  %v1596 = vadd.f32 %v1587, %v51
  %v1597 = vadd.f32 %v1588, %v51
  %v1598 = vadd.f32 %v1589, %v51
  %v1599 = vadd.f32 %v1590, %v51
  %v1600 = vadd.f32 %v1591, %v51
  %1601 = vst [vmem:[%s3 + $0x348] sm:$0xff] %v1592
  %1602 = vst [vmem:[%s3 + $0x350] sm:$0xff] %v1593
  %1603 = vst [vmem:[%s3 + $0x358] sm:$0xff] %v1594
  %1604 = vst [vmem:[%s3 + $0x7c8] sm:$0xff] %v1595
  %1605 = vst [vmem:[%s3 + $0x7d0] sm:$0xff] %v1596
  %1606 = vst [vmem:[%s3 + $0x7d8] sm:$0xff] %v1597
  %1607 = vst [vmem:[%s3 + $0xc48] sm:$0x3] %v1598
  %1608 = vst [vmem:[%s3 + $0xc50] sm:$0x3] %v1599
  %1609 = vst [vmem:[%s3 + $0xc58] sm:$0x3] %v1600
  %v1610 = vld [vmem:[%s1 + $0x6c] sm:$0x7]
  %v1612 = vlaneseq
  %v1613 = vshrl.u32 %v1612, 7
  %v1614 = vsub.s32 0, %v1613
  %v1615 = vrot.slane %v1610, %v1614
  %v1616 = vlaneseq
  %v1617 = vshrl.u32 %v1616, 7
  %v1618 = vsub.s32 1, %v1617
  %v1619 = vrot.slane %v1610, %v1618
  %v1620 = vlaneseq
  %v1621 = vshrl.u32 %v1620, 7
  %v1622 = vsub.s32 2, %v1621
  %v1623 = vrot.slane %v1610, %v1622
  %v1627 = vmul.f32 %v1615, %v16
  %v1628 = vmul.f32 %v1619, %v17
  %v1629 = vmul.f32 %v1623, %v18
  %v1630 = vmul.f32 %v1615, %v19
  %v1631 = vmul.f32 %v1619, %v20
  %v1632 = vmul.f32 %v1623, %v21
  %v1633 = vmul.f32 %v1615, %v22
  %v1634 = vmul.f32 %v1619, %v23
  %v1635 = vmul.f32 %v1623, %v24
  %v1636 = vadd.f32 %v1627, %v51
  %v1637 = vadd.f32 %v1628, %v51
  %v1638 = vadd.f32 %v1629, %v51
  %v1639 = vadd.f32 %v1630, %v51
  %v1640 = vadd.f32 %v1631, %v51
  %v1641 = vadd.f32 %v1632, %v51
  %v1642 = vadd.f32 %v1633, %v51
  %v1643 = vadd.f32 %v1634, %v51
  %v1644 = vadd.f32 %v1635, %v51
  %1645 = vst [vmem:[%s3 + $0x360] sm:$0xff] %v1636
  %1646 = vst [vmem:[%s3 + $0x368] sm:$0xff] %v1637
  %1647 = vst [vmem:[%s3 + $0x370] sm:$0xff] %v1638
  %1648 = vst [vmem:[%s3 + $0x7e0] sm:$0xff] %v1639
  %1649 = vst [vmem:[%s3 + $0x7e8] sm:$0xff] %v1640
  %1650 = vst [vmem:[%s3 + $0x7f0] sm:$0xff] %v1641
  %1651 = vst [vmem:[%s3 + $0xc60] sm:$0x3] %v1642
  %1652 = vst [vmem:[%s3 + $0xc68] sm:$0x3] %v1643
  %1653 = vst [vmem:[%s3 + $0xc70] sm:$0x3] %v1644
  %v1654 = vld [vmem:[%s1 + $0x6f] sm:$0x7]
  %v1656 = vlaneseq
  %v1657 = vshrl.u32 %v1656, 7
  %v1658 = vsub.s32 0, %v1657
  %v1659 = vrot.slane %v1654, %v1658
  %v1660 = vlaneseq
  %v1661 = vshrl.u32 %v1660, 7
  %v1662 = vsub.s32 1, %v1661
  %v1663 = vrot.slane %v1654, %v1662
  %v1664 = vlaneseq
  %v1665 = vshrl.u32 %v1664, 7
  %v1666 = vsub.s32 2, %v1665
  %v1667 = vrot.slane %v1654, %v1666
  %v1671 = vmul.f32 %v1659, %v16
  %v1672 = vmul.f32 %v1663, %v17
  %v1673 = vmul.f32 %v1667, %v18
  %v1674 = vmul.f32 %v1659, %v19
  %v1675 = vmul.f32 %v1663, %v20
  %v1676 = vmul.f32 %v1667, %v21
  %v1677 = vmul.f32 %v1659, %v22
  %v1678 = vmul.f32 %v1663, %v23
  %v1679 = vmul.f32 %v1667, %v24
  %v1680 = vadd.f32 %v1671, %v51
  %v1681 = vadd.f32 %v1672, %v51
  %v1682 = vadd.f32 %v1673, %v51
  %v1683 = vadd.f32 %v1674, %v51
  %v1684 = vadd.f32 %v1675, %v51
  %v1685 = vadd.f32 %v1676, %v51
  %v1686 = vadd.f32 %v1677, %v51
  %v1687 = vadd.f32 %v1678, %v51
  %v1688 = vadd.f32 %v1679, %v51
  %1689 = vst [vmem:[%s3 + $0x378] sm:$0xff] %v1680
  %1690 = vst [vmem:[%s3 + $0x380] sm:$0xff] %v1681
  %1691 = vst [vmem:[%s3 + $0x388] sm:$0xff] %v1682
  %1692 = vst [vmem:[%s3 + $0x7f8] sm:$0xff] %v1683
  %1693 = vst [vmem:[%s3 + $0x800] sm:$0xff] %v1684
  %1694 = vst [vmem:[%s3 + $0x808] sm:$0xff] %v1685
  %1695 = vst [vmem:[%s3 + $0xc78] sm:$0x3] %v1686
  %1696 = vst [vmem:[%s3 + $0xc80] sm:$0x3] %v1687
  %1697 = vst [vmem:[%s3 + $0xc88] sm:$0x3] %v1688
  %v1698 = vld [vmem:[%s1 + $0x72] sm:$0x7]
  %v1700 = vlaneseq
  %v1701 = vshrl.u32 %v1700, 7
  %v1702 = vsub.s32 0, %v1701
  %v1703 = vrot.slane %v1698, %v1702
  %v1704 = vlaneseq
  %v1705 = vshrl.u32 %v1704, 7
  %v1706 = vsub.s32 1, %v1705
  %v1707 = vrot.slane %v1698, %v1706
  %v1708 = vlaneseq
  %v1709 = vshrl.u32 %v1708, 7
  %v1710 = vsub.s32 2, %v1709
  %v1711 = vrot.slane %v1698, %v1710
  %v1715 = vmul.f32 %v1703, %v16
  %v1716 = vmul.f32 %v1707, %v17
  %v1717 = vmul.f32 %v1711, %v18
  %v1718 = vmul.f32 %v1703, %v19
  %v1719 = vmul.f32 %v1707, %v20
  %v1720 = vmul.f32 %v1711, %v21
  %v1721 = vmul.f32 %v1703, %v22
  %v1722 = vmul.f32 %v1707, %v23
  %v1723 = vmul.f32 %v1711, %v24
  %v1724 = vadd.f32 %v1715, %v51
  %v1725 = vadd.f32 %v1716, %v51
  %v1726 = vadd.f32 %v1717, %v51
  %v1727 = vadd.f32 %v1718, %v51
  %v1728 = vadd.f32 %v1719, %v51
  %v1729 = vadd.f32 %v1720, %v51
  %v1730 = vadd.f32 %v1721, %v51
  %v1731 = vadd.f32 %v1722, %v51
  %v1732 = vadd.f32 %v1723, %v51
  %1733 = vst [vmem:[%s3 + $0x390] sm:$0xff] %v1724
  %1734 = vst [vmem:[%s3 + $0x398] sm:$0xff] %v1725
  %1735 = vst [vmem:[%s3 + $0x3a0] sm:$0xff] %v1726
  %1736 = vst [vmem:[%s3 + $0x810] sm:$0xff] %v1727
  %1737 = vst [vmem:[%s3 + $0x818] sm:$0xff] %v1728
  %1738 = vst [vmem:[%s3 + $0x820] sm:$0xff] %v1729
  %1739 = vst [vmem:[%s3 + $0xc90] sm:$0x3] %v1730
  %1740 = vst [vmem:[%s3 + $0xc98] sm:$0x3] %v1731
  %1741 = vst [vmem:[%s3 + $0xca0] sm:$0x3] %v1732
  %v1742 = vld [vmem:[%s1 + $0x75] sm:$0x7]
  %v1744 = vlaneseq
  %v1745 = vshrl.u32 %v1744, 7
  %v1746 = vsub.s32 0, %v1745
  %v1747 = vrot.slane %v1742, %v1746
  %v1748 = vlaneseq
  %v1749 = vshrl.u32 %v1748, 7
  %v1750 = vsub.s32 1, %v1749
  %v1751 = vrot.slane %v1742, %v1750
  %v1752 = vlaneseq
  %v1753 = vshrl.u32 %v1752, 7
  %v1754 = vsub.s32 2, %v1753
  %v1755 = vrot.slane %v1742, %v1754
  %v1759 = vmul.f32 %v1747, %v16
  %v1760 = vmul.f32 %v1751, %v17
  %v1761 = vmul.f32 %v1755, %v18
  %v1762 = vmul.f32 %v1747, %v19
  %v1763 = vmul.f32 %v1751, %v20
  %v1764 = vmul.f32 %v1755, %v21
  %v1765 = vmul.f32 %v1747, %v22
  %v1766 = vmul.f32 %v1751, %v23
  %v1767 = vmul.f32 %v1755, %v24
  %v1768 = vadd.f32 %v1759, %v51
  %v1769 = vadd.f32 %v1760, %v51
  %v1770 = vadd.f32 %v1761, %v51
  %v1771 = vadd.f32 %v1762, %v51
  %v1772 = vadd.f32 %v1763, %v51
  %v1773 = vadd.f32 %v1764, %v51
  %v1774 = vadd.f32 %v1765, %v51
  %v1775 = vadd.f32 %v1766, %v51
  %v1776 = vadd.f32 %v1767, %v51
  %1777 = vst [vmem:[%s3 + $0x3a8] sm:$0xff] %v1768
  %1778 = vst [vmem:[%s3 + $0x3b0] sm:$0xff] %v1769
  %1779 = vst [vmem:[%s3 + $0x3b8] sm:$0xff] %v1770
  %1780 = vst [vmem:[%s3 + $0x828] sm:$0xff] %v1771
  %1781 = vst [vmem:[%s3 + $0x830] sm:$0xff] %v1772
  %1782 = vst [vmem:[%s3 + $0x838] sm:$0xff] %v1773
  %1783 = vst [vmem:[%s3 + $0xca8] sm:$0x3] %v1774
  %1784 = vst [vmem:[%s3 + $0xcb0] sm:$0x3] %v1775
  %1785 = vst [vmem:[%s3 + $0xcb8] sm:$0x3] %v1776
  %v1786 = vld [vmem:[%s1 + $0x78] sm:$0x7]
  %v1788 = vlaneseq
  %v1789 = vshrl.u32 %v1788, 7
  %v1790 = vsub.s32 0, %v1789
  %v1791 = vrot.slane %v1786, %v1790
  %v1792 = vlaneseq
  %v1793 = vshrl.u32 %v1792, 7
  %v1794 = vsub.s32 1, %v1793
  %v1795 = vrot.slane %v1786, %v1794
  %v1796 = vlaneseq
  %v1797 = vshrl.u32 %v1796, 7
  %v1798 = vsub.s32 2, %v1797
  %v1799 = vrot.slane %v1786, %v1798
  %v1803 = vmul.f32 %v1791, %v16
  %v1804 = vmul.f32 %v1795, %v17
  %v1805 = vmul.f32 %v1799, %v18
  %v1806 = vmul.f32 %v1791, %v19
  %v1807 = vmul.f32 %v1795, %v20
  %v1808 = vmul.f32 %v1799, %v21
  %v1809 = vmul.f32 %v1791, %v22
  %v1810 = vmul.f32 %v1795, %v23
  %v1811 = vmul.f32 %v1799, %v24
  %v1812 = vadd.f32 %v1803, %v51
  %v1813 = vadd.f32 %v1804, %v51
  %v1814 = vadd.f32 %v1805, %v51
  %v1815 = vadd.f32 %v1806, %v51
  %v1816 = vadd.f32 %v1807, %v51
  %v1817 = vadd.f32 %v1808, %v51
  %v1818 = vadd.f32 %v1809, %v51
  %v1819 = vadd.f32 %v1810, %v51
  %v1820 = vadd.f32 %v1811, %v51
  %1821 = vst [vmem:[%s3 + $0x3c0] sm:$0xff] %v1812
  %1822 = vst [vmem:[%s3 + $0x3c8] sm:$0xff] %v1813
  %1823 = vst [vmem:[%s3 + $0x3d0] sm:$0xff] %v1814
  %1824 = vst [vmem:[%s3 + $0x840] sm:$0xff] %v1815
  %1825 = vst [vmem:[%s3 + $0x848] sm:$0xff] %v1816
  %1826 = vst [vmem:[%s3 + $0x850] sm:$0xff] %v1817
  %1827 = vst [vmem:[%s3 + $0xcc0] sm:$0x3] %v1818
  %1828 = vst [vmem:[%s3 + $0xcc8] sm:$0x3] %v1819
  %1829 = vst [vmem:[%s3 + $0xcd0] sm:$0x3] %v1820
  %v1830 = vld [vmem:[%s1 + $0x7b] sm:$0x7]
  %v1832 = vlaneseq
  %v1833 = vshrl.u32 %v1832, 7
  %v1834 = vsub.s32 0, %v1833
  %v1835 = vrot.slane %v1830, %v1834
  %v1836 = vlaneseq
  %v1837 = vshrl.u32 %v1836, 7
  %v1838 = vsub.s32 1, %v1837
  %v1839 = vrot.slane %v1830, %v1838
  %v1840 = vlaneseq
  %v1841 = vshrl.u32 %v1840, 7
  %v1842 = vsub.s32 2, %v1841
  %v1843 = vrot.slane %v1830, %v1842
  %v1847 = vmul.f32 %v1835, %v16
  %v1848 = vmul.f32 %v1839, %v17
  %v1849 = vmul.f32 %v1843, %v18
  %v1850 = vmul.f32 %v1835, %v19
  %v1851 = vmul.f32 %v1839, %v20
  %v1852 = vmul.f32 %v1843, %v21
  %v1853 = vmul.f32 %v1835, %v22
  %v1854 = vmul.f32 %v1839, %v23
  %v1855 = vmul.f32 %v1843, %v24
  %v1856 = vadd.f32 %v1847, %v51
  %v1857 = vadd.f32 %v1848, %v51
  %v1858 = vadd.f32 %v1849, %v51
  %v1859 = vadd.f32 %v1850, %v51
  %v1860 = vadd.f32 %v1851, %v51
  %v1861 = vadd.f32 %v1852, %v51
  %v1862 = vadd.f32 %v1853, %v51
  %v1863 = vadd.f32 %v1854, %v51
  %v1864 = vadd.f32 %v1855, %v51
  %1865 = vst [vmem:[%s3 + $0x3d8] sm:$0xff] %v1856
  %1866 = vst [vmem:[%s3 + $0x3e0] sm:$0xff] %v1857
  %1867 = vst [vmem:[%s3 + $0x3e8] sm:$0xff] %v1858
  %1868 = vst [vmem:[%s3 + $0x858] sm:$0xff] %v1859
  %1869 = vst [vmem:[%s3 + $0x860] sm:$0xff] %v1860
  %1870 = vst [vmem:[%s3 + $0x868] sm:$0xff] %v1861
  %1871 = vst [vmem:[%s3 + $0xcd8] sm:$0x3] %v1862
  %1872 = vst [vmem:[%s3 + $0xce0] sm:$0x3] %v1863
  %1873 = vst [vmem:[%s3 + $0xce8] sm:$0x3] %v1864
  %v1874 = vld [vmem:[%s1 + $0x7e] sm:$0x7]
  %v1876 = vlaneseq
  %v1877 = vshrl.u32 %v1876, 7
  %v1878 = vsub.s32 0, %v1877
  %v1879 = vrot.slane %v1874, %v1878
  %v1880 = vlaneseq
  %v1881 = vshrl.u32 %v1880, 7
  %v1882 = vsub.s32 1, %v1881
  %v1883 = vrot.slane %v1874, %v1882
  %v1884 = vlaneseq
  %v1885 = vshrl.u32 %v1884, 7
  %v1886 = vsub.s32 2, %v1885
  %v1887 = vrot.slane %v1874, %v1886
  %v1891 = vmul.f32 %v1879, %v16
  %v1892 = vmul.f32 %v1883, %v17
  %v1893 = vmul.f32 %v1887, %v18
  %v1894 = vmul.f32 %v1879, %v19
  %v1895 = vmul.f32 %v1883, %v20
  %v1896 = vmul.f32 %v1887, %v21
  %v1897 = vmul.f32 %v1879, %v22
  %v1898 = vmul.f32 %v1883, %v23
  %v1899 = vmul.f32 %v1887, %v24
  %v1900 = vadd.f32 %v1891, %v51
  %v1901 = vadd.f32 %v1892, %v51
  %v1902 = vadd.f32 %v1893, %v51
  %v1903 = vadd.f32 %v1894, %v51
  %v1904 = vadd.f32 %v1895, %v51
  %v1905 = vadd.f32 %v1896, %v51
  %v1906 = vadd.f32 %v1897, %v51
  %v1907 = vadd.f32 %v1898, %v51
  %v1908 = vadd.f32 %v1899, %v51
  %1909 = vst [vmem:[%s3 + $0x3f0] sm:$0xff] %v1900
  %1910 = vst [vmem:[%s3 + $0x3f8] sm:$0xff] %v1901
  %1911 = vst [vmem:[%s3 + $0x400] sm:$0xff] %v1902
  %1912 = vst [vmem:[%s3 + $0x870] sm:$0xff] %v1903
  %1913 = vst [vmem:[%s3 + $0x878] sm:$0xff] %v1904
  %1914 = vst [vmem:[%s3 + $0x880] sm:$0xff] %v1905
  %1915 = vst [vmem:[%s3 + $0xcf0] sm:$0x3] %v1906
  %1916 = vst [vmem:[%s3 + $0xcf8] sm:$0x3] %v1907
  %1917 = vst [vmem:[%s3 + $0xd00] sm:$0x3] %v1908
  %v1918 = vld [vmem:[%s1 + $0x81] sm:$0x7]
  %v1920 = vlaneseq
  %v1921 = vshrl.u32 %v1920, 7
  %v1922 = vsub.s32 0, %v1921
  %v1923 = vrot.slane %v1918, %v1922
  %v1924 = vlaneseq
  %v1925 = vshrl.u32 %v1924, 7
  %v1926 = vsub.s32 1, %v1925
  %v1927 = vrot.slane %v1918, %v1926
  %v1928 = vlaneseq
  %v1929 = vshrl.u32 %v1928, 7
  %v1930 = vsub.s32 2, %v1929
  %v1931 = vrot.slane %v1918, %v1930
  %v1935 = vmul.f32 %v1923, %v16
  %v1936 = vmul.f32 %v1927, %v17
  %v1937 = vmul.f32 %v1931, %v18
  %v1938 = vmul.f32 %v1923, %v19
  %v1939 = vmul.f32 %v1927, %v20
  %v1940 = vmul.f32 %v1931, %v21
  %v1941 = vmul.f32 %v1923, %v22
  %v1942 = vmul.f32 %v1927, %v23
  %v1943 = vmul.f32 %v1931, %v24
  %v1944 = vadd.f32 %v1935, %v51
  %v1945 = vadd.f32 %v1936, %v51
  %v1946 = vadd.f32 %v1937, %v51
  %v1947 = vadd.f32 %v1938, %v51
  %v1948 = vadd.f32 %v1939, %v51
  %v1949 = vadd.f32 %v1940, %v51
  %v1950 = vadd.f32 %v1941, %v51
  %v1951 = vadd.f32 %v1942, %v51
  %v1952 = vadd.f32 %v1943, %v51
  %1953 = vst [vmem:[%s3 + $0x408] sm:$0xff] %v1944
  %1954 = vst [vmem:[%s3 + $0x410] sm:$0xff] %v1945
  %1955 = vst [vmem:[%s3 + $0x418] sm:$0xff] %v1946
  %1956 = vst [vmem:[%s3 + $0x888] sm:$0xff] %v1947
  %1957 = vst [vmem:[%s3 + $0x890] sm:$0xff] %v1948
  %1958 = vst [vmem:[%s3 + $0x898] sm:$0xff] %v1949
  %1959 = vst [vmem:[%s3 + $0xd08] sm:$0x3] %v1950
  %1960 = vst [vmem:[%s3 + $0xd10] sm:$0x3] %v1951
  %1961 = vst [vmem:[%s3 + $0xd18] sm:$0x3] %v1952
  %v1962 = vld [vmem:[%s1 + $0x84] sm:$0x7]
  %v1964 = vlaneseq
  %v1965 = vshrl.u32 %v1964, 7
  %v1966 = vsub.s32 0, %v1965
  %v1967 = vrot.slane %v1962, %v1966
  %v1968 = vlaneseq
  %v1969 = vshrl.u32 %v1968, 7
  %v1970 = vsub.s32 1, %v1969
  %v1971 = vrot.slane %v1962, %v1970
  %v1972 = vlaneseq
  %v1973 = vshrl.u32 %v1972, 7
  %v1974 = vsub.s32 2, %v1973
  %v1975 = vrot.slane %v1962, %v1974
  %v1979 = vmul.f32 %v1967, %v16
  %v1980 = vmul.f32 %v1971, %v17
  %v1981 = vmul.f32 %v1975, %v18
  %v1982 = vmul.f32 %v1967, %v19
  %v1983 = vmul.f32 %v1971, %v20
  %v1984 = vmul.f32 %v1975, %v21
  %v1985 = vmul.f32 %v1967, %v22
  %v1986 = vmul.f32 %v1971, %v23
  %v1987 = vmul.f32 %v1975, %v24
  %v1988 = vadd.f32 %v1979, %v51
  %v1989 = vadd.f32 %v1980, %v51
  %v1990 = vadd.f32 %v1981, %v51
  %v1991 = vadd.f32 %v1982, %v51
  %v1992 = vadd.f32 %v1983, %v51
  %v1993 = vadd.f32 %v1984, %v51
  %v1994 = vadd.f32 %v1985, %v51
  %v1995 = vadd.f32 %v1986, %v51
  %v1996 = vadd.f32 %v1987, %v51
  %1997 = vst [vmem:[%s3 + $0x420] sm:$0xff] %v1988
  %1998 = vst [vmem:[%s3 + $0x428] sm:$0xff] %v1989
  %1999 = vst [vmem:[%s3 + $0x430] sm:$0xff] %v1990
  %2000 = vst [vmem:[%s3 + $0x8a0] sm:$0xff] %v1991
  %2001 = vst [vmem:[%s3 + $0x8a8] sm:$0xff] %v1992
  %2002 = vst [vmem:[%s3 + $0x8b0] sm:$0xff] %v1993
  %2003 = vst [vmem:[%s3 + $0xd20] sm:$0x3] %v1994
  %2004 = vst [vmem:[%s3 + $0xd28] sm:$0x3] %v1995
  %2005 = vst [vmem:[%s3 + $0xd30] sm:$0x3] %v1996
  %v2006 = vld [vmem:[%s1 + $0x87] sm:$0x7]
  %v2008 = vlaneseq
  %v2009 = vshrl.u32 %v2008, 7
  %v2010 = vsub.s32 0, %v2009
  %v2011 = vrot.slane %v2006, %v2010
  %v2012 = vlaneseq
  %v2013 = vshrl.u32 %v2012, 7
  %v2014 = vsub.s32 1, %v2013
  %v2015 = vrot.slane %v2006, %v2014
  %v2016 = vlaneseq
  %v2017 = vshrl.u32 %v2016, 7
  %v2018 = vsub.s32 2, %v2017
  %v2019 = vrot.slane %v2006, %v2018
  %v2023 = vmul.f32 %v2011, %v16
  %v2024 = vmul.f32 %v2015, %v17
  %v2025 = vmul.f32 %v2019, %v18
  %v2026 = vmul.f32 %v2011, %v19
  %v2027 = vmul.f32 %v2015, %v20
  %v2028 = vmul.f32 %v2019, %v21
  %v2029 = vmul.f32 %v2011, %v22
  %v2030 = vmul.f32 %v2015, %v23
  %v2031 = vmul.f32 %v2019, %v24
  %v2032 = vadd.f32 %v2023, %v51
  %v2033 = vadd.f32 %v2024, %v51
  %v2034 = vadd.f32 %v2025, %v51
  %v2035 = vadd.f32 %v2026, %v51
  %v2036 = vadd.f32 %v2027, %v51
  %v2037 = vadd.f32 %v2028, %v51
  %v2038 = vadd.f32 %v2029, %v51
  %v2039 = vadd.f32 %v2030, %v51
  %v2040 = vadd.f32 %v2031, %v51
  %2041 = vst [vmem:[%s3 + $0x438] sm:$0xff] %v2032
  %2042 = vst [vmem:[%s3 + $0x440] sm:$0xff] %v2033
  %2043 = vst [vmem:[%s3 + $0x448] sm:$0xff] %v2034
  %2044 = vst [vmem:[%s3 + $0x8b8] sm:$0xff] %v2035
  %2045 = vst [vmem:[%s3 + $0x8c0] sm:$0xff] %v2036
  %2046 = vst [vmem:[%s3 + $0x8c8] sm:$0xff] %v2037
  %2047 = vst [vmem:[%s3 + $0xd38] sm:$0x3] %v2038
  %2048 = vst [vmem:[%s3 + $0xd40] sm:$0x3] %v2039
  %2049 = vst [vmem:[%s3 + $0xd48] sm:$0x3] %v2040
  %v2050 = vld [vmem:[%s1 + $0x8a] sm:$0x7]
  %v2052 = vlaneseq
  %v2053 = vshrl.u32 %v2052, 7
  %v2054 = vsub.s32 0, %v2053
  %v2055 = vrot.slane %v2050, %v2054
  %v2056 = vlaneseq
  %v2057 = vshrl.u32 %v2056, 7
  %v2058 = vsub.s32 1, %v2057
  %v2059 = vrot.slane %v2050, %v2058
  %v2060 = vlaneseq
  %v2061 = vshrl.u32 %v2060, 7
  %v2062 = vsub.s32 2, %v2061
  %v2063 = vrot.slane %v2050, %v2062
  %v2067 = vmul.f32 %v2055, %v16
  %v2068 = vmul.f32 %v2059, %v17
  %v2069 = vmul.f32 %v2063, %v18
  %v2070 = vmul.f32 %v2055, %v19
  %v2071 = vmul.f32 %v2059, %v20
  %v2072 = vmul.f32 %v2063, %v21
  %v2073 = vmul.f32 %v2055, %v22
  %v2074 = vmul.f32 %v2059, %v23
  %v2075 = vmul.f32 %v2063, %v24
  %v2076 = vadd.f32 %v2067, %v51
  %v2077 = vadd.f32 %v2068, %v51
  %v2078 = vadd.f32 %v2069, %v51
  %v2079 = vadd.f32 %v2070, %v51
  %v2080 = vadd.f32 %v2071, %v51
  %v2081 = vadd.f32 %v2072, %v51
  %v2082 = vadd.f32 %v2073, %v51
  %v2083 = vadd.f32 %v2074, %v51
  %v2084 = vadd.f32 %v2075, %v51
  %2085 = vst [vmem:[%s3 + $0x450] sm:$0xff] %v2076
  %2086 = vst [vmem:[%s3 + $0x458] sm:$0xff] %v2077
  %2087 = vst [vmem:[%s3 + $0x460] sm:$0xff] %v2078
  %2088 = vst [vmem:[%s3 + $0x8d0] sm:$0xff] %v2079
  %2089 = vst [vmem:[%s3 + $0x8d8] sm:$0xff] %v2080
  %2090 = vst [vmem:[%s3 + $0x8e0] sm:$0xff] %v2081
  %2091 = vst [vmem:[%s3 + $0xd50] sm:$0x3] %v2082
  %2092 = vst [vmem:[%s3 + $0xd58] sm:$0x3] %v2083
  %2093 = vst [vmem:[%s3 + $0xd60] sm:$0x3] %v2084
  %v2094 = vld [vmem:[%s1 + $0x8d] sm:$0x7]
  %v2096 = vlaneseq
  %v2097 = vshrl.u32 %v2096, 7
  %v2098 = vsub.s32 0, %v2097
  %v2099 = vrot.slane %v2094, %v2098
  %v2100 = vlaneseq
  %v2101 = vshrl.u32 %v2100, 7
  %v2102 = vsub.s32 1, %v2101
  %v2103 = vrot.slane %v2094, %v2102
  %v2104 = vlaneseq
  %v2105 = vshrl.u32 %v2104, 7
  %v2106 = vsub.s32 2, %v2105
  %v2107 = vrot.slane %v2094, %v2106
  %v2111 = vmul.f32 %v2099, %v16
  %v2112 = vmul.f32 %v2103, %v17
  %v2113 = vmul.f32 %v2107, %v18
  %v2114 = vmul.f32 %v2099, %v19
  %v2115 = vmul.f32 %v2103, %v20
  %v2116 = vmul.f32 %v2107, %v21
  %v2117 = vmul.f32 %v2099, %v22
  %v2118 = vmul.f32 %v2103, %v23
  %v2119 = vmul.f32 %v2107, %v24
  %v2120 = vadd.f32 %v2111, %v51
  %v2121 = vadd.f32 %v2112, %v51
  %v2122 = vadd.f32 %v2113, %v51
  %v2123 = vadd.f32 %v2114, %v51
  %v2124 = vadd.f32 %v2115, %v51
  %v2125 = vadd.f32 %v2116, %v51
  %v2126 = vadd.f32 %v2117, %v51
  %v2127 = vadd.f32 %v2118, %v51
  %v2128 = vadd.f32 %v2119, %v51
  %2129 = vst [vmem:[%s3 + $0x468] sm:$0xff] %v2120
  %2130 = vst [vmem:[%s3 + $0x470] sm:$0xff] %v2121
  %2131 = vst [vmem:[%s3 + $0x478] sm:$0xff] %v2122
  %2132 = vst [vmem:[%s3 + $0x8e8] sm:$0xff] %v2123
  %2133 = vst [vmem:[%s3 + $0x8f0] sm:$0xff] %v2124
  %2134 = vst [vmem:[%s3 + $0x8f8] sm:$0xff] %v2125
  %2135 = vst [vmem:[%s3 + $0xd68] sm:$0x3] %v2126
  %2136 = vst [vmem:[%s3 + $0xd70] sm:$0x3] %v2127
  %2137 = vst [vmem:[%s3 + $0xd78] sm:$0x3] %v2128
  // Predicated region
  $region14: #{mini_upsampling_forward.1} parent=0 // pred_check
    _
  $region15: #{mini_upsampling_forward.1} parent=0 // pred_check_branch
    %2139 = sbr.rel (0) target = $region17
  $region16: #{mini_upsampling_forward.1} parent=0 // pred_region
    _
  $region17: #{mini_upsampling_forward.1} parent=0 // pred_fallthru
    _
  // Predicated region
  $region18: #{mini_upsampling_forward.1} parent=0 // pred_check
    _
  $region19: #{mini_upsampling_forward.1} parent=0 // pred_check_branch
    %2141 = sbr.rel (0) target = $region21
  $region20: #{mini_upsampling_forward.1} parent=0 // pred_region
    _
  $region21: #{mini_upsampling_forward.1} parent=0 // pred_fallthru
    _

</llo_original>
